<compile_context>
chip_gen: v6e
topology: v6e:2x2x1
jax: 0.10.0
libtpu: 0.0.40
codegen_flags: <defaults>
</compile_context>

<pallas_src>
import functools

import numpy as np
import jax
import jax.numpy as jnp
from jax.experimental import pallas as pl
from jax.experimental.pallas import tpu as pltpu


def _attention_kernel(x_ref, y_ref, wq_ref, wkv_ref, wqdw_ref, wkvdw_ref,
                      wo_ref, tempvec_ref, tapmask_ref, blockmask_ref, o_ref,
                      *, H, W):
    """One batch element: x_ref/y_ref/o_ref are (C, H*W); weights full arrays."""
    C = x_ref.shape[0]
    L = H * W

    # ---------------- 1x1 convs on the MXU (bf16 operands, f32 acc) ----------
    xb = x_ref[...].astype(jnp.bfloat16)
    yb = y_ref[...].astype(jnp.bfloat16)
    q0 = jnp.dot(wq_ref[...], xb, preferred_element_type=jnp.float32)     # (C, L)
    kv0 = jnp.dot(wkv_ref[...], yb, preferred_element_type=jnp.float32)   # (2C, L)

    # ------------- fused depthwise 3x3 (zero padding=1), f32 on the VPU ------
    # Single tap loop over both tensors: mask loaded 9x total (not 18x),
    # center tap (all-ones mask) skips the mask multiply.
    def dwconv3x3_pair(tq, wq9, tkv, wkv9):
        acc_q = jnp.zeros_like(tq)
        acc_kv = jnp.zeros_like(tkv)
        tap = 0
        for dy in (-1, 0, 1):
            for dx in (-1, 0, 1):
                off = dy * W + dx
                mask = None if off == 0 else tapmask_ref[tap]        # (1, L)

                def shift_mask(t, _off=off, _mask=mask):
                    s = t if _off == 0 else pltpu.roll(t, shift=(-_off) % L, axis=1)
                    return s if _mask is None else s * _mask

                acc_q = acc_q + wq9[:, tap:tap + 1] * shift_mask(tq)
                acc_kv = acc_kv + wkv9[:, tap:tap + 1] * shift_mask(tkv)
                tap += 1
        return acc_q, acc_kv

    q, kv = dwconv3x3_pair(q0, wqdw_ref[...], kv0, wkvdw_ref[...])
    k = kv[:C, :]
    v = kv[C:, :]

    # ---------------- deferred L2 normalization (no qn/kn divides) -----------
    # F.normalize(dim=-1, eps=1e-12):  t / max(||t||, 1e-12) == t*rsqrt(max(|t|^2,1e-24))
    q_ssq = jnp.sum(q * q, axis=1, keepdims=True)                          # (C, 1)
    k_ssq = jnp.sum(k * k, axis=1, keepdims=True)                          # (C, 1)
    q_inv = jax.lax.rsqrt(jnp.maximum(q_ssq, 1e-24))
    k_inv = jax.lax.rsqrt(jnp.maximum(k_ssq, 1e-24))

    qb = q.astype(jnp.bfloat16)
    kb = (k * k_inv).astype(jnp.bfloat16)       # fold k-normalization into bf16 cast
    vb = v.astype(jnp.bfloat16)

    # ---------------- fused multi-head channel attention ---------------------
    # One (C,L)x(L,C) matmul; per-head structure restored by the additive
    # block-diagonal mask (0 on-block, -1e30 off-block) before softmax.
    g = jax.lax.dot_general(qb, kb, (((1,), (1,)), ((), ())),
                            preferred_element_type=jnp.float32)            # (C, C)
    logits = g * (q_inv * tempvec_ref[...]) + blockmask_ref[...]
    logits = logits - jnp.max(logits, axis=-1, keepdims=True)
    p = jnp.exp(logits)                                                    # 0 off-block
    p = p * pl.reciprocal(jnp.sum(p, axis=-1, keepdims=True), approx=True)

    out = jnp.dot(p.astype(jnp.bfloat16), vb,
                  preferred_element_type=jnp.float32)                      # (C, L)

    # ---------------- project_out 1x1 conv -----------------------------------
    o_ref[...] = jnp.dot(wo_ref[...], out.astype(jnp.bfloat16),
                         preferred_element_type=jnp.float32).astype(o_ref.dtype)


def _make_tap_masks(H, W):
    """(9, 1, H*W) float32 validity masks for a 3x3 conv with zero padding=1."""
    hh, ww = np.meshgrid(np.arange(H), np.arange(W), indexing="ij")
    hh = hh.reshape(-1)
    ww = ww.reshape(-1)
    masks = []
    for dy in (-1, 0, 1):
        for dx in (-1, 0, 1):
            valid = ((hh + dy >= 0) & (hh + dy < H) &
                     (ww + dx >= 0) & (ww + dx < W))
            masks.append(valid.astype(np.float32))
    return np.stack(masks, axis=0).reshape(9, 1, H * W)


def _make_block_mask(C, num_heads, neg=-1e30):
    """(C, C) additive mask: 0 within a head's block, -1e30 across heads."""
    ch = C // num_heads
    head_id = np.arange(C) // ch
    same = head_id[:, None] == head_id[None, :]
    return np.where(same, 0.0, neg).astype(np.float32)


def attention_forward(x, y, params, *, num_heads=8):
    """x, y: (N, C, H, W).  Returns the Attention module output, same shape."""
    N, C, H, W = x.shape
    L = H * W
    ch = C // num_heads
    # Layout requirements for lane-dense loads/stores and full sublane tiles.
    assert C % num_heads == 0 and C % 8 == 0 and L % 128 == 0, (C, num_heads, L)

    # Layout-preserving reshapes only (no transposes): channels -> sublanes,
    # flattened spatial -> lanes.
    x2 = x.reshape(N, C, L)
    y2 = y.reshape(N, C, L)

    tapmask = jnp.asarray(_make_tap_masks(H, W))                 # (9, 1, L)
    blockmask = jnp.asarray(_make_block_mask(C, num_heads))      # (C, C)
    tempvec = jnp.repeat(params["temperature"].reshape(num_heads).astype(jnp.float32),
                         ch).reshape(C, 1)                       # (C, 1)

    # MXU operands in bf16 (f32 accumulation inside the kernel); dwconv taps f32.
    wq = params["wq"].astype(jnp.bfloat16)
    wkv = params["wkv"].astype(jnp.bfloat16)
    wo = params["wo"].astype(jnp.bfloat16)

    kernel = functools.partial(_attention_kernel, H=H, W=W)
    vmem = pltpu.MemorySpace.VMEM

    out2 = pl.pallas_call(
        kernel,
        out_shape=jax.ShapeDtypeStruct((N, C, L), x.dtype),
        grid=(N,),
        in_specs=[
            pl.BlockSpec((None, C, L), lambda b: (b, 0, 0)),   # x   (per-batch)
            pl.BlockSpec((None, C, L), lambda b: (b, 0, 0)),   # y   (per-batch)
            pl.BlockSpec(memory_space=vmem),                   # W_q        (C, C)   bf16
            pl.BlockSpec(memory_space=vmem),                   # W_kv       (2C, C)  bf16
            pl.BlockSpec(memory_space=vmem),                   # W_q_dw     (C, 9)   f32
            pl.BlockSpec(memory_space=vmem),                   # W_kv_dw    (2C, 9)  f32
            pl.BlockSpec(memory_space=vmem),                   # W_proj     (C, C)   bf16
            pl.BlockSpec(memory_space=vmem),                   # temperature vec (C, 1)
            pl.BlockSpec(memory_space=vmem),                   # tap masks  (9, 1, L)
            pl.BlockSpec(memory_space=vmem),                   # block mask (C, C)
        ],
        out_specs=pl.BlockSpec((None, C, L), lambda b: (b, 0, 0)),
        compiler_params=pltpu.CompilerParams(
            dimension_semantics=("parallel",),        # batches -> both TCs on v7x
            vmem_limit_bytes=32 * 1024 * 1024,
        ),
    )(x2, y2, wq, wkv, params["wq_dw"], params["wkv_dw"], wo,
      tempvec, tapmask, blockmask)

    return out2.reshape(N, C, H, W)


attention_forward_jit = jax.jit(attention_forward, static_argnames=("num_heads",))


# ----------------------------- plain-JAX reference ---------------------------

def attention_ref(x, y, params, *, num_heads=8):
    hp = jax.lax.Precision.HIGHEST
    N, C, H, W = x.shape
    ch = C // num_heads

    def conv1x1(inp, w):  # w: (Cout, Cin)
        return jnp.einsum("oi,nihw->nohw", w, inp, precision=hp)

    def dwconv(inp, w9):  # w9: (Cout, 9) -> depthwise 3x3, padding=1
        w = w9.reshape(inp.shape[1], 1, 3, 3)
        return jax.lax.conv_general_dilated(
            inp, w, window_strides=(1, 1), padding=((1, 1), (1, 1)),
            dimension_numbers=("NCHW", "OIHW", "NCHW"),
            feature_group_count=inp.shape[1], precision=hp)

    q = dwconv(conv1x1(x, params["wq"]), params["wq_dw"])
    kv = dwconv(conv1x1(y, params["wkv"]), params["wkv_dw"])
    k, v = kv[:, :C], kv[:, C:]

    def heads(t):
        return t.reshape(N, num_heads, ch, H * W)

    def l2n(t):
        nrm = jnp.sqrt(jnp.sum(t * t, axis=-1, keepdims=True))
        return t / jnp.maximum(nrm, 1e-12)

    qh, kh, vh = l2n(heads(q)), l2n(heads(k)), heads(v)
    attn = jnp.einsum("nhcp,nhdp->nhcd", qh, kh, precision=hp)
    attn = attn * params["temperature"].reshape(1, num_heads, 1, 1)
    attn = jax.nn.softmax(attn, axis=-1)
    out = jnp.einsum("nhcd,nhdp->nhcp", attn, vh, precision=hp)
    out = out.reshape(N, C, H, W)
    return conv1x1(out, params["wo"])


if __name__ == "__main__":
    N, dim, H, W, heads = 2, 64, 16, 16, 8

    key = jax.random.PRNGKey(0)
    ks = jax.random.split(key, 7)
    x = jax.random.normal(ks[0], (N, dim, H, W), jnp.float32)
    y = jax.random.normal(ks[1], (N, dim, H, W), jnp.float32)

    params = {
        "wq": jax.random.normal(ks[2], (dim, dim), jnp.float32) * 0.125,
        "wq_dw": jax.random.normal(ks[3], (dim, 9), jnp.float32) * (1.0 / 3.0),
        "wkv": jax.random.normal(ks[4], (2 * dim, dim), jnp.float32) * 0.125,
        "wkv_dw": jax.random.normal(ks[5], (2 * dim, 9), jnp.float32) * (1.0 / 3.0),
        "wo": jax.random.normal(ks[6], (dim, dim), jnp.float32) * 0.125,
        # module init is ones(heads); use a deterministic non-trivial ramp near
        # the init scale to exercise the per-head temperature path.
        "temperature": jnp.linspace(0.5, 2.0, heads, dtype=jnp.float32),
    }

    out = attention_forward_jit(x, y, params, num_heads=heads)
    jax.block_until_ready(out)

    ref = attention_ref(x, y, params, num_heads=heads)
    assert out.shape == ref.shape, (out.shape, ref.shape)
    max_err = float(jnp.max(jnp.abs(out - ref)))
    # bf16 MXU operands (f32 accumulation) -> slightly looser tolerance than pure f32.
    assert jnp.allclose(out, ref, atol=2e-2, rtol=2e-2), (
        "mismatch: max abs err = %e" % max_err)

    print("KERNEL_OK")
</pallas_src>

<mosaic_0001>
module attributes {stable_mosaic.version = 11 : i64} {
  func.func @_attention_kernel(%arg0: i32, %arg1: memref<1x64x256xf32, #tpu.memory_space<vmem>>, %arg2: memref<1x64x256xf32, #tpu.memory_space<vmem>>, %arg3: memref<64x64xbf16, #tpu.memory_space<vmem>>, %arg4: memref<128x64xbf16, #tpu.memory_space<vmem>>, %arg5: memref<64x9xf32, #tpu.memory_space<vmem>>, %arg6: memref<128x9xf32, #tpu.memory_space<vmem>>, %arg7: memref<64x64xbf16, #tpu.memory_space<vmem>>, %arg8: memref<64x1xf32, #tpu.memory_space<vmem>>, %arg9: memref<9x1x256xf32, #tpu.memory_space<vmem>>, %arg10: memref<64x64xf32, #tpu.memory_space<vmem>>, %arg11: memref<1x64x256xf32, #tpu.memory_space<vmem>>) attributes {dimension_semantics = [#tpu.dimension_semantics<parallel>], iteration_bounds = array<i64: 2>, scalar_prefetch = 0 : i64, scratch_operands = 0 : i64, tpu.core_type = #tpu.core_type<tc>, window_params = [{transform_indices = @transform_0, window_bounds = array<i64: 1, 64, 256>}, {transform_indices = @transform_1, window_bounds = array<i64: 1, 64, 256>}, {pipeline_mode = #tpu.pipeline_mode<synchronous>, transform_indices = @transform_2, window_bounds = array<i64: 64, 64>}, {pipeline_mode = #tpu.pipeline_mode<synchronous>, transform_indices = @transform_3, window_bounds = array<i64: 128, 64>}, {pipeline_mode = #tpu.pipeline_mode<synchronous>, transform_indices = @transform_4, window_bounds = array<i64: 64, 9>}, {pipeline_mode = #tpu.pipeline_mode<synchronous>, transform_indices = @transform_5, window_bounds = array<i64: 128, 9>}, {pipeline_mode = #tpu.pipeline_mode<synchronous>, transform_indices = @transform_6, window_bounds = array<i64: 64, 64>}, {pipeline_mode = #tpu.pipeline_mode<synchronous>, transform_indices = @transform_7, window_bounds = array<i64: 64, 1>}, {pipeline_mode = #tpu.pipeline_mode<synchronous>, transform_indices = @transform_8, window_bounds = array<i64: 9, 1, 256>}, {pipeline_mode = #tpu.pipeline_mode<synchronous>, transform_indices = @transform_9, window_bounds = array<i64: 64, 64>}, {transform_indices = @transform_10, window_bounds = array<i64: 1, 64, 256>}]} {
    %c0 = arith.constant 0 : index
    %c0_0 = arith.constant 0 : index
    %c0_1 = arith.constant 0 : index
    %0 = vector.load %arg1[%c0, %c0_0, %c0_1] : memref<1x64x256xf32, #tpu.memory_space<vmem>>, vector<1x64x256xf32>
    %1 = vector.shape_cast %0 : vector<1x64x256xf32> to vector<64x256xf32>
    %2 = arith.truncf %1 : vector<64x256xf32> to vector<64x256xbf16>
    %c0_2 = arith.constant 0 : index
    %c0_3 = arith.constant 0 : index
    %c0_4 = arith.constant 0 : index
    %3 = vector.load %arg2[%c0_2, %c0_3, %c0_4] : memref<1x64x256xf32, #tpu.memory_space<vmem>>, vector<1x64x256xf32>
    %4 = vector.shape_cast %3 : vector<1x64x256xf32> to vector<64x256xf32>
    %5 = arith.truncf %4 : vector<64x256xf32> to vector<64x256xbf16>
    %c0_5 = arith.constant 0 : index
    %c0_6 = arith.constant 0 : index
    %6 = vector.load %arg3[%c0_5, %c0_6] : memref<64x64xbf16, #tpu.memory_space<vmem>>, vector<64x64xbf16>
    %cst = arith.constant dense<0.000000e+00> : vector<64x256xf32>
    %7 = tpu.matmul %6, %2, %cst {dimension_numbers = #tpu.dot_dimension_numbers<[1], [0], [0], [1], [0, 0, 1, 1], [], []>} : vector<64x64xbf16>, vector<64x256xbf16>, vector<64x256xf32> -> vector<64x256xf32>
    %c0_7 = arith.constant 0 : index
    %c0_8 = arith.constant 0 : index
    %8 = vector.load %arg4[%c0_7, %c0_8] : memref<128x64xbf16, #tpu.memory_space<vmem>>, vector<128x64xbf16>
    %cst_9 = arith.constant dense<0.000000e+00> : vector<128x256xf32>
    %9 = tpu.matmul %8, %5, %cst_9 {dimension_numbers = #tpu.dot_dimension_numbers<[1], [0], [0], [1], [0, 0, 1, 1], [], []>} : vector<128x64xbf16>, vector<64x256xbf16>, vector<128x256xf32> -> vector<128x256xf32>
    %c0_10 = arith.constant 0 : index
    %c0_11 = arith.constant 0 : index
    %10 = vector.load %arg5[%c0_10, %c0_11] : memref<64x9xf32, #tpu.memory_space<vmem>>, vector<64x9xf32>
    %c0_12 = arith.constant 0 : index
    %c0_13 = arith.constant 0 : index
    %11 = vector.load %arg6[%c0_12, %c0_13] : memref<128x9xf32, #tpu.memory_space<vmem>>, vector<128x9xf32>
    %cst_14 = arith.constant 0.000000e+00 : f32
    %12 = vector.broadcast %cst_14 : f32 to vector<64x256xf32>
    %cst_15 = arith.constant 0.000000e+00 : f32
    %13 = vector.broadcast %cst_15 : f32 to vector<128x256xf32>
    %c0_16 = arith.constant 0 : index
    %c0_17 = arith.constant 0 : index
    %c0_18 = arith.constant 0 : index
    %14 = vector.load %arg9[%c0_16, %c0_17, %c0_18] : memref<9x1x256xf32, #tpu.memory_space<vmem>>, vector<1x1x256xf32>
    %15 = vector.shape_cast %14 : vector<1x1x256xf32> to vector<1x256xf32>
    %16 = vector.extract_strided_slice %10 {offsets = [0, 0], sizes = [64, 1], strides = [1, 1]} : vector<64x9xf32> to vector<64x1xf32>
    %c17_i32 = arith.constant 17 : i32
    %17 = tpu.dynamic_rotate %7 by %c17_i32 dim 1 : vector<64x256xf32>, i32 -> vector<64x256xf32>
    %18 = vector.broadcast %15 : vector<1x256xf32> to vector<64x256xf32>
    %19 = arith.mulf %17, %18 : vector<64x256xf32>
    %20 = vector.broadcast %16 : vector<64x1xf32> to vector<64x256xf32>
    %21 = arith.mulf %20, %19 : vector<64x256xf32>
    %22 = arith.addf %12, %21 : vector<64x256xf32>
    %23 = vector.extract_strided_slice %11 {offsets = [0, 0], sizes = [128, 1], strides = [1, 1]} : vector<128x9xf32> to vector<128x1xf32>
    %c17_i32_19 = arith.constant 17 : i32
    %24 = tpu.dynamic_rotate %9 by %c17_i32_19 dim 1 : vector<128x256xf32>, i32 -> vector<128x256xf32>
    %25 = vector.broadcast %15 : vector<1x256xf32> to vector<128x256xf32>
    %26 = arith.mulf %24, %25 : vector<128x256xf32>
    %27 = vector.broadcast %23 : vector<128x1xf32> to vector<128x256xf32>
    %28 = arith.mulf %27, %26 : vector<128x256xf32>
    %29 = arith.addf %13, %28 : vector<128x256xf32>
    %c1 = arith.constant 1 : index
    %c0_20 = arith.constant 0 : index
    %c0_21 = arith.constant 0 : index
    %30 = vector.load %arg9[%c1, %c0_20, %c0_21] : memref<9x1x256xf32, #tpu.memory_space<vmem>>, vector<1x1x256xf32>
    %31 = vector.shape_cast %30 : vector<1x1x256xf32> to vector<1x256xf32>
    %32 = vector.extract_strided_slice %10 {offsets = [0, 1], sizes = [64, 1], strides = [1, 1]} : vector<64x9xf32> to vector<64x1xf32>
    %c16_i32 = arith.constant 16 : i32
    %33 = tpu.dynamic_rotate %7 by %c16_i32 dim 1 : vector<64x256xf32>, i32 -> vector<64x256xf32>
    %34 = vector.broadcast %31 : vector<1x256xf32> to vector<64x256xf32>
    %35 = arith.mulf %33, %34 : vector<64x256xf32>
    %36 = vector.broadcast %32 : vector<64x1xf32> to vector<64x256xf32>
    %37 = arith.mulf %36, %35 : vector<64x256xf32>
    %38 = arith.addf %22, %37 : vector<64x256xf32>
    %39 = vector.extract_strided_slice %11 {offsets = [0, 1], sizes = [128, 1], strides = [1, 1]} : vector<128x9xf32> to vector<128x1xf32>
    %c16_i32_22 = arith.constant 16 : i32
    %40 = tpu.dynamic_rotate %9 by %c16_i32_22 dim 1 : vector<128x256xf32>, i32 -> vector<128x256xf32>
    %41 = vector.broadcast %31 : vector<1x256xf32> to vector<128x256xf32>
    %42 = arith.mulf %40, %41 : vector<128x256xf32>
    %43 = vector.broadcast %39 : vector<128x1xf32> to vector<128x256xf32>
    %44 = arith.mulf %43, %42 : vector<128x256xf32>
    %45 = arith.addf %29, %44 : vector<128x256xf32>
    %c2 = arith.constant 2 : index
    %c0_23 = arith.constant 0 : index
    %c0_24 = arith.constant 0 : index
    %46 = vector.load %arg9[%c2, %c0_23, %c0_24] : memref<9x1x256xf32, #tpu.memory_space<vmem>>, vector<1x1x256xf32>
    %47 = vector.shape_cast %46 : vector<1x1x256xf32> to vector<1x256xf32>
    %48 = vector.extract_strided_slice %10 {offsets = [0, 2], sizes = [64, 1], strides = [1, 1]} : vector<64x9xf32> to vector<64x1xf32>
    %c15_i32 = arith.constant 15 : i32
    %49 = tpu.dynamic_rotate %7 by %c15_i32 dim 1 : vector<64x256xf32>, i32 -> vector<64x256xf32>
    %50 = vector.broadcast %47 : vector<1x256xf32> to vector<64x256xf32>
    %51 = arith.mulf %49, %50 : vector<64x256xf32>
    %52 = vector.broadcast %48 : vector<64x1xf32> to vector<64x256xf32>
    %53 = arith.mulf %52, %51 : vector<64x256xf32>
    %54 = arith.addf %38, %53 : vector<64x256xf32>
    %55 = vector.extract_strided_slice %11 {offsets = [0, 2], sizes = [128, 1], strides = [1, 1]} : vector<128x9xf32> to vector<128x1xf32>
    %c15_i32_25 = arith.constant 15 : i32
    %56 = tpu.dynamic_rotate %9 by %c15_i32_25 dim 1 : vector<128x256xf32>, i32 -> vector<128x256xf32>
    %57 = vector.broadcast %47 : vector<1x256xf32> to vector<128x256xf32>
    %58 = arith.mulf %56, %57 : vector<128x256xf32>
    %59 = vector.broadcast %55 : vector<128x1xf32> to vector<128x256xf32>
    %60 = arith.mulf %59, %58 : vector<128x256xf32>
    %61 = arith.addf %45, %60 : vector<128x256xf32>
    %c3 = arith.constant 3 : index
    %c0_26 = arith.constant 0 : index
    %c0_27 = arith.constant 0 : index
    %62 = vector.load %arg9[%c3, %c0_26, %c0_27] : memref<9x1x256xf32, #tpu.memory_space<vmem>>, vector<1x1x256xf32>
    %63 = vector.shape_cast %62 : vector<1x1x256xf32> to vector<1x256xf32>
    %64 = vector.extract_strided_slice %10 {offsets = [0, 3], sizes = [64, 1], strides = [1, 1]} : vector<64x9xf32> to vector<64x1xf32>
    %c1_i32 = arith.constant 1 : i32
    %65 = tpu.dynamic_rotate %7 by %c1_i32 dim 1 : vector<64x256xf32>, i32 -> vector<64x256xf32>
    %66 = vector.broadcast %63 : vector<1x256xf32> to vector<64x256xf32>
    %67 = arith.mulf %65, %66 : vector<64x256xf32>
    %68 = vector.broadcast %64 : vector<64x1xf32> to vector<64x256xf32>
    %69 = arith.mulf %68, %67 : vector<64x256xf32>
    %70 = arith.addf %54, %69 : vector<64x256xf32>
    %71 = vector.extract_strided_slice %11 {offsets = [0, 3], sizes = [128, 1], strides = [1, 1]} : vector<128x9xf32> to vector<128x1xf32>
    %c1_i32_28 = arith.constant 1 : i32
    %72 = tpu.dynamic_rotate %9 by %c1_i32_28 dim 1 : vector<128x256xf32>, i32 -> vector<128x256xf32>
    %73 = vector.broadcast %63 : vector<1x256xf32> to vector<128x256xf32>
    %74 = arith.mulf %72, %73 : vector<128x256xf32>
    %75 = vector.broadcast %71 : vector<128x1xf32> to vector<128x256xf32>
    %76 = arith.mulf %75, %74 : vector<128x256xf32>
    %77 = arith.addf %61, %76 : vector<128x256xf32>
    %78 = vector.extract_strided_slice %10 {offsets = [0, 4], sizes = [64, 1], strides = [1, 1]} : vector<64x9xf32> to vector<64x1xf32>
    %79 = vector.broadcast %78 : vector<64x1xf32> to vector<64x256xf32>
    %80 = arith.mulf %79, %7 : vector<64x256xf32>
    %81 = arith.addf %70, %80 : vector<64x256xf32>
    %82 = vector.extract_strided_slice %11 {offsets = [0, 4], sizes = [128, 1], strides = [1, 1]} : vector<128x9xf32> to vector<128x1xf32>
    %83 = vector.broadcast %82 : vector<128x1xf32> to vector<128x256xf32>
    %84 = arith.mulf %83, %9 : vector<128x256xf32>
    %85 = arith.addf %77, %84 : vector<128x256xf32>
    %c5 = arith.constant 5 : index
    %c0_29 = arith.constant 0 : index
    %c0_30 = arith.constant 0 : index
    %86 = vector.load %arg9[%c5, %c0_29, %c0_30] : memref<9x1x256xf32, #tpu.memory_space<vmem>>, vector<1x1x256xf32>
    %87 = vector.shape_cast %86 : vector<1x1x256xf32> to vector<1x256xf32>
    %88 = vector.extract_strided_slice %10 {offsets = [0, 5], sizes = [64, 1], strides = [1, 1]} : vector<64x9xf32> to vector<64x1xf32>
    %c255_i32 = arith.constant 255 : i32
    %89 = tpu.dynamic_rotate %7 by %c255_i32 dim 1 : vector<64x256xf32>, i32 -> vector<64x256xf32>
    %90 = vector.broadcast %87 : vector<1x256xf32> to vector<64x256xf32>
    %91 = arith.mulf %89, %90 : vector<64x256xf32>
    %92 = vector.broadcast %88 : vector<64x1xf32> to vector<64x256xf32>
    %93 = arith.mulf %92, %91 : vector<64x256xf32>
    %94 = arith.addf %81, %93 : vector<64x256xf32>
    %95 = vector.extract_strided_slice %11 {offsets = [0, 5], sizes = [128, 1], strides = [1, 1]} : vector<128x9xf32> to vector<128x1xf32>
    %c255_i32_31 = arith.constant 255 : i32
    %96 = tpu.dynamic_rotate %9 by %c255_i32_31 dim 1 : vector<128x256xf32>, i32 -> vector<128x256xf32>
    %97 = vector.broadcast %87 : vector<1x256xf32> to vector<128x256xf32>
    %98 = arith.mulf %96, %97 : vector<128x256xf32>
    %99 = vector.broadcast %95 : vector<128x1xf32> to vector<128x256xf32>
    %100 = arith.mulf %99, %98 : vector<128x256xf32>
    %101 = arith.addf %85, %100 : vector<128x256xf32>
    %c6 = arith.constant 6 : index
    %c0_32 = arith.constant 0 : index
    %c0_33 = arith.constant 0 : index
    %102 = vector.load %arg9[%c6, %c0_32, %c0_33] : memref<9x1x256xf32, #tpu.memory_space<vmem>>, vector<1x1x256xf32>
    %103 = vector.shape_cast %102 : vector<1x1x256xf32> to vector<1x256xf32>
    %104 = vector.extract_strided_slice %10 {offsets = [0, 6], sizes = [64, 1], strides = [1, 1]} : vector<64x9xf32> to vector<64x1xf32>
    %c241_i32 = arith.constant 241 : i32
    %105 = tpu.dynamic_rotate %7 by %c241_i32 dim 1 : vector<64x256xf32>, i32 -> vector<64x256xf32>
    %106 = vector.broadcast %103 : vector<1x256xf32> to vector<64x256xf32>
    %107 = arith.mulf %105, %106 : vector<64x256xf32>
    %108 = vector.broadcast %104 : vector<64x1xf32> to vector<64x256xf32>
    %109 = arith.mulf %108, %107 : vector<64x256xf32>
    %110 = arith.addf %94, %109 : vector<64x256xf32>
    %111 = vector.extract_strided_slice %11 {offsets = [0, 6], sizes = [128, 1], strides = [1, 1]} : vector<128x9xf32> to vector<128x1xf32>
    %c241_i32_34 = arith.constant 241 : i32
    %112 = tpu.dynamic_rotate %9 by %c241_i32_34 dim 1 : vector<128x256xf32>, i32 -> vector<128x256xf32>
    %113 = vector.broadcast %103 : vector<1x256xf32> to vector<128x256xf32>
    %114 = arith.mulf %112, %113 : vector<128x256xf32>
    %115 = vector.broadcast %111 : vector<128x1xf32> to vector<128x256xf32>
    %116 = arith.mulf %115, %114 : vector<128x256xf32>
    %117 = arith.addf %101, %116 : vector<128x256xf32>
    %c7 = arith.constant 7 : index
    %c0_35 = arith.constant 0 : index
    %c0_36 = arith.constant 0 : index
    %118 = vector.load %arg9[%c7, %c0_35, %c0_36] : memref<9x1x256xf32, #tpu.memory_space<vmem>>, vector<1x1x256xf32>
    %119 = vector.shape_cast %118 : vector<1x1x256xf32> to vector<1x256xf32>
    %120 = vector.extract_strided_slice %10 {offsets = [0, 7], sizes = [64, 1], strides = [1, 1]} : vector<64x9xf32> to vector<64x1xf32>
    %c240_i32 = arith.constant 240 : i32
    %121 = tpu.dynamic_rotate %7 by %c240_i32 dim 1 : vector<64x256xf32>, i32 -> vector<64x256xf32>
    %122 = vector.broadcast %119 : vector<1x256xf32> to vector<64x256xf32>
    %123 = arith.mulf %121, %122 : vector<64x256xf32>
    %124 = vector.broadcast %120 : vector<64x1xf32> to vector<64x256xf32>
    %125 = arith.mulf %124, %123 : vector<64x256xf32>
    %126 = arith.addf %110, %125 : vector<64x256xf32>
    %127 = vector.extract_strided_slice %11 {offsets = [0, 7], sizes = [128, 1], strides = [1, 1]} : vector<128x9xf32> to vector<128x1xf32>
    %c240_i32_37 = arith.constant 240 : i32
    %128 = tpu.dynamic_rotate %9 by %c240_i32_37 dim 1 : vector<128x256xf32>, i32 -> vector<128x256xf32>
    %129 = vector.broadcast %119 : vector<1x256xf32> to vector<128x256xf32>
    %130 = arith.mulf %128, %129 : vector<128x256xf32>
    %131 = vector.broadcast %127 : vector<128x1xf32> to vector<128x256xf32>
    %132 = arith.mulf %131, %130 : vector<128x256xf32>
    %133 = arith.addf %117, %132 : vector<128x256xf32>
    %c8 = arith.constant 8 : index
    %c0_38 = arith.constant 0 : index
    %c0_39 = arith.constant 0 : index
    %134 = vector.load %arg9[%c8, %c0_38, %c0_39] : memref<9x1x256xf32, #tpu.memory_space<vmem>>, vector<1x1x256xf32>
    %135 = vector.shape_cast %134 : vector<1x1x256xf32> to vector<1x256xf32>
    %136 = vector.extract_strided_slice %10 {offsets = [0, 8], sizes = [64, 1], strides = [1, 1]} : vector<64x9xf32> to vector<64x1xf32>
    %c239_i32 = arith.constant 239 : i32
    %137 = tpu.dynamic_rotate %7 by %c239_i32 dim 1 : vector<64x256xf32>, i32 -> vector<64x256xf32>
    %138 = vector.broadcast %135 : vector<1x256xf32> to vector<64x256xf32>
    %139 = arith.mulf %137, %138 : vector<64x256xf32>
    %140 = vector.broadcast %136 : vector<64x1xf32> to vector<64x256xf32>
    %141 = arith.mulf %140, %139 : vector<64x256xf32>
    %142 = arith.addf %126, %141 : vector<64x256xf32>
    %143 = vector.extract_strided_slice %11 {offsets = [0, 8], sizes = [128, 1], strides = [1, 1]} : vector<128x9xf32> to vector<128x1xf32>
    %c239_i32_40 = arith.constant 239 : i32
    %144 = tpu.dynamic_rotate %9 by %c239_i32_40 dim 1 : vector<128x256xf32>, i32 -> vector<128x256xf32>
    %145 = vector.broadcast %135 : vector<1x256xf32> to vector<128x256xf32>
    %146 = arith.mulf %144, %145 : vector<128x256xf32>
    %147 = vector.broadcast %143 : vector<128x1xf32> to vector<128x256xf32>
    %148 = arith.mulf %147, %146 : vector<128x256xf32>
    %149 = arith.addf %133, %148 : vector<128x256xf32>
    %150 = vector.extract_strided_slice %149 {offsets = [0, 0], sizes = [64, 256], strides = [1, 1]} : vector<128x256xf32> to vector<64x256xf32>
    %151 = vector.extract_strided_slice %149 {offsets = [64, 0], sizes = [64, 256], strides = [1, 1]} : vector<128x256xf32> to vector<64x256xf32>
    %152 = arith.mulf %142, %142 : vector<64x256xf32>
    %cst_41 = arith.constant dense<0.000000e+00> : vector<64xf32>
    %153 = vector.multi_reduction <add>, %152, %cst_41 [1] : vector<64x256xf32> to vector<64xf32>
    %154 = vector.shape_cast %153 : vector<64xf32> to vector<64x1xf32>
    %155 = arith.mulf %150, %150 : vector<64x256xf32>
    %cst_42 = arith.constant dense<0.000000e+00> : vector<64xf32>
    %156 = vector.multi_reduction <add>, %155, %cst_42 [1] : vector<64x256xf32> to vector<64xf32>
    %157 = vector.shape_cast %156 : vector<64xf32> to vector<64x1xf32>
    %cst_43 = arith.constant 1.000000e-24 : f32
    %158 = vector.broadcast %cst_43 : f32 to vector<64x1xf32>
    %159 = arith.maximumf %154, %158 : vector<64x1xf32>
    %160 = math.rsqrt %159 : vector<64x1xf32>
    %cst_44 = arith.constant 1.000000e-24 : f32
    %161 = vector.broadcast %cst_44 : f32 to vector<64x1xf32>
    %162 = arith.maximumf %157, %161 : vector<64x1xf32>
    %163 = math.rsqrt %162 : vector<64x1xf32>
    %164 = arith.truncf %142 : vector<64x256xf32> to vector<64x256xbf16>
    %165 = vector.broadcast %163 : vector<64x1xf32> to vector<64x256xf32>
    %166 = arith.mulf %150, %165 : vector<64x256xf32>
    %167 = arith.truncf %166 : vector<64x256xf32> to vector<64x256xbf16>
    %168 = arith.truncf %151 : vector<64x256xf32> to vector<64x256xbf16>
    %cst_45 = arith.constant dense<0.000000e+00> : vector<64x64xf32>
    %169 = tpu.matmul %164, %167, %cst_45 {dimension_numbers = #tpu.dot_dimension_numbers<[1], [1], [0], [0], [0, 0, 1, 0], [], []>} : vector<64x256xbf16>, vector<64x256xbf16>, vector<64x64xf32> -> vector<64x64xf32>
    %c0_46 = arith.constant 0 : index
    %c0_47 = arith.constant 0 : index
    %170 = vector.load %arg8[%c0_46, %c0_47] : memref<64x1xf32, #tpu.memory_space<vmem>>, vector<64x1xf32>
    %171 = arith.mulf %160, %170 : vector<64x1xf32>
    %172 = vector.broadcast %171 : vector<64x1xf32> to vector<64x64xf32>
    %173 = arith.mulf %169, %172 : vector<64x64xf32>
    %c0_48 = arith.constant 0 : index
    %c0_49 = arith.constant 0 : index
    %174 = vector.load %arg10[%c0_48, %c0_49] : memref<64x64xf32, #tpu.memory_space<vmem>>, vector<64x64xf32>
    %175 = arith.addf %173, %174 : vector<64x64xf32>
    %cst_50 = arith.constant dense<0xFF800000> : vector<64xf32>
    %176 = vector.multi_reduction <maximumf>, %175, %cst_50 [1] : vector<64x64xf32> to vector<64xf32>
    %177 = vector.shape_cast %176 : vector<64xf32> to vector<64x1xf32>
    %178 = vector.broadcast %177 : vector<64x1xf32> to vector<64x64xf32>
    %179 = arith.subf %175, %178 : vector<64x64xf32>
    %180 = math.exp %179 : vector<64x64xf32>
    %cst_51 = arith.constant dense<0.000000e+00> : vector<64xf32>
    %181 = vector.multi_reduction <add>, %180, %cst_51 [1] : vector<64x64xf32> to vector<64xf32>
    %182 = vector.shape_cast %181 : vector<64xf32> to vector<64x1xf32>
    %183 = tpu.reciprocal %182 {approx = true} : vector<64x1xf32> -> vector<64x1xf32>
    %184 = vector.broadcast %183 : vector<64x1xf32> to vector<64x64xf32>
    %185 = arith.mulf %180, %184 : vector<64x64xf32>
    %186 = arith.truncf %185 : vector<64x64xf32> to vector<64x64xbf16>
    %cst_52 = arith.constant dense<0.000000e+00> : vector<64x256xf32>
    %187 = tpu.matmul %186, %168, %cst_52 {dimension_numbers = #tpu.dot_dimension_numbers<[1], [0], [0], [1], [0, 0, 1, 1], [], []>} : vector<64x64xbf16>, vector<64x256xbf16>, vector<64x256xf32> -> vector<64x256xf32>
    %c0_53 = arith.constant 0 : index
    %c0_54 = arith.constant 0 : index
    %188 = vector.load %arg7[%c0_53, %c0_54] : memref<64x64xbf16, #tpu.memory_space<vmem>>, vector<64x64xbf16>
    %189 = arith.truncf %187 : vector<64x256xf32> to vector<64x256xbf16>
    %cst_55 = arith.constant dense<0.000000e+00> : vector<64x256xf32>
    %190 = tpu.matmul %188, %189, %cst_55 {dimension_numbers = #tpu.dot_dimension_numbers<[1], [0], [0], [1], [0, 0, 1, 1], [], []>} : vector<64x64xbf16>, vector<64x256xbf16>, vector<64x256xf32> -> vector<64x256xf32>
    %c0_56 = arith.constant 0 : index
    %c0_57 = arith.constant 0 : index
    %c0_58 = arith.constant 0 : index
    %191 = vector.load %arg11[%c0_56, %c0_57, %c0_58] : memref<1x64x256xf32, #tpu.memory_space<vmem>>, vector<1x64x256xf32>
    %192 = vector.shape_cast %191 : vector<1x64x256xf32> to vector<64x256xf32>
    %193 = vector.shape_cast %190 : vector<64x256xf32> to vector<1x64x256xf32>
    tpu.vector_store %arg11[%c0_56, %c0_57, %c0_58], %193 {strides = array<i32>} : memref<1x64x256xf32, #tpu.memory_space<vmem>>, vector<1x64x256xf32>,
    return
  }
  func.func @transform_0(%arg0: i32) -> (i32, i32, i32) {
    %c0_i32 = arith.constant 0 : i32
    %c0_i32_0 = arith.constant 0 : i32
    %c0_i32_1 = arith.constant 0 : i32
    return %arg0, %c0_i32, %c0_i32_0 : i32, i32, i32
  }
  func.func @transform_1(%arg0: i32) -> (i32, i32, i32) {
    %c0_i32 = arith.constant 0 : i32
    %c0_i32_0 = arith.constant 0 : i32
    %c0_i32_1 = arith.constant 0 : i32
    return %arg0, %c0_i32, %c0_i32_0 : i32, i32, i32
  }
  func.func @transform_2(%arg0: i32) -> (i32, i32) {
    %c0_i32 = arith.constant 0 : i32
    %c0_i32_0 = arith.constant 0 : i32
    %c0_i32_1 = arith.constant 0 : i32
    return %c0_i32, %c0_i32_0 : i32, i32
  }
  func.func @transform_3(%arg0: i32) -> (i32, i32) {
    %c0_i32 = arith.constant 0 : i32
    %c0_i32_0 = arith.constant 0 : i32
    %c0_i32_1 = arith.constant 0 : i32
    return %c0_i32, %c0_i32_0 : i32, i32
  }
  func.func @transform_4(%arg0: i32) -> (i32, i32) {
    %c0_i32 = arith.constant 0 : i32
    %c0_i32_0 = arith.constant 0 : i32
    %c0_i32_1 = arith.constant 0 : i32
    return %c0_i32, %c0_i32_0 : i32, i32
  }
  func.func @transform_5(%arg0: i32) -> (i32, i32) {
    %c0_i32 = arith.constant 0 : i32
    %c0_i32_0 = arith.constant 0 : i32
    %c0_i32_1 = arith.constant 0 : i32
    return %c0_i32, %c0_i32_0 : i32, i32
  }
  func.func @transform_6(%arg0: i32) -> (i32, i32) {
    %c0_i32 = arith.constant 0 : i32
    %c0_i32_0 = arith.constant 0 : i32
    %c0_i32_1 = arith.constant 0 : i32
    return %c0_i32, %c0_i32_0 : i32, i32
  }
  func.func @transform_7(%arg0: i32) -> (i32, i32) {
    %c0_i32 = arith.constant 0 : i32
    %c0_i32_0 = arith.constant 0 : i32
    %c0_i32_1 = arith.constant 0 : i32
    return %c0_i32, %c0_i32_0 : i32, i32
  }
  func.func @transform_8(%arg0: i32) -> (i32, i32, i32) {
    %c0_i32 = arith.constant 0 : i32
    %c0_i32_0 = arith.constant 0 : i32
    %c0_i32_1 = arith.constant 0 : i32
    %c0_i32_2 = arith.constant 0 : i32
    return %c0_i32, %c0_i32_0, %c0_i32_1 : i32, i32, i32
  }
  func.func @transform_9(%arg0: i32) -> (i32, i32) {
    %c0_i32 = arith.constant 0 : i32
    %c0_i32_0 = arith.constant 0 : i32
    %c0_i32_1 = arith.constant 0 : i32
    return %c0_i32, %c0_i32_0 : i32, i32
  }
  func.func @transform_10(%arg0: i32) -> (i32, i32, i32) {
    %c0_i32 = arith.constant 0 : i32
    %c0_i32_0 = arith.constant 0 : i32
    %c0_i32_1 = arith.constant 0 : i32
    return %arg0, %c0_i32, %c0_i32_0 : i32, i32, i32
  }
}

</mosaic_0001>

<llo_original>
// kernel: attention_forward.1
$region0: #{attention_forward.1}
  #allocation0 [shape = 'u32[]', space=smem, size = 0x4, offset = 0x4, fixed_abs, tag = 'smem constant byte address 0x4 - core index']
  #allocation1 [shape = 'u32[144,128]{1,0:T(1,128)}', space=vmem, size = 0x12000, scoped, tag = 'internal scratch']
  %s0 = inlined_call_operand.vmem [shape: f32[2,64,256], index: 0, kind: input, shape index: {}]
  %s1 = inlined_call_operand.vmem [shape: f32[2,64,256], index: 1, kind: input, shape index: {}]
  %s2 = inlined_call_operand.vmem [shape: bf16[64,64], index: 2, kind: input, shape index: {}]
  %s3 = inlined_call_operand.vmem [shape: bf16[128,64], index: 3, kind: input, shape index: {}]
  %s4 = inlined_call_operand.vmem [shape: f32[64,9], index: 4, kind: input, shape index: {}]
  %s5 = inlined_call_operand.vmem [shape: f32[128,9], index: 5, kind: input, shape index: {}]
  %s6 = inlined_call_operand.vmem [shape: bf16[64,64], index: 6, kind: input, shape index: {}]
  %s7 = inlined_call_operand.vmem [shape: f32[64,1], index: 7, kind: input, shape index: {}]
  %s8 = inlined_call_operand.vmem [shape: f32[9,1,256], index: 8, kind: input, shape index: {}]
  %s9 = inlined_call_operand.vmem [shape: f32[64,64], index: 9, kind: input, shape index: {}]
  %s10 = inlined_call_operand.vmem [shape: f32[2,64,256], index: 10, kind: output, shape index: {}]
  %s11 = sld [smem:[#allocation0]]
  $region73: #{attention_forward.1} parent=0
    _
  %s13 = ssub.s32 1, %s11
  %s14 = scalar_select 0, %s13, %s11
  loop: start=0, step=1, limit=4
  $region2: #{attention_forward.1} parent=0 // loop_pre_header
    _
  $region3: #{attention_forward.1} parent=0 // loop_header
    %s16 = sphi 0, %s20
    %p17 = scmp.ge.s32.totalorder %s16, 4
    %s26 = sphi 0, %s28
    %s29 = sphi 0, %s26
    %s30 = sphi 0, %s29
    %s46 = sphi 0, %s30
    %s52 = sphi 0, %s54
    %s55 = sphi 0, %s52
    %s56 = sphi 0, %s55
    %s72 = sphi 0, %s56
    %s76 = sphi 0, %s76
    %s78 = sphi 0, %s76
    %s79 = sphi 0, %s78
    %s93 = sphi 0, %s79
    %s97 = sphi 0, %s97
    %s99 = sphi 0, %s97
    %s100 = sphi 0, %s99
    %s114 = sphi 0, %s100
    %s118 = sphi 0, %s118
    %s120 = sphi 0, %s118
    %s121 = sphi 0, %s120
    %s135 = sphi 0, %s121
    %s139 = sphi 0, %s139
    %s141 = sphi 0, %s139
    %s142 = sphi 0, %s141
    %s156 = sphi 0, %s142
    %s160 = sphi 0, %s160
    %s162 = sphi 0, %s160
    %s163 = sphi 0, %s162
    %s177 = sphi 0, %s163
    %s181 = sphi 0, %s181
    %s183 = sphi 0, %s181
    %s184 = sphi 0, %s183
    %s198 = sphi 0, %s184
    %s202 = sphi 0, %s202
    %s204 = sphi 0, %s202
    %s205 = sphi 0, %s204
    %s219 = sphi 0, %s205
    %s223 = sphi 0, %s223
    %s225 = sphi 0, %s223
    %s226 = sphi 0, %s225
    %s240 = sphi 0, %s226
    %s246 = sphi 0, %s248
    %s249 = sphi 0, %s246
    %s250 = sphi 0, %s249
    %s266 = sphi 0, %s250
  $region4: #{attention_forward.1} parent=0 // loop_header_branch
    %19 = sbr.rel (%p17) target = $region8
  $region5: #{attention_forward.1} parent=0 // loop_body
    %s21 = ssub.s32 %s16, 1
    %s22 = ssub.s32 %s16, 2
    %s23 = sadd.s32 %s16, 1
    %s24 = ssub.s32 %s16, %s23
    %p25 = scmp.eq.s32.totalorder %s24, 0
    %s27 = sadd.s32 %s26, 1
    %s28 = scalar_select %p25, %s26, %s27
    %p31 = pneg %p25
    %p32 = scmp.eq.s32.totalorder %s16, 1
    %p33 = por %p31, %p32
    %p34 = scmp.ne.s32.totalorder %s26, %s29
    %p35 = scmp.eq.s32.totalorder %s16, 0
    %p36 = por %p34, %p35
    %p37 = scmp.ne.s32.totalorder %s26, %s29
    %p38 = scmp.eq.s32.totalorder %s21, 1
    %p39 = por %p37, %p38
    %p40 = scmp.ne.s32.totalorder %s29, %s30
    %p41 = scmp.eq.s32.totalorder %s21, 0
    %p42 = por %p40, %p41
    %p43 = scmp.ne.s32.totalorder %s29, %s30
    %p44 = scmp.eq.s32.totalorder %s22, 1
    %p45 = por %p43, %p44
    %p47 = scmp.ne.s32.totalorder %s30, %s46
    %p48 = scmp.eq.s32.totalorder %s22, 0
    %p49 = por %p47, %p48
    %s50 = ssub.s32 %s16, %s23
    %p51 = scmp.eq.s32.totalorder %s50, 0
    %s53 = sadd.s32 %s52, 1
    %s54 = scalar_select %p51, %s52, %s53
    %p57 = pneg %p51
    %p58 = scmp.eq.s32.totalorder %s16, 1
    %p59 = por %p57, %p58
    %p60 = scmp.ne.s32.totalorder %s52, %s55
    %p61 = scmp.eq.s32.totalorder %s16, 0
    %p62 = por %p60, %p61
    %p63 = scmp.ne.s32.totalorder %s52, %s55
    %p64 = scmp.eq.s32.totalorder %s21, 1
    %p65 = por %p63, %p64
    %p66 = scmp.ne.s32.totalorder %s55, %s56
    %p67 = scmp.eq.s32.totalorder %s21, 0
    %p68 = por %p66, %p67
    %p69 = scmp.ne.s32.totalorder %s55, %s56
    %p70 = scmp.eq.s32.totalorder %s22, 1
    %p71 = por %p69, %p70
    %p73 = scmp.ne.s32.totalorder %s56, %s72
    %p74 = scmp.eq.s32.totalorder %s22, 0
    %p75 = por %p73, %p74
    %s77 = sadd.s32 %s76, 1
    %p80 = scmp.eq.s32.totalorder %s16, 1
    %p81 = scmp.ne.s32.totalorder %s76, %s78
    %p82 = scmp.eq.s32.totalorder %s16, 0
    %p83 = por %p81, %p82
    %p84 = scmp.ne.s32.totalorder %s76, %s78
    %p85 = scmp.eq.s32.totalorder %s21, 1
    %p86 = por %p84, %p85
    %p87 = scmp.ne.s32.totalorder %s78, %s79
    %p88 = scmp.eq.s32.totalorder %s21, 0
    %p89 = por %p87, %p88
    %p90 = scmp.ne.s32.totalorder %s78, %s79
    %p91 = scmp.eq.s32.totalorder %s22, 1
    %p92 = por %p90, %p91
    %p94 = scmp.ne.s32.totalorder %s79, %s93
    %p95 = scmp.eq.s32.totalorder %s22, 0
    %p96 = por %p94, %p95
    %s98 = sadd.s32 %s97, 1
    %p101 = scmp.eq.s32.totalorder %s16, 1
    %p102 = scmp.ne.s32.totalorder %s97, %s99
    %p103 = scmp.eq.s32.totalorder %s16, 0
    %p104 = por %p102, %p103
    %p105 = scmp.ne.s32.totalorder %s97, %s99
    %p106 = scmp.eq.s32.totalorder %s21, 1
    %p107 = por %p105, %p106
    %p108 = scmp.ne.s32.totalorder %s99, %s100
    %p109 = scmp.eq.s32.totalorder %s21, 0
    %p110 = por %p108, %p109
    %p111 = scmp.ne.s32.totalorder %s99, %s100
    %p112 = scmp.eq.s32.totalorder %s22, 1
    %p113 = por %p111, %p112
    %p115 = scmp.ne.s32.totalorder %s100, %s114
    %p116 = scmp.eq.s32.totalorder %s22, 0
    %p117 = por %p115, %p116
    %s119 = sadd.s32 %s118, 1
    %p122 = scmp.eq.s32.totalorder %s16, 1
    %p123 = scmp.ne.s32.totalorder %s118, %s120
    %p124 = scmp.eq.s32.totalorder %s16, 0
    %p125 = por %p123, %p124
    %p126 = scmp.ne.s32.totalorder %s118, %s120
    %p127 = scmp.eq.s32.totalorder %s21, 1
    %p128 = por %p126, %p127
    %p129 = scmp.ne.s32.totalorder %s120, %s121
    %p130 = scmp.eq.s32.totalorder %s21, 0
    %p131 = por %p129, %p130
    %p132 = scmp.ne.s32.totalorder %s120, %s121
    %p133 = scmp.eq.s32.totalorder %s22, 1
    %p134 = por %p132, %p133
    %p136 = scmp.ne.s32.totalorder %s121, %s135
    %p137 = scmp.eq.s32.totalorder %s22, 0
    %p138 = por %p136, %p137
    %s140 = sadd.s32 %s139, 1
    %p143 = scmp.eq.s32.totalorder %s16, 1
    %p144 = scmp.ne.s32.totalorder %s139, %s141
    %p145 = scmp.eq.s32.totalorder %s16, 0
    %p146 = por %p144, %p145
    %p147 = scmp.ne.s32.totalorder %s139, %s141
    %p148 = scmp.eq.s32.totalorder %s21, 1
    %p149 = por %p147, %p148
    %p150 = scmp.ne.s32.totalorder %s141, %s142
    %p151 = scmp.eq.s32.totalorder %s21, 0
    %p152 = por %p150, %p151
    %p153 = scmp.ne.s32.totalorder %s141, %s142
    %p154 = scmp.eq.s32.totalorder %s22, 1
    %p155 = por %p153, %p154
    %p157 = scmp.ne.s32.totalorder %s142, %s156
    %p158 = scmp.eq.s32.totalorder %s22, 0
    %p159 = por %p157, %p158
    %s161 = sadd.s32 %s160, 1
    %p164 = scmp.eq.s32.totalorder %s16, 1
    %p165 = scmp.ne.s32.totalorder %s160, %s162
    %p166 = scmp.eq.s32.totalorder %s16, 0
    %p167 = por %p165, %p166
    %p168 = scmp.ne.s32.totalorder %s160, %s162
    %p169 = scmp.eq.s32.totalorder %s21, 1
    %p170 = por %p168, %p169
    %p171 = scmp.ne.s32.totalorder %s162, %s163
    %p172 = scmp.eq.s32.totalorder %s21, 0
    %p173 = por %p171, %p172
    %p174 = scmp.ne.s32.totalorder %s162, %s163
    %p175 = scmp.eq.s32.totalorder %s22, 1
    %p176 = por %p174, %p175
    %p178 = scmp.ne.s32.totalorder %s163, %s177
    %p179 = scmp.eq.s32.totalorder %s22, 0
    %p180 = por %p178, %p179
    %s182 = sadd.s32 %s181, 1
    %p185 = scmp.eq.s32.totalorder %s16, 1
    %p186 = scmp.ne.s32.totalorder %s181, %s183
    %p187 = scmp.eq.s32.totalorder %s16, 0
    %p188 = por %p186, %p187
    %p189 = scmp.ne.s32.totalorder %s181, %s183
    %p190 = scmp.eq.s32.totalorder %s21, 1
    %p191 = por %p189, %p190
    %p192 = scmp.ne.s32.totalorder %s183, %s184
    %p193 = scmp.eq.s32.totalorder %s21, 0
    %p194 = por %p192, %p193
    %p195 = scmp.ne.s32.totalorder %s183, %s184
    %p196 = scmp.eq.s32.totalorder %s22, 1
    %p197 = por %p195, %p196
    %p199 = scmp.ne.s32.totalorder %s184, %s198
    %p200 = scmp.eq.s32.totalorder %s22, 0
    %p201 = por %p199, %p200
    %s203 = sadd.s32 %s202, 1
    %p206 = scmp.eq.s32.totalorder %s16, 1
    %p207 = scmp.ne.s32.totalorder %s202, %s204
    %p208 = scmp.eq.s32.totalorder %s16, 0
    %p209 = por %p207, %p208
    %p210 = scmp.ne.s32.totalorder %s202, %s204
    %p211 = scmp.eq.s32.totalorder %s21, 1
    %p212 = por %p210, %p211
    %p213 = scmp.ne.s32.totalorder %s204, %s205
    %p214 = scmp.eq.s32.totalorder %s21, 0
    %p215 = por %p213, %p214
    %p216 = scmp.ne.s32.totalorder %s204, %s205
    %p217 = scmp.eq.s32.totalorder %s22, 1
    %p218 = por %p216, %p217
    %p220 = scmp.ne.s32.totalorder %s205, %s219
    %p221 = scmp.eq.s32.totalorder %s22, 0
    %p222 = por %p220, %p221
    %s224 = sadd.s32 %s223, 1
    %p227 = scmp.eq.s32.totalorder %s16, 1
    %p228 = scmp.ne.s32.totalorder %s223, %s225
    %p229 = scmp.eq.s32.totalorder %s16, 0
    %p230 = por %p228, %p229
    %p231 = scmp.ne.s32.totalorder %s223, %s225
    %p232 = scmp.eq.s32.totalorder %s21, 1
    %p233 = por %p231, %p232
    %p234 = scmp.ne.s32.totalorder %s225, %s226
    %p235 = scmp.eq.s32.totalorder %s21, 0
    %p236 = por %p234, %p235
    %p237 = scmp.ne.s32.totalorder %s225, %s226
    %p238 = scmp.eq.s32.totalorder %s22, 1
    %p239 = por %p237, %p238
    %p241 = scmp.ne.s32.totalorder %s226, %s240
    %p242 = scmp.eq.s32.totalorder %s22, 0
    %p243 = por %p241, %p242
    %s244 = ssub.s32 %s16, %s23
    %p245 = scmp.eq.s32.totalorder %s244, 0
    %s247 = sadd.s32 %s246, 1
    %s248 = scalar_select %p245, %s246, %s247
    %p251 = pneg %p245
    %p252 = scmp.eq.s32.totalorder %s16, 1
    %p253 = por %p251, %p252
    %p254 = scmp.ne.s32.totalorder %s246, %s249
    %p255 = scmp.eq.s32.totalorder %s16, 0
    %p256 = por %p254, %p255
    %p257 = scmp.ne.s32.totalorder %s246, %s249
    %p258 = scmp.eq.s32.totalorder %s21, 1
    %p259 = por %p257, %p258
    %p260 = scmp.ne.s32.totalorder %s249, %s250
    %p261 = scmp.eq.s32.totalorder %s21, 0
    %p262 = por %p260, %p261
    %p263 = scmp.ne.s32.totalorder %s249, %s250
    %p264 = scmp.eq.s32.totalorder %s22, 1
    %p265 = por %p263, %p264
    %p267 = scmp.ne.s32.totalorder %s250, %s266
    %p268 = scmp.eq.s32.totalorder %s22, 0
    %p269 = por %p267, %p268
    %p270 = scmp.le.s32.totalorder 1, %s16
    %p271 = scmp.lt.s32.totalorder %s16, 3
    %p272 = pnand %p270, %p271
    %p273 = pneg %p272
    // Predicated region
    $region9: #{attention_forward.1} parent=5 // pred_check
      _
    $region10: #{attention_forward.1} parent=5 // pred_check_branch
      %275 = sbr.rel (%p272) target = $region12
    $region11: #{attention_forward.1} parent=5 // pred_region
      %s276 = ssub.s32 %s16, 1
      // Predicated region
      $region13: #{attention_forward.1} parent=11 // pred_check
        %p277 = pneg %p89
      $region14: #{attention_forward.1} parent=11 // pred_check_branch
        %279 = sbr.rel (%p277) target = $region16
      $region15: #{attention_forward.1} parent=11 // pred_region
        _
      $region16: #{attention_forward.1} parent=11 // pred_fallthru
        _
      // Predicated region
      $region17: #{attention_forward.1} parent=11 // pred_check
        %p280 = pneg %p110
      $region18: #{attention_forward.1} parent=11 // pred_check_branch
        %282 = sbr.rel (%p280) target = $region20
      $region19: #{attention_forward.1} parent=11 // pred_region
        _
      $region20: #{attention_forward.1} parent=11 // pred_fallthru
        _
      // Predicated region
      $region21: #{attention_forward.1} parent=11 // pred_check
        %p283 = pneg %p131
      $region22: #{attention_forward.1} parent=11 // pred_check_branch
        %285 = sbr.rel (%p283) target = $region24
      $region23: #{attention_forward.1} parent=11 // pred_region
        _
      $region24: #{attention_forward.1} parent=11 // pred_fallthru
        _
      // Predicated region
      $region25: #{attention_forward.1} parent=11 // pred_check
        %p286 = pneg %p152
      $region26: #{attention_forward.1} parent=11 // pred_check_branch
        %288 = sbr.rel (%p286) target = $region28
      $region27: #{attention_forward.1} parent=11 // pred_region
        _
      $region28: #{attention_forward.1} parent=11 // pred_fallthru
        _
      // Predicated region
      $region29: #{attention_forward.1} parent=11 // pred_check
        %p289 = pneg %p173
      $region30: #{attention_forward.1} parent=11 // pred_check_branch
        %291 = sbr.rel (%p289) target = $region32
      $region31: #{attention_forward.1} parent=11 // pred_region
        _
      $region32: #{attention_forward.1} parent=11 // pred_fallthru
        _
      // Predicated region
      $region33: #{attention_forward.1} parent=11 // pred_check
        %p292 = pneg %p194
      $region34: #{attention_forward.1} parent=11 // pred_check_branch
        %294 = sbr.rel (%p292) target = $region36
      $region35: #{attention_forward.1} parent=11 // pred_region
        _
      $region36: #{attention_forward.1} parent=11 // pred_fallthru
        _
      // Predicated region
      $region37: #{attention_forward.1} parent=11 // pred_check
        %p295 = pneg %p215
      $region38: #{attention_forward.1} parent=11 // pred_check_branch
        %297 = sbr.rel (%p295) target = $region40
      $region39: #{attention_forward.1} parent=11 // pred_region
        _
      $region40: #{attention_forward.1} parent=11 // pred_fallthru
        _
      // Predicated region
      $region41: #{attention_forward.1} parent=11 // pred_check
        %p298 = pneg %p236
      $region42: #{attention_forward.1} parent=11 // pred_check_branch
        %300 = sbr.rel (%p298) target = $region44
      $region43: #{attention_forward.1} parent=11 // pred_region
        _
      $region44: #{attention_forward.1} parent=11 // pred_fallthru
        _
    $region12: #{attention_forward.1} parent=5 // pred_fallthru
      _
    %p301 = scmp.lt.s32.totalorder %s16, 2
    // Predicated region
    $region45: #{attention_forward.1} parent=5 // pred_check
      %p302 = pneg %p301
    $region46: #{attention_forward.1} parent=5 // pred_check_branch
      %304 = sbr.rel (%p302) target = $region48
    $region47: #{attention_forward.1} parent=5 // pred_region
      // Predicated region
      $region49: #{attention_forward.1} parent=47 // pred_check
        %p305 = pneg %p36
      $region50: #{attention_forward.1} parent=47 // pred_check_branch
        %307 = sbr.rel (%p305) target = $region52
      $region51: #{attention_forward.1} parent=47 // pred_region
        %p308 = scmp.lt.s32.totalorder %s16, 1
        %s309 = scalar_select %p308, %s16, 1
        %s310 = smul.addr %s309, 16
        %s311 = smul.addr %s310, 8
        %s312 = scalar_lea.vmem %s0, %s311
      $region52: #{attention_forward.1} parent=47 // pred_fallthru
        _
      // Predicated region
      $region53: #{attention_forward.1} parent=47 // pred_check
        %p313 = pneg %p62
      $region54: #{attention_forward.1} parent=47 // pred_check_branch
        %315 = sbr.rel (%p313) target = $region56
      $region55: #{attention_forward.1} parent=47 // pred_region
        %p316 = scmp.lt.s32.totalorder %s16, 1
        %s317 = scalar_select %p316, %s16, 1
        %s318 = smul.addr %s317, 16
        %s319 = smul.addr %s318, 8
        %s320 = scalar_lea.vmem %s1, %s319
      $region56: #{attention_forward.1} parent=47 // pred_fallthru
        _
    $region48: #{attention_forward.1} parent=5 // pred_fallthru
      _
    %p321 = scmp.le.s32.totalorder 1, %s16
    %p322 = scmp.lt.s32.totalorder %s16, 3
    %p323 = pnand %p321, %p322
    %p324 = pneg %p323
    // Predicated region
    $region57: #{attention_forward.1} parent=5 // pred_check
      _
    $region58: #{attention_forward.1} parent=5 // pred_check_branch
      %326 = sbr.rel (%p323) target = $region60
    $region59: #{attention_forward.1} parent=5 // pred_region
      %s327 = ssub.s32 %s16, 1
      %p328 = scmp.lt.s32.totalorder %s21, 1
      %s329 = scalar_select %p328, %s21, 1
      %s330 = smul.addr %s329, 16
      %s331 = smul.addr %s330, 8
      %s332 = scalar_lea.vmem %s0, %s331
      %p333 = pneg %p42
      %p334 = pneg %p39
      %p335 = scmp.lt.s32.totalorder %s21, 1
      %s336 = scalar_select %p335, %s21, 1
      %s337 = smul.addr %s336, 16
      %s338 = smul.addr %s337, 8
      %s339 = scalar_lea.vmem %s1, %s338
      %p340 = pneg %p68
      %p341 = pneg %p65
      %p342 = pneg %p89
      %p343 = pneg %p86
      %p344 = pneg %p110
      %p345 = pneg %p107
      %p346 = pneg %p131
      %p347 = pneg %p128
      %p348 = pneg %p152
      %p349 = pneg %p149
      %p350 = pneg %p173
      %p351 = pneg %p170
      %p352 = pneg %p194
      %p353 = pneg %p191
      %p354 = pneg %p215
      %p355 = pneg %p212
      %p356 = pneg %p236
      %p357 = pneg %p233
      %p358 = pneg %p262
      %p359 = pneg %p259
      %p360 = scmp.lt.s32.totalorder %s21, 1
      %s361 = scalar_select %p360, %s21, 1
      %s362 = smul.addr %s361, 16
      %s363 = smul.addr %s362, 8
      %s364 = scalar_lea.vmem %s10, %s363
      %p365 = scmp.lt.s32.totalorder %s21, 1
      %s366 = scalar_select %p365, %s21, 1
      %s367 = smul.addr %s366, 16
      %s368 = smul.addr %s367, 8
      %s369 = scalar_lea.vmem %s0, %s368
      %p370 = scmp.lt.s32.totalorder %s21, 1
      %s371 = scalar_select %p370, %s21, 1
      %s372 = smul.addr %s371, 16
      %s373 = smul.addr %s372, 8
      %s374 = scalar_lea.vmem %s1, %s373
      %p375 = scmp.lt.s32.totalorder %s21, 1
      %s376 = scalar_select %p375, %s21, 1
      %s377 = smul.addr %s376, 16
      %s378 = smul.addr %s377, 8
      %s379 = scalar_lea.vmem %s10, %s378
      %v381 = vld [vmem:[%s369] sm:$0xff]
      %v382 = vld [vmem:[%s369 + $0x8] sm:$0xff]
      %v383 = vld [vmem:[%s369 + $0x10] sm:$0xff]
      %v384 = vld [vmem:[%s369 + $0x18] sm:$0xff]
      %v385 = vld [vmem:[%s369 + $0x20] sm:$0xff]
      %v386 = vld [vmem:[%s369 + $0x28] sm:$0xff]
      %v387 = vld [vmem:[%s369 + $0x30] sm:$0xff]
      %v388 = vld [vmem:[%s369 + $0x38] sm:$0xff]
      %v389 = vld [vmem:[%s369 + $0x40] sm:$0xff]
      %v390 = vld [vmem:[%s369 + $0x48] sm:$0xff]
      %v391 = vld [vmem:[%s369 + $0x50] sm:$0xff]
      %v392 = vld [vmem:[%s369 + $0x58] sm:$0xff]
      %v393 = vld [vmem:[%s369 + $0x60] sm:$0xff]
      %v394 = vld [vmem:[%s369 + $0x68] sm:$0xff]
      %v395 = vld [vmem:[%s369 + $0x70] sm:$0xff]
      %v396 = vld [vmem:[%s369 + $0x78] sm:$0xff]
      %v397 = vpack.c.bf16 %v383, %v381
      %v398 = vpack.c.bf16 %v384, %v382
      %v399 = vpack.c.bf16 %v387, %v385
      %v400 = vpack.c.bf16 %v388, %v386
      %v401 = vpack.c.bf16 %v391, %v389
      %v402 = vpack.c.bf16 %v392, %v390
      %v403 = vpack.c.bf16 %v395, %v393
      %v404 = vpack.c.bf16 %v396, %v394
      %v405 = vld [vmem:[%s374] sm:$0xff]
      %v406 = vld [vmem:[%s374 + $0x8] sm:$0xff]
      %v407 = vld [vmem:[%s374 + $0x10] sm:$0xff]
      %v408 = vld [vmem:[%s374 + $0x18] sm:$0xff]
      %v409 = vld [vmem:[%s374 + $0x20] sm:$0xff]
      %v410 = vld [vmem:[%s374 + $0x28] sm:$0xff]
      %v411 = vld [vmem:[%s374 + $0x30] sm:$0xff]
      %v412 = vld [vmem:[%s374 + $0x38] sm:$0xff]
      %v413 = vld [vmem:[%s374 + $0x40] sm:$0xff]
      %v414 = vld [vmem:[%s374 + $0x48] sm:$0xff]
      %v415 = vld [vmem:[%s374 + $0x50] sm:$0xff]
      %v416 = vld [vmem:[%s374 + $0x58] sm:$0xff]
      %v417 = vld [vmem:[%s374 + $0x60] sm:$0xff]
      %v418 = vld [vmem:[%s374 + $0x68] sm:$0xff]
      %v419 = vld [vmem:[%s374 + $0x70] sm:$0xff]
      %v420 = vld [vmem:[%s374 + $0x78] sm:$0xff]
      %v421 = vpack.c.bf16 %v407, %v405
      %v422 = vpack.c.bf16 %v408, %v406
      %v423 = vpack.c.bf16 %v411, %v409
      %v424 = vpack.c.bf16 %v412, %v410
      %v425 = vpack.c.bf16 %v415, %v413
      %v426 = vpack.c.bf16 %v416, %v414
      %v427 = vpack.c.bf16 %v419, %v417
      %v428 = vpack.c.bf16 %v420, %v418
      %v429 = vld [vmem:[%s2] sm:$0xf]
      %v430 = vld [vmem:[%s2 + $0x4] sm:$0xf]
      %v431 = vld [vmem:[%s2 + $0x8] sm:$0xf]
      %v432 = vld [vmem:[%s2 + $0xc] sm:$0xf]
      %v433 = vld [vmem:[%s2 + $0x10] sm:$0xf]
      %v434 = vld [vmem:[%s2 + $0x14] sm:$0xf]
      %v435 = vld [vmem:[%s2 + $0x18] sm:$0xf]
      %v436 = vld [vmem:[%s2 + $0x1c] sm:$0xf]
      %v445 = vunpack.c.l.b16 %v429
      %v446 = vunpack.c.l.b16 %v430
      %v447 = vunpack.c.l.b16 %v431
      %v448 = vunpack.c.l.b16 %v432
      %v449 = vunpack.c.l.b16 %v433
      %v450 = vunpack.c.l.b16 %v434
      %v451 = vunpack.c.l.b16 %v435
      %v452 = vunpack.c.l.b16 %v436
      %v453 = vpack.c.b16 %v446, %v445
      %v454 = vpack.c.b16 %v448, %v447
      %v455 = vpack.c.b16 %v450, %v449
      %v456 = vpack.c.b16 %v452, %v451
      %vm457 = vcmask 523264
      %v459 = vsel %vm457, %v453, 0
      %v462 = vsel %vm457, %v454, 0
      %v465 = vsel %vm457, %v455, 0
      %v468 = vsel %vm457, %v456, 0
      %470 = vmatprep.subr.bf16.mxu0 0
      %471 = vmatpush1.bf16.msra.mxu0 0
      %472 = vmatprep.subr.bf16.mxu0 0
      %473 = vmatpush1.bf16.msra.mxu0 0
      %474 = vmatprep.subr.bf16.mxu0 0
      %475 = vmatpush1.bf16.msra.mxu0 0
      %476 = vmatprep.subr.bf16.mxu0 0
      %477 = vmatpush1.bf16.msra.mxu0 0
      %478 = vmatprep.subr.bf16.mxu0 %v404
      %479 = vmatpush1.bf16.msra.mxu0 %v403
      %480 = vmatprep.subr.bf16.mxu0 %v402
      %481 = vmatpush1.bf16.msra.mxu0 %v401
      %482 = vmatprep.subr.bf16.mxu0 %v400
      %483 = vmatpush1.bf16.msra.mxu0 %v399
      %484 = vmatprep.subr.bf16.mxu0 %v398
      %485 = vmatpush1.bf16.msra.mxu0 %v397
      %486 = vmatprep.subr.bf16.mxu0 0
      %487 = vmatpush2.bf16.msra.mxu0 0
      %488 = vmatprep.subr.bf16.mxu0 0
      %489 = vmatpush2.bf16.msra.mxu0 0
      %490 = vmatprep.subr.bf16.mxu0 0
      %491 = vmatpush2.bf16.msra.mxu0 0
      %492 = vmatprep.subr.bf16.mxu0 0
      %493 = vmatpush2.bf16.msra.mxu0 0
      %494 = vmatprep.subr.bf16.mxu0 0
      %495 = vmatpush2.bf16.msra.mxu0 0
      %496 = vmatprep.subr.bf16.mxu0 0
      %497 = vmatpush2.bf16.msra.mxu0 0
      %498 = vmatprep.subr.bf16.mxu0 0
      %499 = vmatpush2.bf16.msra.mxu0 0
      %500 = vmatprep.subr.bf16.mxu0 0
      %501 = vmatpush2.bf16.msra.mxu0 0
      %502 = vmatprep.mubr.bf16.mxu0 0
      %503 = vmatmul.mubr.bf16.gmra.mxu0 %v459
      %v504 = vpop.f32.mrf.mxu0
      %v505 = vadd.f32 0.0, %v504
      %v506 = vpop.f32.mrf.mxu0
      %v507 = vadd.f32 0.0, %v506
      %v508 = vpop.f32.mrf.mxu0
      %v509 = vadd.f32 0.0, %v508
      %v510 = vpop.f32.mrf.mxu0
      %v511 = vadd.f32 0.0, %v510
      %512 = vmatprep.mubr.bf16.mxu0 0
      %513 = vmatmul.mubr.bf16.gmra.mxu0 %v462
      %v514 = vpop.f32.mrf.mxu0
      %v515 = vadd.f32 0.0, %v514
      %v516 = vpop.f32.mrf.mxu0
      %v517 = vadd.f32 0.0, %v516
      %v518 = vpop.f32.mrf.mxu0
      %v519 = vadd.f32 0.0, %v518
      %v520 = vpop.f32.mrf.mxu0
      %v521 = vadd.f32 0.0, %v520
      %522 = vmatprep.mubr.bf16.mxu0 0
      %523 = vmatmul.mubr.bf16.gmra.mxu0 %v465
      %v524 = vpop.f32.mrf.mxu0
      %v525 = vadd.f32 0.0, %v524
      %v526 = vpop.f32.mrf.mxu0
      %v527 = vadd.f32 0.0, %v526
      %v528 = vpop.f32.mrf.mxu0
      %v529 = vadd.f32 0.0, %v528
      %v530 = vpop.f32.mrf.mxu0
      %v531 = vadd.f32 0.0, %v530
      %532 = vmatprep.mubr.bf16.mxu0 0
      %533 = vmatmul.mubr.bf16.gmra.mxu0 %v468
      %v534 = vpop.f32.mrf.mxu0
      %v535 = vadd.f32 0.0, %v534
      %v536 = vpop.f32.mrf.mxu0
      %v537 = vadd.f32 0.0, %v536
      %v538 = vpop.f32.mrf.mxu0
      %v539 = vadd.f32 0.0, %v538
      %v540 = vpop.f32.mrf.mxu0
      %v541 = vadd.f32 0.0, %v540
      %542 = vdwg.mxu0
      %v543 = vld [vmem:[%s3] sm:$0xf]
      %v544 = vld [vmem:[%s3 + $0x4] sm:$0xf]
      %v545 = vld [vmem:[%s3 + $0x8] sm:$0xf]
      %v546 = vld [vmem:[%s3 + $0xc] sm:$0xf]
      %v547 = vld [vmem:[%s3 + $0x10] sm:$0xf]
      %v548 = vld [vmem:[%s3 + $0x14] sm:$0xf]
      %v549 = vld [vmem:[%s3 + $0x18] sm:$0xf]
      %v550 = vld [vmem:[%s3 + $0x1c] sm:$0xf]
      %v551 = vld [vmem:[%s3 + $0x20] sm:$0xf]
      %v552 = vld [vmem:[%s3 + $0x24] sm:$0xf]
      %v553 = vld [vmem:[%s3 + $0x28] sm:$0xf]
      %v554 = vld [vmem:[%s3 + $0x2c] sm:$0xf]
      %v555 = vld [vmem:[%s3 + $0x30] sm:$0xf]
      %v556 = vld [vmem:[%s3 + $0x34] sm:$0xf]
      %v557 = vld [vmem:[%s3 + $0x38] sm:$0xf]
      %v558 = vld [vmem:[%s3 + $0x3c] sm:$0xf]
      %v575 = vunpack.c.l.b16 %v543
      %v576 = vunpack.c.l.b16 %v544
      %v577 = vunpack.c.l.b16 %v545
      %v578 = vunpack.c.l.b16 %v546
      %v579 = vunpack.c.l.b16 %v547
      %v580 = vunpack.c.l.b16 %v548
      %v581 = vunpack.c.l.b16 %v549
      %v582 = vunpack.c.l.b16 %v550
      %v583 = vunpack.c.l.b16 %v551
      %v584 = vunpack.c.l.b16 %v552
      %v585 = vunpack.c.l.b16 %v553
      %v586 = vunpack.c.l.b16 %v554
      %v587 = vunpack.c.l.b16 %v555
      %v588 = vunpack.c.l.b16 %v556
      %v589 = vunpack.c.l.b16 %v557
      %v590 = vunpack.c.l.b16 %v558
      %v591 = vpack.c.b16 %v576, %v575
      %v592 = vpack.c.b16 %v578, %v577
      %v593 = vpack.c.b16 %v580, %v579
      %v594 = vpack.c.b16 %v582, %v581
      %v595 = vpack.c.b16 %v584, %v583
      %v596 = vpack.c.b16 %v586, %v585
      %v597 = vpack.c.b16 %v588, %v587
      %v598 = vpack.c.b16 %v590, %v589
      %v600 = vsel %vm457, %v591, 0
      %v603 = vsel %vm457, %v592, 0
      %v606 = vsel %vm457, %v593, 0
      %v609 = vsel %vm457, %v594, 0
      %v612 = vsel %vm457, %v595, 0
      %v615 = vsel %vm457, %v596, 0
      %v618 = vsel %vm457, %v597, 0
      %v621 = vsel %vm457, %v598, 0
      %623 = vmatprep.subr.bf16.mxu0 0
      %624 = vmatpush1.bf16.msra.mxu0 0
      %625 = vmatprep.subr.bf16.mxu0 0
      %626 = vmatpush1.bf16.msra.mxu0 0
      %627 = vmatprep.subr.bf16.mxu0 0
      %628 = vmatpush1.bf16.msra.mxu0 0
      %629 = vmatprep.subr.bf16.mxu0 0
      %630 = vmatpush1.bf16.msra.mxu0 0
      %631 = vmatprep.subr.bf16.mxu0 %v428
      %632 = vmatpush1.bf16.msra.mxu0 %v427
      %633 = vmatprep.subr.bf16.mxu0 %v426
      %634 = vmatpush1.bf16.msra.mxu0 %v425
      %635 = vmatprep.subr.bf16.mxu0 %v424
      %636 = vmatpush1.bf16.msra.mxu0 %v423
      %637 = vmatprep.subr.bf16.mxu0 %v422
      %638 = vmatpush1.bf16.msra.mxu0 %v421
      %639 = vmatprep.subr.bf16.mxu0 0
      %640 = vmatpush2.bf16.msra.mxu0 0
      %641 = vmatprep.subr.bf16.mxu0 0
      %642 = vmatpush2.bf16.msra.mxu0 0
      %643 = vmatprep.subr.bf16.mxu0 0
      %644 = vmatpush2.bf16.msra.mxu0 0
      %645 = vmatprep.subr.bf16.mxu0 0
      %646 = vmatpush2.bf16.msra.mxu0 0
      %647 = vmatprep.subr.bf16.mxu0 0
      %648 = vmatpush2.bf16.msra.mxu0 0
      %649 = vmatprep.subr.bf16.mxu0 0
      %650 = vmatpush2.bf16.msra.mxu0 0
      %651 = vmatprep.subr.bf16.mxu0 0
      %652 = vmatpush2.bf16.msra.mxu0 0
      %653 = vmatprep.subr.bf16.mxu0 0
      %654 = vmatpush2.bf16.msra.mxu0 0
      %655 = vmatprep.mubr.bf16.mxu0 0
      %656 = vmatmul.mubr.bf16.gmra.mxu0 %v600
      %v657 = vpop.f32.mrf.mxu0
      %v658 = vadd.f32 0.0, %v657
      %v659 = vpop.f32.mrf.mxu0
      %v660 = vadd.f32 0.0, %v659
      %v661 = vpop.f32.mrf.mxu0
      %v662 = vadd.f32 0.0, %v661
      %v663 = vpop.f32.mrf.mxu0
      %v664 = vadd.f32 0.0, %v663
      %665 = vmatprep.mubr.bf16.mxu0 0
      %666 = vmatmul.mubr.bf16.gmra.mxu0 %v603
      %v667 = vpop.f32.mrf.mxu0
      %v668 = vadd.f32 0.0, %v667
      %v669 = vpop.f32.mrf.mxu0
      %v670 = vadd.f32 0.0, %v669
      %v671 = vpop.f32.mrf.mxu0
      %v672 = vadd.f32 0.0, %v671
      %v673 = vpop.f32.mrf.mxu0
      %v674 = vadd.f32 0.0, %v673
      %675 = vmatprep.mubr.bf16.mxu0 0
      %676 = vmatmul.mubr.bf16.gmra.mxu0 %v606
      %v677 = vpop.f32.mrf.mxu0
      %v678 = vadd.f32 0.0, %v677
      %v679 = vpop.f32.mrf.mxu0
      %v680 = vadd.f32 0.0, %v679
      %v681 = vpop.f32.mrf.mxu0
      %v682 = vadd.f32 0.0, %v681
      %v683 = vpop.f32.mrf.mxu0
      %v684 = vadd.f32 0.0, %v683
      %685 = vmatprep.mubr.bf16.mxu0 0
      %686 = vmatmul.mubr.bf16.gmra.mxu0 %v609
      %v687 = vpop.f32.mrf.mxu0
      %v688 = vadd.f32 0.0, %v687
      %v689 = vpop.f32.mrf.mxu0
      %v690 = vadd.f32 0.0, %v689
      %v691 = vpop.f32.mrf.mxu0
      %v692 = vadd.f32 0.0, %v691
      %v693 = vpop.f32.mrf.mxu0
      %v694 = vadd.f32 0.0, %v693
      %695 = vmatprep.mubr.bf16.mxu0 0
      %696 = vmatmul.mubr.bf16.gmra.mxu0 %v612
      %v697 = vpop.f32.mrf.mxu0
      %v698 = vadd.f32 0.0, %v697
      %v699 = vpop.f32.mrf.mxu0
      %v700 = vadd.f32 0.0, %v699
      %v701 = vpop.f32.mrf.mxu0
      %v702 = vadd.f32 0.0, %v701
      %v703 = vpop.f32.mrf.mxu0
      %v704 = vadd.f32 0.0, %v703
      %705 = vmatprep.mubr.bf16.mxu0 0
      %706 = vmatmul.mubr.bf16.gmra.mxu0 %v615
      %v707 = vpop.f32.mrf.mxu0
      %v708 = vadd.f32 0.0, %v707
      %v709 = vpop.f32.mrf.mxu0
      %v710 = vadd.f32 0.0, %v709
      %v711 = vpop.f32.mrf.mxu0
      %v712 = vadd.f32 0.0, %v711
      %v713 = vpop.f32.mrf.mxu0
      %v714 = vadd.f32 0.0, %v713
      %715 = vmatprep.mubr.bf16.mxu0 0
      %716 = vmatmul.mubr.bf16.gmra.mxu0 %v618
      %v717 = vpop.f32.mrf.mxu0
      %v718 = vadd.f32 0.0, %v717
      %v719 = vpop.f32.mrf.mxu0
      %v720 = vadd.f32 0.0, %v719
      %v721 = vpop.f32.mrf.mxu0
      %v722 = vadd.f32 0.0, %v721
      %v723 = vpop.f32.mrf.mxu0
      %v724 = vadd.f32 0.0, %v723
      %725 = vmatprep.mubr.bf16.mxu0 0
      %726 = vmatmul.mubr.bf16.gmra.mxu0 %v621
      %v727 = vpop.f32.mrf.mxu0
      %v728 = vadd.f32 0.0, %v727
      %v729 = vpop.f32.mrf.mxu0
      %v730 = vadd.f32 0.0, %v729
      %v731 = vpop.f32.mrf.mxu0
      %v732 = vadd.f32 0.0, %v731
      %v733 = vpop.f32.mrf.mxu0
      %v734 = vadd.f32 0.0, %v733
      %735 = vdwg.mxu0
      %v736 = vld [vmem:[%s4] sm:$0xff]
      %v737 = vld [vmem:[%s4 + $0x8] sm:$0xff]
      %v738 = vld [vmem:[%s4 + $0x10] sm:$0xff]
      %v739 = vld [vmem:[%s4 + $0x18] sm:$0xff]
      %v740 = vld [vmem:[%s4 + $0x20] sm:$0xff]
      %v741 = vld [vmem:[%s4 + $0x28] sm:$0xff]
      %v742 = vld [vmem:[%s4 + $0x30] sm:$0xff]
      %v743 = vld [vmem:[%s4 + $0x38] sm:$0xff]
      %v744 = vld [vmem:[%s5] sm:$0xff]
      %v745 = vld [vmem:[%s5 + $0x8] sm:$0xff]
      %v746 = vld [vmem:[%s5 + $0x10] sm:$0xff]
      %v747 = vld [vmem:[%s5 + $0x18] sm:$0xff]
      %v748 = vld [vmem:[%s5 + $0x20] sm:$0xff]
      %v749 = vld [vmem:[%s5 + $0x28] sm:$0xff]
      %v750 = vld [vmem:[%s5 + $0x30] sm:$0xff]
      %v751 = vld [vmem:[%s5 + $0x38] sm:$0xff]
      %v752 = vld [vmem:[%s5 + $0x40] sm:$0xff]
      %v753 = vld [vmem:[%s5 + $0x48] sm:$0xff]
      %v754 = vld [vmem:[%s5 + $0x50] sm:$0xff]
      %v755 = vld [vmem:[%s5 + $0x58] sm:$0xff]
      %v756 = vld [vmem:[%s5 + $0x60] sm:$0xff]
      %v757 = vld [vmem:[%s5 + $0x68] sm:$0xff]
      %v758 = vld [vmem:[%s5 + $0x70] sm:$0xff]
      %v759 = vld [vmem:[%s5 + $0x78] sm:$0xff]
      %v760 = vld [vmem:[%s8] sm:$0x3]
      %761 = vrot.lane.b32.xlu0 %v505, 17
      %v762 = vpop.permute.xlu0 %761
      %763 = vrot.lane.b32.xlu0 %v509, 17
      %v764 = vpop.permute.xlu0 %763
      %765 = vrot.lane.b32.xlu0 %v515, 17
      %v766 = vpop.permute.xlu0 %765
      %767 = vrot.lane.b32.xlu0 %v519, 17
      %v768 = vpop.permute.xlu0 %767
      %769 = vrot.lane.b32.xlu0 %v525, 17
      %v770 = vpop.permute.xlu0 %769
      %771 = vrot.lane.b32.xlu0 %v529, 17
      %v772 = vpop.permute.xlu0 %771
      %773 = vrot.lane.b32.xlu0 %v535, 17
      %v774 = vpop.permute.xlu0 %773
      %775 = vrot.lane.b32.xlu0 %v539, 17
      %v776 = vpop.permute.xlu0 %775
      %777 = vrot.lane.b32.xlu0 %v507, 17
      %v778 = vpop.permute.xlu0 %777
      %779 = vrot.lane.b32.xlu0 %v511, 17
      %v780 = vpop.permute.xlu0 %779
      %781 = vrot.lane.b32.xlu0 %v517, 17
      %v782 = vpop.permute.xlu0 %781
      %783 = vrot.lane.b32.xlu0 %v521, 17
      %v784 = vpop.permute.xlu0 %783
      %785 = vrot.lane.b32.xlu0 %v527, 17
      %v786 = vpop.permute.xlu0 %785
      %787 = vrot.lane.b32.xlu0 %v531, 17
      %v788 = vpop.permute.xlu0 %787
      %789 = vrot.lane.b32.xlu0 %v537, 17
      %v790 = vpop.permute.xlu0 %789
      %791 = vrot.lane.b32.xlu0 %v541, 17
      %v792 = vpop.permute.xlu0 %791
      %v793 = vlaneseq
      %v794 = vand.u32 %v793, 127
      %vm795 = vcmp.lt.s32.totalorder %v794, 17
      %v796 = vsel %vm795, %v762, %v778
      %v797 = vsel %vm795, %v764, %v780
      %v798 = vsel %vm795, %v766, %v782
      %v799 = vsel %vm795, %v768, %v784
      %v800 = vsel %vm795, %v770, %v786
      %v801 = vsel %vm795, %v772, %v788
      %v802 = vsel %vm795, %v774, %v790
      %v803 = vsel %vm795, %v776, %v792
      %v804 = vsel %vm795, %v778, %v762
      %v805 = vsel %vm795, %v780, %v764
      %v806 = vsel %vm795, %v782, %v766
      %v807 = vsel %vm795, %v784, %v768
      %v808 = vsel %vm795, %v786, %v770
      %v809 = vsel %vm795, %v788, %v772
      %v810 = vsel %vm795, %v790, %v774
      %v811 = vsel %vm795, %v792, %v776
      %v813 = vlaneseq
      %v814 = vshrl.u32 %v813, 7
      %v815 = vsub.s32 0, %v814
      %v816 = vrot.slane %v760, %v815
      %v817 = vlaneseq
      %v818 = vshrl.u32 %v817, 7
      %v819 = vsub.s32 1, %v818
      %v820 = vrot.slane %v760, %v819
      %v823 = vmul.f32 %v804, %v816
      %v824 = vmul.f32 %v796, %v820
      %v825 = vmul.f32 %v805, %v816
      %v826 = vmul.f32 %v797, %v820
      %v827 = vmul.f32 %v806, %v816
      %v828 = vmul.f32 %v798, %v820
      %v829 = vmul.f32 %v807, %v816
      %v830 = vmul.f32 %v799, %v820
      %v831 = vmul.f32 %v808, %v816
      %v832 = vmul.f32 %v800, %v820
      %v833 = vmul.f32 %v809, %v816
      %v834 = vmul.f32 %v801, %v820
      %v835 = vmul.f32 %v810, %v816
      %v836 = vmul.f32 %v802, %v820
      %v837 = vmul.f32 %v811, %v816
      %v838 = vmul.f32 %v803, %v820
      %840 = vset.pattern.permute.xlu0 0
      %841 = vperm.xlu0 %840, %v736
      %v842 = vpop.permute.xlu0 %841
      %845 = vset.pattern.permute.xlu0 0
      %846 = vperm.xlu0 %845, %v737
      %v847 = vpop.permute.xlu0 %846
      %850 = vset.pattern.permute.xlu0 0
      %851 = vperm.xlu0 %850, %v738
      %v852 = vpop.permute.xlu0 %851
      %855 = vset.pattern.permute.xlu0 0
      %856 = vperm.xlu0 %855, %v739
      %v857 = vpop.permute.xlu0 %856
      %860 = vset.pattern.permute.xlu0 0
      %861 = vperm.xlu0 %860, %v740
      %v862 = vpop.permute.xlu0 %861
      %865 = vset.pattern.permute.xlu0 0
      %866 = vperm.xlu0 %865, %v741
      %v867 = vpop.permute.xlu0 %866
      %870 = vset.pattern.permute.xlu0 0
      %871 = vperm.xlu0 %870, %v742
      %v872 = vpop.permute.xlu0 %871
      %875 = vset.pattern.permute.xlu0 0
      %876 = vperm.xlu0 %875, %v743
      %v877 = vpop.permute.xlu0 %876
      %v879 = vmul.f32 %v842, %v823
      %v880 = vmul.f32 %v842, %v824
      %v881 = vmul.f32 %v847, %v825
      %v882 = vmul.f32 %v847, %v826
      %v883 = vmul.f32 %v852, %v827
      %v884 = vmul.f32 %v852, %v828
      %v885 = vmul.f32 %v857, %v829
      %v886 = vmul.f32 %v857, %v830
      %v887 = vmul.f32 %v862, %v831
      %v888 = vmul.f32 %v862, %v832
      %v889 = vmul.f32 %v867, %v833
      %v890 = vmul.f32 %v867, %v834
      %v891 = vmul.f32 %v872, %v835
      %v892 = vmul.f32 %v872, %v836
      %v893 = vmul.f32 %v877, %v837
      %v894 = vmul.f32 %v877, %v838
      %v895 = vadd.f32 %v879, 0.0
      %v896 = vadd.f32 %v880, 0.0
      %v897 = vadd.f32 %v881, 0.0
      %v898 = vadd.f32 %v882, 0.0
      %v899 = vadd.f32 %v883, 0.0
      %v900 = vadd.f32 %v884, 0.0
      %v901 = vadd.f32 %v885, 0.0
      %v902 = vadd.f32 %v886, 0.0
      %v903 = vadd.f32 %v887, 0.0
      %v904 = vadd.f32 %v888, 0.0
      %v905 = vadd.f32 %v889, 0.0
      %v906 = vadd.f32 %v890, 0.0
      %v907 = vadd.f32 %v891, 0.0
      %v908 = vadd.f32 %v892, 0.0
      %v909 = vadd.f32 %v893, 0.0
      %v910 = vadd.f32 %v894, 0.0
      %911 = vrot.lane.b32.xlu0 %v658, 17
      %v912 = vpop.permute.xlu0 %911
      %913 = vrot.lane.b32.xlu0 %v662, 17
      %v914 = vpop.permute.xlu0 %913
      %915 = vrot.lane.b32.xlu0 %v668, 17
      %v916 = vpop.permute.xlu0 %915
      %917 = vrot.lane.b32.xlu0 %v672, 17
      %v918 = vpop.permute.xlu0 %917
      %919 = vrot.lane.b32.xlu0 %v678, 17
      %v920 = vpop.permute.xlu0 %919
      %921 = vrot.lane.b32.xlu0 %v682, 17
      %v922 = vpop.permute.xlu0 %921
      %923 = vrot.lane.b32.xlu0 %v688, 17
      %v924 = vpop.permute.xlu0 %923
      %925 = vrot.lane.b32.xlu0 %v692, 17
      %v926 = vpop.permute.xlu0 %925
      %927 = vrot.lane.b32.xlu0 %v698, 17
      %v928 = vpop.permute.xlu0 %927
      %929 = vrot.lane.b32.xlu0 %v702, 17
      %v930 = vpop.permute.xlu0 %929
      %931 = vrot.lane.b32.xlu0 %v708, 17
      %v932 = vpop.permute.xlu0 %931
      %933 = vrot.lane.b32.xlu0 %v712, 17
      %v934 = vpop.permute.xlu0 %933
      %935 = vrot.lane.b32.xlu0 %v718, 17
      %v936 = vpop.permute.xlu0 %935
      %937 = vrot.lane.b32.xlu0 %v722, 17
      %v938 = vpop.permute.xlu0 %937
      %939 = vrot.lane.b32.xlu0 %v728, 17
      %v940 = vpop.permute.xlu0 %939
      %941 = vrot.lane.b32.xlu0 %v732, 17
      %v942 = vpop.permute.xlu0 %941
      %943 = vrot.lane.b32.xlu0 %v660, 17
      %v944 = vpop.permute.xlu0 %943
      %945 = vrot.lane.b32.xlu0 %v664, 17
      %v946 = vpop.permute.xlu0 %945
      %947 = vrot.lane.b32.xlu0 %v670, 17
      %v948 = vpop.permute.xlu0 %947
      %949 = vrot.lane.b32.xlu0 %v674, 17
      %v950 = vpop.permute.xlu0 %949
      %951 = vrot.lane.b32.xlu0 %v680, 17
      %v952 = vpop.permute.xlu0 %951
      %953 = vrot.lane.b32.xlu0 %v684, 17
      %v954 = vpop.permute.xlu0 %953
      %955 = vrot.lane.b32.xlu0 %v690, 17
      %v956 = vpop.permute.xlu0 %955
      %957 = vrot.lane.b32.xlu0 %v694, 17
      %v958 = vpop.permute.xlu0 %957
      %959 = vrot.lane.b32.xlu0 %v700, 17
      %v960 = vpop.permute.xlu0 %959
      %961 = vrot.lane.b32.xlu0 %v704, 17
      %v962 = vpop.permute.xlu0 %961
      %963 = vrot.lane.b32.xlu0 %v710, 17
      %v964 = vpop.permute.xlu0 %963
      %965 = vrot.lane.b32.xlu0 %v714, 17
      %v966 = vpop.permute.xlu0 %965
      %967 = vrot.lane.b32.xlu0 %v720, 17
      %v968 = vpop.permute.xlu0 %967
      %969 = vrot.lane.b32.xlu0 %v724, 17
      %v970 = vpop.permute.xlu0 %969
      %971 = vrot.lane.b32.xlu0 %v730, 17
      %v972 = vpop.permute.xlu0 %971
      %973 = vrot.lane.b32.xlu0 %v734, 17
      %v974 = vpop.permute.xlu0 %973
      %v975 = vsel %vm795, %v912, %v944
      %v976 = vsel %vm795, %v914, %v946
      %v977 = vsel %vm795, %v916, %v948
      %v978 = vsel %vm795, %v918, %v950
      %v979 = vsel %vm795, %v920, %v952
      %v980 = vsel %vm795, %v922, %v954
      %v981 = vsel %vm795, %v924, %v956
      %v982 = vsel %vm795, %v926, %v958
      %v983 = vsel %vm795, %v928, %v960
      %v984 = vsel %vm795, %v930, %v962
      %v985 = vsel %vm795, %v932, %v964
      %v986 = vsel %vm795, %v934, %v966
      %v987 = vsel %vm795, %v936, %v968
      %v988 = vsel %vm795, %v938, %v970
      %v989 = vsel %vm795, %v940, %v972
      %v990 = vsel %vm795, %v942, %v974
      %v991 = vsel %vm795, %v944, %v912
      %v992 = vsel %vm795, %v946, %v914
      %v993 = vsel %vm795, %v948, %v916
      %v994 = vsel %vm795, %v950, %v918
      %v995 = vsel %vm795, %v952, %v920
      %v996 = vsel %vm795, %v954, %v922
      %v997 = vsel %vm795, %v956, %v924
      %v998 = vsel %vm795, %v958, %v926
      %v999 = vsel %vm795, %v960, %v928
      %v1000 = vsel %vm795, %v962, %v930
      %v1001 = vsel %vm795, %v964, %v932
      %v1002 = vsel %vm795, %v966, %v934
      %v1003 = vsel %vm795, %v968, %v936
      %v1004 = vsel %vm795, %v970, %v938
      %v1005 = vsel %vm795, %v972, %v940
      %v1006 = vsel %vm795, %v974, %v942
      %v1007 = vmul.f32 %v991, %v816
      %v1008 = vmul.f32 %v975, %v820
      %v1009 = vmul.f32 %v992, %v816
      %v1010 = vmul.f32 %v976, %v820
      %v1011 = vmul.f32 %v993, %v816
      %v1012 = vmul.f32 %v977, %v820
      %v1013 = vmul.f32 %v994, %v816
      %v1014 = vmul.f32 %v978, %v820
      %v1015 = vmul.f32 %v995, %v816
      %v1016 = vmul.f32 %v979, %v820
      %v1017 = vmul.f32 %v996, %v816
      %v1018 = vmul.f32 %v980, %v820
      %v1019 = vmul.f32 %v997, %v816
      %v1020 = vmul.f32 %v981, %v820
      %v1021 = vmul.f32 %v998, %v816
      %v1022 = vmul.f32 %v982, %v820
      %v1023 = vmul.f32 %v999, %v816
      %v1024 = vmul.f32 %v983, %v820
      %v1025 = vmul.f32 %v1000, %v816
      %v1026 = vmul.f32 %v984, %v820
      %v1027 = vmul.f32 %v1001, %v816
      %v1028 = vmul.f32 %v985, %v820
      %v1029 = vmul.f32 %v1002, %v816
      %v1030 = vmul.f32 %v986, %v820
      %v1031 = vmul.f32 %v1003, %v816
      %v1032 = vmul.f32 %v987, %v820
      %v1033 = vmul.f32 %v1004, %v816
      %v1034 = vmul.f32 %v988, %v820
      %v1035 = vmul.f32 %v1005, %v816
      %v1036 = vmul.f32 %v989, %v820
      %v1037 = vmul.f32 %v1006, %v816
      %v1038 = vmul.f32 %v990, %v820
      %1040 = vset.pattern.permute.xlu0 0
      %1041 = vperm.xlu0 %1040, %v744
      %v1042 = vpop.permute.xlu0 %1041
      %1045 = vset.pattern.permute.xlu0 0
      %1046 = vperm.xlu0 %1045, %v745
      %v1047 = vpop.permute.xlu0 %1046
      %1050 = vset.pattern.permute.xlu0 0
      %1051 = vperm.xlu0 %1050, %v746
      %v1052 = vpop.permute.xlu0 %1051
      %1055 = vset.pattern.permute.xlu0 0
      %1056 = vperm.xlu0 %1055, %v747
      %v1057 = vpop.permute.xlu0 %1056
      %1060 = vset.pattern.permute.xlu0 0
      %1061 = vperm.xlu0 %1060, %v748
      %v1062 = vpop.permute.xlu0 %1061
      %1065 = vset.pattern.permute.xlu0 0
      %1066 = vperm.xlu0 %1065, %v749
      %v1067 = vpop.permute.xlu0 %1066
      %1070 = vset.pattern.permute.xlu0 0
      %1071 = vperm.xlu0 %1070, %v750
      %v1072 = vpop.permute.xlu0 %1071
      %1075 = vset.pattern.permute.xlu0 0
      %1076 = vperm.xlu0 %1075, %v751
      %v1077 = vpop.permute.xlu0 %1076
      %1080 = vset.pattern.permute.xlu0 0
      %1081 = vperm.xlu0 %1080, %v752
      %v1082 = vpop.permute.xlu0 %1081
      %1085 = vset.pattern.permute.xlu0 0
      %1086 = vperm.xlu0 %1085, %v753
      %v1087 = vpop.permute.xlu0 %1086
      %1090 = vset.pattern.permute.xlu0 0
      %1091 = vperm.xlu0 %1090, %v754
      %v1092 = vpop.permute.xlu0 %1091
      %1095 = vset.pattern.permute.xlu0 0
      %1096 = vperm.xlu0 %1095, %v755
      %v1097 = vpop.permute.xlu0 %1096
      %1100 = vset.pattern.permute.xlu0 0
      %1101 = vperm.xlu0 %1100, %v756
      %v1102 = vpop.permute.xlu0 %1101
      %1105 = vset.pattern.permute.xlu0 0
      %1106 = vperm.xlu0 %1105, %v757
      %v1107 = vpop.permute.xlu0 %1106
      %1110 = vset.pattern.permute.xlu0 0
      %1111 = vperm.xlu0 %1110, %v758
      %v1112 = vpop.permute.xlu0 %1111
      %1115 = vset.pattern.permute.xlu0 0
      %1116 = vperm.xlu0 %1115, %v759
      %v1117 = vpop.permute.xlu0 %1116
      %v1119 = vmul.f32 %v1042, %v1007
      %v1120 = vmul.f32 %v1042, %v1008
      %v1121 = vmul.f32 %v1047, %v1009
      %v1122 = vmul.f32 %v1047, %v1010
      %v1123 = vmul.f32 %v1052, %v1011
      %v1124 = vmul.f32 %v1052, %v1012
      %v1125 = vmul.f32 %v1057, %v1013
      %v1126 = vmul.f32 %v1057, %v1014
      %v1127 = vmul.f32 %v1062, %v1015
      %v1128 = vmul.f32 %v1062, %v1016
      %v1129 = vmul.f32 %v1067, %v1017
      %v1130 = vmul.f32 %v1067, %v1018
      %v1131 = vmul.f32 %v1072, %v1019
      %v1132 = vmul.f32 %v1072, %v1020
      %v1133 = vmul.f32 %v1077, %v1021
      %v1134 = vmul.f32 %v1077, %v1022
      %v1135 = vmul.f32 %v1082, %v1023
      %v1136 = vmul.f32 %v1082, %v1024
      %v1137 = vmul.f32 %v1087, %v1025
      %v1138 = vmul.f32 %v1087, %v1026
      %v1139 = vmul.f32 %v1092, %v1027
      %v1140 = vmul.f32 %v1092, %v1028
      %v1141 = vmul.f32 %v1097, %v1029
      %v1142 = vmul.f32 %v1097, %v1030
      %v1143 = vmul.f32 %v1102, %v1031
      %v1144 = vmul.f32 %v1102, %v1032
      %v1145 = vmul.f32 %v1107, %v1033
      %v1146 = vmul.f32 %v1107, %v1034
      %v1147 = vmul.f32 %v1112, %v1035
      %v1148 = vmul.f32 %v1112, %v1036
      %v1149 = vmul.f32 %v1117, %v1037
      %v1150 = vmul.f32 %v1117, %v1038
      %v1151 = vadd.f32 %v1119, 0.0
      %v1152 = vadd.f32 %v1120, 0.0
      %v1153 = vadd.f32 %v1121, 0.0
      %v1154 = vadd.f32 %v1122, 0.0
      %v1155 = vadd.f32 %v1123, 0.0
      %v1156 = vadd.f32 %v1124, 0.0
      %v1157 = vadd.f32 %v1125, 0.0
      %v1158 = vadd.f32 %v1126, 0.0
      %v1159 = vadd.f32 %v1127, 0.0
      %v1160 = vadd.f32 %v1128, 0.0
      %v1161 = vadd.f32 %v1129, 0.0
      %v1162 = vadd.f32 %v1130, 0.0
      %v1163 = vadd.f32 %v1131, 0.0
      %v1164 = vadd.f32 %v1132, 0.0
      %v1165 = vadd.f32 %v1133, 0.0
      %v1166 = vadd.f32 %v1134, 0.0
      %v1167 = vadd.f32 %v1135, 0.0
      %v1168 = vadd.f32 %v1136, 0.0
      %v1169 = vadd.f32 %v1137, 0.0
      %v1170 = vadd.f32 %v1138, 0.0
      %v1171 = vadd.f32 %v1139, 0.0
      %v1172 = vadd.f32 %v1140, 0.0
      %v1173 = vadd.f32 %v1141, 0.0
      %v1174 = vadd.f32 %v1142, 0.0
      %v1175 = vadd.f32 %v1143, 0.0
      %v1176 = vadd.f32 %v1144, 0.0
      %v1177 = vadd.f32 %v1145, 0.0
      %v1178 = vadd.f32 %v1146, 0.0
      %v1179 = vadd.f32 %v1147, 0.0
      %v1180 = vadd.f32 %v1148, 0.0
      %v1181 = vadd.f32 %v1149, 0.0
      %v1182 = vadd.f32 %v1150, 0.0
      %s1183 = scalar_lea.vmem %s8, 2
      %v1184 = vld [vmem:[%s1183] sm:$0x3]
      %1185 = vrot.lane.b32.xlu0 %v505, 16
      %v1186 = vpop.permute.xlu0 %1185
      %1187 = vrot.lane.b32.xlu0 %v509, 16
      %v1188 = vpop.permute.xlu0 %1187
      %1189 = vrot.lane.b32.xlu0 %v515, 16
      %v1190 = vpop.permute.xlu0 %1189
      %1191 = vrot.lane.b32.xlu0 %v519, 16
      %v1192 = vpop.permute.xlu0 %1191
      %1193 = vrot.lane.b32.xlu0 %v525, 16
      %v1194 = vpop.permute.xlu0 %1193
      %1195 = vrot.lane.b32.xlu0 %v529, 16
      %v1196 = vpop.permute.xlu0 %1195
      %1197 = vrot.lane.b32.xlu0 %v535, 16
      %v1198 = vpop.permute.xlu0 %1197
      %1199 = vrot.lane.b32.xlu0 %v539, 16
      %v1200 = vpop.permute.xlu0 %1199
      %1201 = vrot.lane.b32.xlu0 %v507, 16
      %v1202 = vpop.permute.xlu0 %1201
      %1203 = vrot.lane.b32.xlu0 %v511, 16
      %v1204 = vpop.permute.xlu0 %1203
      %1205 = vrot.lane.b32.xlu0 %v517, 16
      %v1206 = vpop.permute.xlu0 %1205
      %1207 = vrot.lane.b32.xlu0 %v521, 16
      %v1208 = vpop.permute.xlu0 %1207
      %1209 = vrot.lane.b32.xlu0 %v527, 16
      %v1210 = vpop.permute.xlu0 %1209
      %1211 = vrot.lane.b32.xlu0 %v531, 16
      %v1212 = vpop.permute.xlu0 %1211
      %1213 = vrot.lane.b32.xlu0 %v537, 16
      %v1214 = vpop.permute.xlu0 %1213
      %1215 = vrot.lane.b32.xlu0 %v541, 16
      %v1216 = vpop.permute.xlu0 %1215
      %vm1217 = vcmp.lt.s32.totalorder %v794, 16
      %v1218 = vsel %vm1217, %v1186, %v1202
      %v1219 = vsel %vm1217, %v1188, %v1204
      %v1220 = vsel %vm1217, %v1190, %v1206
      %v1221 = vsel %vm1217, %v1192, %v1208
      %v1222 = vsel %vm1217, %v1194, %v1210
      %v1223 = vsel %vm1217, %v1196, %v1212
      %v1224 = vsel %vm1217, %v1198, %v1214
      %v1225 = vsel %vm1217, %v1200, %v1216
      %v1226 = vsel %vm1217, %v1202, %v1186
      %v1227 = vsel %vm1217, %v1204, %v1188
      %v1228 = vsel %vm1217, %v1206, %v1190
      %v1229 = vsel %vm1217, %v1208, %v1192
      %v1230 = vsel %vm1217, %v1210, %v1194
      %v1231 = vsel %vm1217, %v1212, %v1196
      %v1232 = vsel %vm1217, %v1214, %v1198
      %v1233 = vsel %vm1217, %v1216, %v1200
      %v1235 = vlaneseq
      %v1236 = vshrl.u32 %v1235, 7
      %v1237 = vsub.s32 0, %v1236
      %v1238 = vrot.slane %v1184, %v1237
      %v1239 = vlaneseq
      %v1240 = vshrl.u32 %v1239, 7
      %v1241 = vsub.s32 1, %v1240
      %v1242 = vrot.slane %v1184, %v1241
      %v1245 = vmul.f32 %v1226, %v1238
      %v1246 = vmul.f32 %v1218, %v1242
      %v1247 = vmul.f32 %v1227, %v1238
      %v1248 = vmul.f32 %v1219, %v1242
      %v1249 = vmul.f32 %v1228, %v1238
      %v1250 = vmul.f32 %v1220, %v1242
      %v1251 = vmul.f32 %v1229, %v1238
      %v1252 = vmul.f32 %v1221, %v1242
      %v1253 = vmul.f32 %v1230, %v1238
      %v1254 = vmul.f32 %v1222, %v1242
      %v1255 = vmul.f32 %v1231, %v1238
      %v1256 = vmul.f32 %v1223, %v1242
      %v1257 = vmul.f32 %v1232, %v1238
      %v1258 = vmul.f32 %v1224, %v1242
      %v1259 = vmul.f32 %v1233, %v1238
      %v1260 = vmul.f32 %v1225, %v1242
      %1261 = vset.pattern.permute.xlu0 1
      %1262 = vperm.xlu0 %1261, %v736
      %v1263 = vpop.permute.xlu0 %1262
      %1265 = vset.pattern.permute.xlu0 1
      %1266 = vperm.xlu0 %1265, %v737
      %v1267 = vpop.permute.xlu0 %1266
      %1269 = vset.pattern.permute.xlu0 1
      %1270 = vperm.xlu0 %1269, %v738
      %v1271 = vpop.permute.xlu0 %1270
      %1273 = vset.pattern.permute.xlu0 1
      %1274 = vperm.xlu0 %1273, %v739
      %v1275 = vpop.permute.xlu0 %1274
      %1277 = vset.pattern.permute.xlu0 1
      %1278 = vperm.xlu0 %1277, %v740
      %v1279 = vpop.permute.xlu0 %1278
      %1281 = vset.pattern.permute.xlu0 1
      %1282 = vperm.xlu0 %1281, %v741
      %v1283 = vpop.permute.xlu0 %1282
      %1285 = vset.pattern.permute.xlu0 1
      %1286 = vperm.xlu0 %1285, %v742
      %v1287 = vpop.permute.xlu0 %1286
      %1289 = vset.pattern.permute.xlu0 1
      %1290 = vperm.xlu0 %1289, %v743
      %v1291 = vpop.permute.xlu0 %1290
      %v1293 = vmul.f32 %v1263, %v1245
      %v1294 = vmul.f32 %v1263, %v1246
      %v1295 = vmul.f32 %v1267, %v1247
      %v1296 = vmul.f32 %v1267, %v1248
      %v1297 = vmul.f32 %v1271, %v1249
      %v1298 = vmul.f32 %v1271, %v1250
      %v1299 = vmul.f32 %v1275, %v1251
      %v1300 = vmul.f32 %v1275, %v1252
      %v1301 = vmul.f32 %v1279, %v1253
      %v1302 = vmul.f32 %v1279, %v1254
      %v1303 = vmul.f32 %v1283, %v1255
      %v1304 = vmul.f32 %v1283, %v1256
      %v1305 = vmul.f32 %v1287, %v1257
      %v1306 = vmul.f32 %v1287, %v1258
      %v1307 = vmul.f32 %v1291, %v1259
      %v1308 = vmul.f32 %v1291, %v1260
      %v1309 = vadd.f32 %v895, %v1293
      %v1310 = vadd.f32 %v896, %v1294
      %v1311 = vadd.f32 %v897, %v1295
      %v1312 = vadd.f32 %v898, %v1296
      %v1313 = vadd.f32 %v899, %v1297
      %v1314 = vadd.f32 %v900, %v1298
      %v1315 = vadd.f32 %v901, %v1299
      %v1316 = vadd.f32 %v902, %v1300
      %v1317 = vadd.f32 %v903, %v1301
      %v1318 = vadd.f32 %v904, %v1302
      %v1319 = vadd.f32 %v905, %v1303
      %v1320 = vadd.f32 %v906, %v1304
      %v1321 = vadd.f32 %v907, %v1305
      %v1322 = vadd.f32 %v908, %v1306
      %v1323 = vadd.f32 %v909, %v1307
      %v1324 = vadd.f32 %v910, %v1308
      %1325 = vrot.lane.b32.xlu0 %v658, 16
      %v1326 = vpop.permute.xlu0 %1325
      %1327 = vrot.lane.b32.xlu0 %v662, 16
      %v1328 = vpop.permute.xlu0 %1327
      %1329 = vrot.lane.b32.xlu0 %v668, 16
      %v1330 = vpop.permute.xlu0 %1329
      %1331 = vrot.lane.b32.xlu0 %v672, 16
      %v1332 = vpop.permute.xlu0 %1331
      %1333 = vrot.lane.b32.xlu0 %v678, 16
      %v1334 = vpop.permute.xlu0 %1333
      %1335 = vrot.lane.b32.xlu0 %v682, 16
      %v1336 = vpop.permute.xlu0 %1335
      %1337 = vrot.lane.b32.xlu0 %v688, 16
      %v1338 = vpop.permute.xlu0 %1337
      %1339 = vrot.lane.b32.xlu0 %v692, 16
      %v1340 = vpop.permute.xlu0 %1339
      %1341 = vrot.lane.b32.xlu0 %v698, 16
      %v1342 = vpop.permute.xlu0 %1341
      %1343 = vrot.lane.b32.xlu0 %v702, 16
      %v1344 = vpop.permute.xlu0 %1343
      %1345 = vrot.lane.b32.xlu0 %v708, 16
      %v1346 = vpop.permute.xlu0 %1345
      %1347 = vrot.lane.b32.xlu0 %v712, 16
      %v1348 = vpop.permute.xlu0 %1347
      %1349 = vrot.lane.b32.xlu0 %v718, 16
      %v1350 = vpop.permute.xlu0 %1349
      %1351 = vrot.lane.b32.xlu0 %v722, 16
      %v1352 = vpop.permute.xlu0 %1351
      %1353 = vrot.lane.b32.xlu0 %v728, 16
      %v1354 = vpop.permute.xlu0 %1353
      %1355 = vrot.lane.b32.xlu0 %v732, 16
      %v1356 = vpop.permute.xlu0 %1355
      %1357 = vrot.lane.b32.xlu0 %v660, 16
      %v1358 = vpop.permute.xlu0 %1357
      %1359 = vrot.lane.b32.xlu0 %v664, 16
      %v1360 = vpop.permute.xlu0 %1359
      %1361 = vrot.lane.b32.xlu0 %v670, 16
      %v1362 = vpop.permute.xlu0 %1361
      %1363 = vrot.lane.b32.xlu0 %v674, 16
      %v1364 = vpop.permute.xlu0 %1363
      %1365 = vrot.lane.b32.xlu0 %v680, 16
      %v1366 = vpop.permute.xlu0 %1365
      %1367 = vrot.lane.b32.xlu0 %v684, 16
      %v1368 = vpop.permute.xlu0 %1367
      %1369 = vrot.lane.b32.xlu0 %v690, 16
      %v1370 = vpop.permute.xlu0 %1369
      %1371 = vrot.lane.b32.xlu0 %v694, 16
      %v1372 = vpop.permute.xlu0 %1371
      %1373 = vrot.lane.b32.xlu0 %v700, 16
      %v1374 = vpop.permute.xlu0 %1373
      %1375 = vrot.lane.b32.xlu0 %v704, 16
      %v1376 = vpop.permute.xlu0 %1375
      %1377 = vrot.lane.b32.xlu0 %v710, 16
      %v1378 = vpop.permute.xlu0 %1377
      %1379 = vrot.lane.b32.xlu0 %v714, 16
      %v1380 = vpop.permute.xlu0 %1379
      %1381 = vrot.lane.b32.xlu0 %v720, 16
      %v1382 = vpop.permute.xlu0 %1381
      %1383 = vrot.lane.b32.xlu0 %v724, 16
      %v1384 = vpop.permute.xlu0 %1383
      %1385 = vrot.lane.b32.xlu0 %v730, 16
      %v1386 = vpop.permute.xlu0 %1385
      %1387 = vrot.lane.b32.xlu0 %v734, 16
      %v1388 = vpop.permute.xlu0 %1387
      %v1389 = vsel %vm1217, %v1326, %v1358
      %v1390 = vsel %vm1217, %v1328, %v1360
      %v1391 = vsel %vm1217, %v1330, %v1362
      %v1392 = vsel %vm1217, %v1332, %v1364
      %v1393 = vsel %vm1217, %v1334, %v1366
      %v1394 = vsel %vm1217, %v1336, %v1368
      %v1395 = vsel %vm1217, %v1338, %v1370
      %v1396 = vsel %vm1217, %v1340, %v1372
      %v1397 = vsel %vm1217, %v1342, %v1374
      %v1398 = vsel %vm1217, %v1344, %v1376
      %v1399 = vsel %vm1217, %v1346, %v1378
      %v1400 = vsel %vm1217, %v1348, %v1380
      %v1401 = vsel %vm1217, %v1350, %v1382
      %v1402 = vsel %vm1217, %v1352, %v1384
      %v1403 = vsel %vm1217, %v1354, %v1386
      %v1404 = vsel %vm1217, %v1356, %v1388
      %v1405 = vsel %vm1217, %v1358, %v1326
      %v1406 = vsel %vm1217, %v1360, %v1328
      %v1407 = vsel %vm1217, %v1362, %v1330
      %v1408 = vsel %vm1217, %v1364, %v1332
      %v1409 = vsel %vm1217, %v1366, %v1334
      %v1410 = vsel %vm1217, %v1368, %v1336
      %v1411 = vsel %vm1217, %v1370, %v1338
      %v1412 = vsel %vm1217, %v1372, %v1340
      %v1413 = vsel %vm1217, %v1374, %v1342
      %v1414 = vsel %vm1217, %v1376, %v1344
      %v1415 = vsel %vm1217, %v1378, %v1346
      %v1416 = vsel %vm1217, %v1380, %v1348
      %v1417 = vsel %vm1217, %v1382, %v1350
      %v1418 = vsel %vm1217, %v1384, %v1352
      %v1419 = vsel %vm1217, %v1386, %v1354
      %v1420 = vsel %vm1217, %v1388, %v1356
      %v1421 = vmul.f32 %v1405, %v1238
      %v1422 = vmul.f32 %v1389, %v1242
      %v1423 = vmul.f32 %v1406, %v1238
      %v1424 = vmul.f32 %v1390, %v1242
      %v1425 = vmul.f32 %v1407, %v1238
      %v1426 = vmul.f32 %v1391, %v1242
      %v1427 = vmul.f32 %v1408, %v1238
      %v1428 = vmul.f32 %v1392, %v1242
      %v1429 = vmul.f32 %v1409, %v1238
      %v1430 = vmul.f32 %v1393, %v1242
      %v1431 = vmul.f32 %v1410, %v1238
      %v1432 = vmul.f32 %v1394, %v1242
      %v1433 = vmul.f32 %v1411, %v1238
      %v1434 = vmul.f32 %v1395, %v1242
      %v1435 = vmul.f32 %v1412, %v1238
      %v1436 = vmul.f32 %v1396, %v1242
      %v1437 = vmul.f32 %v1413, %v1238
      %v1438 = vmul.f32 %v1397, %v1242
      %v1439 = vmul.f32 %v1414, %v1238
      %v1440 = vmul.f32 %v1398, %v1242
      %v1441 = vmul.f32 %v1415, %v1238
      %v1442 = vmul.f32 %v1399, %v1242
      %v1443 = vmul.f32 %v1416, %v1238
      %v1444 = vmul.f32 %v1400, %v1242
      %v1445 = vmul.f32 %v1417, %v1238
      %v1446 = vmul.f32 %v1401, %v1242
      %v1447 = vmul.f32 %v1418, %v1238
      %v1448 = vmul.f32 %v1402, %v1242
      %v1449 = vmul.f32 %v1419, %v1238
      %v1450 = vmul.f32 %v1403, %v1242
      %v1451 = vmul.f32 %v1420, %v1238
      %v1452 = vmul.f32 %v1404, %v1242
      %1453 = vset.pattern.permute.xlu0 1
      %1454 = vperm.xlu0 %1453, %v744
      %v1455 = vpop.permute.xlu0 %1454
      %1457 = vset.pattern.permute.xlu0 1
      %1458 = vperm.xlu0 %1457, %v745
      %v1459 = vpop.permute.xlu0 %1458
      %1461 = vset.pattern.permute.xlu0 1
      %1462 = vperm.xlu0 %1461, %v746
      %v1463 = vpop.permute.xlu0 %1462
      %1465 = vset.pattern.permute.xlu0 1
      %1466 = vperm.xlu0 %1465, %v747
      %v1467 = vpop.permute.xlu0 %1466
      %1469 = vset.pattern.permute.xlu0 1
      %1470 = vperm.xlu0 %1469, %v748
      %v1471 = vpop.permute.xlu0 %1470
      %1473 = vset.pattern.permute.xlu0 1
      %1474 = vperm.xlu0 %1473, %v749
      %v1475 = vpop.permute.xlu0 %1474
      %1477 = vset.pattern.permute.xlu0 1
      %1478 = vperm.xlu0 %1477, %v750
      %v1479 = vpop.permute.xlu0 %1478
      %1481 = vset.pattern.permute.xlu0 1
      %1482 = vperm.xlu0 %1481, %v751
      %v1483 = vpop.permute.xlu0 %1482
      %1485 = vset.pattern.permute.xlu0 1
      %1486 = vperm.xlu0 %1485, %v752
      %v1487 = vpop.permute.xlu0 %1486
      %1489 = vset.pattern.permute.xlu0 1
      %1490 = vperm.xlu0 %1489, %v753
      %v1491 = vpop.permute.xlu0 %1490
      %1493 = vset.pattern.permute.xlu0 1
      %1494 = vperm.xlu0 %1493, %v754
      %v1495 = vpop.permute.xlu0 %1494
      %1497 = vset.pattern.permute.xlu0 1
      %1498 = vperm.xlu0 %1497, %v755
      %v1499 = vpop.permute.xlu0 %1498
      %1501 = vset.pattern.permute.xlu0 1
      %1502 = vperm.xlu0 %1501, %v756
      %v1503 = vpop.permute.xlu0 %1502
      %1505 = vset.pattern.permute.xlu0 1
      %1506 = vperm.xlu0 %1505, %v757
      %v1507 = vpop.permute.xlu0 %1506
      %1509 = vset.pattern.permute.xlu0 1
      %1510 = vperm.xlu0 %1509, %v758
      %v1511 = vpop.permute.xlu0 %1510
      %1513 = vset.pattern.permute.xlu0 1
      %1514 = vperm.xlu0 %1513, %v759
      %v1515 = vpop.permute.xlu0 %1514
      %v1517 = vmul.f32 %v1455, %v1421
      %v1518 = vmul.f32 %v1455, %v1422
      %v1519 = vmul.f32 %v1459, %v1423
      %v1520 = vmul.f32 %v1459, %v1424
      %v1521 = vmul.f32 %v1463, %v1425
      %v1522 = vmul.f32 %v1463, %v1426
      %v1523 = vmul.f32 %v1467, %v1427
      %v1524 = vmul.f32 %v1467, %v1428
      %v1525 = vmul.f32 %v1471, %v1429
      %v1526 = vmul.f32 %v1471, %v1430
      %v1527 = vmul.f32 %v1475, %v1431
      %v1528 = vmul.f32 %v1475, %v1432
      %v1529 = vmul.f32 %v1479, %v1433
      %v1530 = vmul.f32 %v1479, %v1434
      %v1531 = vmul.f32 %v1483, %v1435
      %v1532 = vmul.f32 %v1483, %v1436
      %v1533 = vmul.f32 %v1487, %v1437
      %v1534 = vmul.f32 %v1487, %v1438
      %v1535 = vmul.f32 %v1491, %v1439
      %v1536 = vmul.f32 %v1491, %v1440
      %v1537 = vmul.f32 %v1495, %v1441
      %v1538 = vmul.f32 %v1495, %v1442
      %v1539 = vmul.f32 %v1499, %v1443
      %v1540 = vmul.f32 %v1499, %v1444
      %v1541 = vmul.f32 %v1503, %v1445
      %v1542 = vmul.f32 %v1503, %v1446
      %v1543 = vmul.f32 %v1507, %v1447
      %v1544 = vmul.f32 %v1507, %v1448
      %v1545 = vmul.f32 %v1511, %v1449
      %v1546 = vmul.f32 %v1511, %v1450
      %v1547 = vmul.f32 %v1515, %v1451
      %v1548 = vmul.f32 %v1515, %v1452
      %v1549 = vadd.f32 %v1151, %v1517
      %v1550 = vadd.f32 %v1152, %v1518
      %v1551 = vadd.f32 %v1153, %v1519
      %v1552 = vadd.f32 %v1154, %v1520
      %v1553 = vadd.f32 %v1155, %v1521
      %v1554 = vadd.f32 %v1156, %v1522
      %v1555 = vadd.f32 %v1157, %v1523
      %v1556 = vadd.f32 %v1158, %v1524
      %v1557 = vadd.f32 %v1159, %v1525
      %v1558 = vadd.f32 %v1160, %v1526
      %v1559 = vadd.f32 %v1161, %v1527
      %v1560 = vadd.f32 %v1162, %v1528
      %v1561 = vadd.f32 %v1163, %v1529
      %v1562 = vadd.f32 %v1164, %v1530
      %v1563 = vadd.f32 %v1165, %v1531
      %v1564 = vadd.f32 %v1166, %v1532
      %v1565 = vadd.f32 %v1167, %v1533
      %v1566 = vadd.f32 %v1168, %v1534
      %v1567 = vadd.f32 %v1169, %v1535
      %v1568 = vadd.f32 %v1170, %v1536
      %v1569 = vadd.f32 %v1171, %v1537
      %v1570 = vadd.f32 %v1172, %v1538
      %v1571 = vadd.f32 %v1173, %v1539
      %v1572 = vadd.f32 %v1174, %v1540
      %v1573 = vadd.f32 %v1175, %v1541
      %v1574 = vadd.f32 %v1176, %v1542
      %v1575 = vadd.f32 %v1177, %v1543
      %v1576 = vadd.f32 %v1178, %v1544
      %v1577 = vadd.f32 %v1179, %v1545
      %v1578 = vadd.f32 %v1180, %v1546
      %v1579 = vadd.f32 %v1181, %v1547
      %v1580 = vadd.f32 %v1182, %v1548
      %s1581 = scalar_lea.vmem %s8, 4
      %v1582 = vld [vmem:[%s1581] sm:$0x3]
      %1583 = vrot.lane.b32.xlu0 %v505, 15
      %v1584 = vpop.permute.xlu0 %1583
      %1585 = vrot.lane.b32.xlu0 %v509, 15
      %v1586 = vpop.permute.xlu0 %1585
      %1587 = vrot.lane.b32.xlu0 %v515, 15
      %v1588 = vpop.permute.xlu0 %1587
      %1589 = vrot.lane.b32.xlu0 %v519, 15
      %v1590 = vpop.permute.xlu0 %1589
      %1591 = vrot.lane.b32.xlu0 %v525, 15
      %v1592 = vpop.permute.xlu0 %1591
      %1593 = vrot.lane.b32.xlu0 %v529, 15
      %v1594 = vpop.permute.xlu0 %1593
      %1595 = vrot.lane.b32.xlu0 %v535, 15
      %v1596 = vpop.permute.xlu0 %1595
      %1597 = vrot.lane.b32.xlu0 %v539, 15
      %v1598 = vpop.permute.xlu0 %1597
      %1599 = vrot.lane.b32.xlu0 %v507, 15
      %v1600 = vpop.permute.xlu0 %1599
      %1601 = vrot.lane.b32.xlu0 %v511, 15
      %v1602 = vpop.permute.xlu0 %1601
      %1603 = vrot.lane.b32.xlu0 %v517, 15
      %v1604 = vpop.permute.xlu0 %1603
      %1605 = vrot.lane.b32.xlu0 %v521, 15
      %v1606 = vpop.permute.xlu0 %1605
      %1607 = vrot.lane.b32.xlu0 %v527, 15
      %v1608 = vpop.permute.xlu0 %1607
      %1609 = vrot.lane.b32.xlu0 %v531, 15
      %v1610 = vpop.permute.xlu0 %1609
      %1611 = vrot.lane.b32.xlu0 %v537, 15
      %v1612 = vpop.permute.xlu0 %1611
      %1613 = vrot.lane.b32.xlu0 %v541, 15
      %v1614 = vpop.permute.xlu0 %1613
      %vm1615 = vcmp.lt.s32.totalorder %v794, 15
      %v1616 = vsel %vm1615, %v1584, %v1600
      %v1617 = vsel %vm1615, %v1586, %v1602
      %v1618 = vsel %vm1615, %v1588, %v1604
      %v1619 = vsel %vm1615, %v1590, %v1606
      %v1620 = vsel %vm1615, %v1592, %v1608
      %v1621 = vsel %vm1615, %v1594, %v1610
      %v1622 = vsel %vm1615, %v1596, %v1612
      %v1623 = vsel %vm1615, %v1598, %v1614
      %v1624 = vsel %vm1615, %v1600, %v1584
      %v1625 = vsel %vm1615, %v1602, %v1586
      %v1626 = vsel %vm1615, %v1604, %v1588
      %v1627 = vsel %vm1615, %v1606, %v1590
      %v1628 = vsel %vm1615, %v1608, %v1592
      %v1629 = vsel %vm1615, %v1610, %v1594
      %v1630 = vsel %vm1615, %v1612, %v1596
      %v1631 = vsel %vm1615, %v1614, %v1598
      %v1633 = vlaneseq
      %v1634 = vshrl.u32 %v1633, 7
      %v1635 = vsub.s32 0, %v1634
      %v1636 = vrot.slane %v1582, %v1635
      %v1637 = vlaneseq
      %v1638 = vshrl.u32 %v1637, 7
      %v1639 = vsub.s32 1, %v1638
      %v1640 = vrot.slane %v1582, %v1639
      %v1643 = vmul.f32 %v1624, %v1636
      %v1644 = vmul.f32 %v1616, %v1640
      %v1645 = vmul.f32 %v1625, %v1636
      %v1646 = vmul.f32 %v1617, %v1640
      %v1647 = vmul.f32 %v1626, %v1636
      %v1648 = vmul.f32 %v1618, %v1640
      %v1649 = vmul.f32 %v1627, %v1636
      %v1650 = vmul.f32 %v1619, %v1640
      %v1651 = vmul.f32 %v1628, %v1636
      %v1652 = vmul.f32 %v1620, %v1640
      %v1653 = vmul.f32 %v1629, %v1636
      %v1654 = vmul.f32 %v1621, %v1640
      %v1655 = vmul.f32 %v1630, %v1636
      %v1656 = vmul.f32 %v1622, %v1640
      %v1657 = vmul.f32 %v1631, %v1636
      %v1658 = vmul.f32 %v1623, %v1640
      %1659 = vset.pattern.permute.xlu0 2
      %1660 = vperm.xlu0 %1659, %v736
      %v1661 = vpop.permute.xlu0 %1660
      %1663 = vset.pattern.permute.xlu0 2
      %1664 = vperm.xlu0 %1663, %v737
      %v1665 = vpop.permute.xlu0 %1664
      %1667 = vset.pattern.permute.xlu0 2
      %1668 = vperm.xlu0 %1667, %v738
      %v1669 = vpop.permute.xlu0 %1668
      %1671 = vset.pattern.permute.xlu0 2
      %1672 = vperm.xlu0 %1671, %v739
      %v1673 = vpop.permute.xlu0 %1672
      %1675 = vset.pattern.permute.xlu0 2
      %1676 = vperm.xlu0 %1675, %v740
      %v1677 = vpop.permute.xlu0 %1676
      %1679 = vset.pattern.permute.xlu0 2
      %1680 = vperm.xlu0 %1679, %v741
      %v1681 = vpop.permute.xlu0 %1680
      %1683 = vset.pattern.permute.xlu0 2
      %1684 = vperm.xlu0 %1683, %v742
      %v1685 = vpop.permute.xlu0 %1684
      %1687 = vset.pattern.permute.xlu0 2
      %1688 = vperm.xlu0 %1687, %v743
      %v1689 = vpop.permute.xlu0 %1688
      %v1691 = vmul.f32 %v1661, %v1643
      %v1692 = vmul.f32 %v1661, %v1644
      %v1693 = vmul.f32 %v1665, %v1645
      %v1694 = vmul.f32 %v1665, %v1646
      %v1695 = vmul.f32 %v1669, %v1647
      %v1696 = vmul.f32 %v1669, %v1648
      %v1697 = vmul.f32 %v1673, %v1649
      %v1698 = vmul.f32 %v1673, %v1650
      %v1699 = vmul.f32 %v1677, %v1651
      %v1700 = vmul.f32 %v1677, %v1652
      %v1701 = vmul.f32 %v1681, %v1653
      %v1702 = vmul.f32 %v1681, %v1654
      %v1703 = vmul.f32 %v1685, %v1655
      %v1704 = vmul.f32 %v1685, %v1656
      %v1705 = vmul.f32 %v1689, %v1657
      %v1706 = vmul.f32 %v1689, %v1658
      %v1707 = vadd.f32 %v1309, %v1691
      %v1708 = vadd.f32 %v1310, %v1692
      %v1709 = vadd.f32 %v1311, %v1693
      %v1710 = vadd.f32 %v1312, %v1694
      %v1711 = vadd.f32 %v1313, %v1695
      %v1712 = vadd.f32 %v1314, %v1696
      %v1713 = vadd.f32 %v1315, %v1697
      %v1714 = vadd.f32 %v1316, %v1698
      %v1715 = vadd.f32 %v1317, %v1699
      %v1716 = vadd.f32 %v1318, %v1700
      %v1717 = vadd.f32 %v1319, %v1701
      %v1718 = vadd.f32 %v1320, %v1702
      %v1719 = vadd.f32 %v1321, %v1703
      %v1720 = vadd.f32 %v1322, %v1704
      %v1721 = vadd.f32 %v1323, %v1705
      %v1722 = vadd.f32 %v1324, %v1706
      %1723 = vrot.lane.b32.xlu0 %v658, 15
      %v1724 = vpop.permute.xlu0 %1723
      %1725 = vrot.lane.b32.xlu0 %v662, 15
      %v1726 = vpop.permute.xlu0 %1725
      %1727 = vrot.lane.b32.xlu0 %v668, 15
      %v1728 = vpop.permute.xlu0 %1727
      %1729 = vrot.lane.b32.xlu0 %v672, 15
      %v1730 = vpop.permute.xlu0 %1729
      %1731 = vrot.lane.b32.xlu0 %v678, 15
      %v1732 = vpop.permute.xlu0 %1731
      %1733 = vrot.lane.b32.xlu0 %v682, 15
      %v1734 = vpop.permute.xlu0 %1733
      %1735 = vrot.lane.b32.xlu0 %v688, 15
      %v1736 = vpop.permute.xlu0 %1735
      %1737 = vrot.lane.b32.xlu0 %v692, 15
      %v1738 = vpop.permute.xlu0 %1737
      %1739 = vrot.lane.b32.xlu0 %v698, 15
      %v1740 = vpop.permute.xlu0 %1739
      %1741 = vrot.lane.b32.xlu0 %v702, 15
      %v1742 = vpop.permute.xlu0 %1741
      %1743 = vrot.lane.b32.xlu0 %v708, 15
      %v1744 = vpop.permute.xlu0 %1743
      %1745 = vrot.lane.b32.xlu0 %v712, 15
      %v1746 = vpop.permute.xlu0 %1745
      %1747 = vrot.lane.b32.xlu0 %v718, 15
      %v1748 = vpop.permute.xlu0 %1747
      %1749 = vrot.lane.b32.xlu0 %v722, 15
      %v1750 = vpop.permute.xlu0 %1749
      %1751 = vrot.lane.b32.xlu0 %v728, 15
      %v1752 = vpop.permute.xlu0 %1751
      %1753 = vrot.lane.b32.xlu0 %v732, 15
      %v1754 = vpop.permute.xlu0 %1753
      %1755 = vrot.lane.b32.xlu0 %v660, 15
      %v1756 = vpop.permute.xlu0 %1755
      %1757 = vrot.lane.b32.xlu0 %v664, 15
      %v1758 = vpop.permute.xlu0 %1757
      %1759 = vrot.lane.b32.xlu0 %v670, 15
      %v1760 = vpop.permute.xlu0 %1759
      %1761 = vrot.lane.b32.xlu0 %v674, 15
      %v1762 = vpop.permute.xlu0 %1761
      %1763 = vrot.lane.b32.xlu0 %v680, 15
      %v1764 = vpop.permute.xlu0 %1763
      %1765 = vrot.lane.b32.xlu0 %v684, 15
      %v1766 = vpop.permute.xlu0 %1765
      %1767 = vrot.lane.b32.xlu0 %v690, 15
      %v1768 = vpop.permute.xlu0 %1767
      %1769 = vrot.lane.b32.xlu0 %v694, 15
      %v1770 = vpop.permute.xlu0 %1769
      %1771 = vrot.lane.b32.xlu0 %v700, 15
      %v1772 = vpop.permute.xlu0 %1771
      %1773 = vrot.lane.b32.xlu0 %v704, 15
      %v1774 = vpop.permute.xlu0 %1773
      %1775 = vrot.lane.b32.xlu0 %v710, 15
      %v1776 = vpop.permute.xlu0 %1775
      %1777 = vrot.lane.b32.xlu0 %v714, 15
      %v1778 = vpop.permute.xlu0 %1777
      %1779 = vrot.lane.b32.xlu0 %v720, 15
      %v1780 = vpop.permute.xlu0 %1779
      %1781 = vrot.lane.b32.xlu0 %v724, 15
      %v1782 = vpop.permute.xlu0 %1781
      %1783 = vrot.lane.b32.xlu0 %v730, 15
      %v1784 = vpop.permute.xlu0 %1783
      %1785 = vrot.lane.b32.xlu0 %v734, 15
      %v1786 = vpop.permute.xlu0 %1785
      %v1787 = vsel %vm1615, %v1724, %v1756
      %v1788 = vsel %vm1615, %v1726, %v1758
      %v1789 = vsel %vm1615, %v1728, %v1760
      %v1790 = vsel %vm1615, %v1730, %v1762
      %v1791 = vsel %vm1615, %v1732, %v1764
      %v1792 = vsel %vm1615, %v1734, %v1766
      %v1793 = vsel %vm1615, %v1736, %v1768
      %v1794 = vsel %vm1615, %v1738, %v1770
      %v1795 = vsel %vm1615, %v1740, %v1772
      %v1796 = vsel %vm1615, %v1742, %v1774
      %v1797 = vsel %vm1615, %v1744, %v1776
      %v1798 = vsel %vm1615, %v1746, %v1778
      %v1799 = vsel %vm1615, %v1748, %v1780
      %v1800 = vsel %vm1615, %v1750, %v1782
      %v1801 = vsel %vm1615, %v1752, %v1784
      %v1802 = vsel %vm1615, %v1754, %v1786
      %v1803 = vsel %vm1615, %v1756, %v1724
      %v1804 = vsel %vm1615, %v1758, %v1726
      %v1805 = vsel %vm1615, %v1760, %v1728
      %v1806 = vsel %vm1615, %v1762, %v1730
      %v1807 = vsel %vm1615, %v1764, %v1732
      %v1808 = vsel %vm1615, %v1766, %v1734
      %v1809 = vsel %vm1615, %v1768, %v1736
      %v1810 = vsel %vm1615, %v1770, %v1738
      %v1811 = vsel %vm1615, %v1772, %v1740
      %v1812 = vsel %vm1615, %v1774, %v1742
      %v1813 = vsel %vm1615, %v1776, %v1744
      %v1814 = vsel %vm1615, %v1778, %v1746
      %v1815 = vsel %vm1615, %v1780, %v1748
      %v1816 = vsel %vm1615, %v1782, %v1750
      %v1817 = vsel %vm1615, %v1784, %v1752
      %v1818 = vsel %vm1615, %v1786, %v1754
      %v1819 = vmul.f32 %v1803, %v1636
      %v1820 = vmul.f32 %v1787, %v1640
      %v1821 = vmul.f32 %v1804, %v1636
      %v1822 = vmul.f32 %v1788, %v1640
      %v1823 = vmul.f32 %v1805, %v1636
      %v1824 = vmul.f32 %v1789, %v1640
      %v1825 = vmul.f32 %v1806, %v1636
      %v1826 = vmul.f32 %v1790, %v1640
      %v1827 = vmul.f32 %v1807, %v1636
      %v1828 = vmul.f32 %v1791, %v1640
      %v1829 = vmul.f32 %v1808, %v1636
      %v1830 = vmul.f32 %v1792, %v1640
      %v1831 = vmul.f32 %v1809, %v1636
      %v1832 = vmul.f32 %v1793, %v1640
      %v1833 = vmul.f32 %v1810, %v1636
      %v1834 = vmul.f32 %v1794, %v1640
      %v1835 = vmul.f32 %v1811, %v1636
      %v1836 = vmul.f32 %v1795, %v1640
      %v1837 = vmul.f32 %v1812, %v1636
      %v1838 = vmul.f32 %v1796, %v1640
      %v1839 = vmul.f32 %v1813, %v1636
      %v1840 = vmul.f32 %v1797, %v1640
      %v1841 = vmul.f32 %v1814, %v1636
      %v1842 = vmul.f32 %v1798, %v1640
      %v1843 = vmul.f32 %v1815, %v1636
      %v1844 = vmul.f32 %v1799, %v1640
      %v1845 = vmul.f32 %v1816, %v1636
      %v1846 = vmul.f32 %v1800, %v1640
      %v1847 = vmul.f32 %v1817, %v1636
      %v1848 = vmul.f32 %v1801, %v1640
      %v1849 = vmul.f32 %v1818, %v1636
      %v1850 = vmul.f32 %v1802, %v1640
      %1851 = vset.pattern.permute.xlu0 2
      %1852 = vperm.xlu0 %1851, %v744
      %v1853 = vpop.permute.xlu0 %1852
      %1855 = vset.pattern.permute.xlu0 2
      %1856 = vperm.xlu0 %1855, %v745
      %v1857 = vpop.permute.xlu0 %1856
      %1859 = vset.pattern.permute.xlu0 2
      %1860 = vperm.xlu0 %1859, %v746
      %v1861 = vpop.permute.xlu0 %1860
      %1863 = vset.pattern.permute.xlu0 2
      %1864 = vperm.xlu0 %1863, %v747
      %v1865 = vpop.permute.xlu0 %1864
      %1867 = vset.pattern.permute.xlu0 2
      %1868 = vperm.xlu0 %1867, %v748
      %v1869 = vpop.permute.xlu0 %1868
      %1871 = vset.pattern.permute.xlu0 2
      %1872 = vperm.xlu0 %1871, %v749
      %v1873 = vpop.permute.xlu0 %1872
      %1875 = vset.pattern.permute.xlu0 2
      %1876 = vperm.xlu0 %1875, %v750
      %v1877 = vpop.permute.xlu0 %1876
      %1879 = vset.pattern.permute.xlu0 2
      %1880 = vperm.xlu0 %1879, %v751
      %v1881 = vpop.permute.xlu0 %1880
      %1883 = vset.pattern.permute.xlu0 2
      %1884 = vperm.xlu0 %1883, %v752
      %v1885 = vpop.permute.xlu0 %1884
      %1887 = vset.pattern.permute.xlu0 2
      %1888 = vperm.xlu0 %1887, %v753
      %v1889 = vpop.permute.xlu0 %1888
      %1891 = vset.pattern.permute.xlu0 2
      %1892 = vperm.xlu0 %1891, %v754
      %v1893 = vpop.permute.xlu0 %1892
      %1895 = vset.pattern.permute.xlu0 2
      %1896 = vperm.xlu0 %1895, %v755
      %v1897 = vpop.permute.xlu0 %1896
      %1899 = vset.pattern.permute.xlu0 2
      %1900 = vperm.xlu0 %1899, %v756
      %v1901 = vpop.permute.xlu0 %1900
      %1903 = vset.pattern.permute.xlu0 2
      %1904 = vperm.xlu0 %1903, %v757
      %v1905 = vpop.permute.xlu0 %1904
      %1907 = vset.pattern.permute.xlu0 2
      %1908 = vperm.xlu0 %1907, %v758
      %v1909 = vpop.permute.xlu0 %1908
      %1911 = vset.pattern.permute.xlu0 2
      %1912 = vperm.xlu0 %1911, %v759
      %v1913 = vpop.permute.xlu0 %1912
      %v1915 = vmul.f32 %v1853, %v1819
      %v1916 = vmul.f32 %v1853, %v1820
      %v1917 = vmul.f32 %v1857, %v1821
      %v1918 = vmul.f32 %v1857, %v1822
      %v1919 = vmul.f32 %v1861, %v1823
      %v1920 = vmul.f32 %v1861, %v1824
      %v1921 = vmul.f32 %v1865, %v1825
      %v1922 = vmul.f32 %v1865, %v1826
      %v1923 = vmul.f32 %v1869, %v1827
      %v1924 = vmul.f32 %v1869, %v1828
      %v1925 = vmul.f32 %v1873, %v1829
      %v1926 = vmul.f32 %v1873, %v1830
      %v1927 = vmul.f32 %v1877, %v1831
      %v1928 = vmul.f32 %v1877, %v1832
      %v1929 = vmul.f32 %v1881, %v1833
      %v1930 = vmul.f32 %v1881, %v1834
      %v1931 = vmul.f32 %v1885, %v1835
      %v1932 = vmul.f32 %v1885, %v1836
      %v1933 = vmul.f32 %v1889, %v1837
      %v1934 = vmul.f32 %v1889, %v1838
      %v1935 = vmul.f32 %v1893, %v1839
      %v1936 = vmul.f32 %v1893, %v1840
      %v1937 = vmul.f32 %v1897, %v1841
      %v1938 = vmul.f32 %v1897, %v1842
      %v1939 = vmul.f32 %v1901, %v1843
      %v1940 = vmul.f32 %v1901, %v1844
      %v1941 = vmul.f32 %v1905, %v1845
      %v1942 = vmul.f32 %v1905, %v1846
      %v1943 = vmul.f32 %v1909, %v1847
      %v1944 = vmul.f32 %v1909, %v1848
      %v1945 = vmul.f32 %v1913, %v1849
      %v1946 = vmul.f32 %v1913, %v1850
      %v1947 = vadd.f32 %v1549, %v1915
      %v1948 = vadd.f32 %v1550, %v1916
      %v1949 = vadd.f32 %v1551, %v1917
      %v1950 = vadd.f32 %v1552, %v1918
      %v1951 = vadd.f32 %v1553, %v1919
      %v1952 = vadd.f32 %v1554, %v1920
      %v1953 = vadd.f32 %v1555, %v1921
      %v1954 = vadd.f32 %v1556, %v1922
      %v1955 = vadd.f32 %v1557, %v1923
      %v1956 = vadd.f32 %v1558, %v1924
      %v1957 = vadd.f32 %v1559, %v1925
      %v1958 = vadd.f32 %v1560, %v1926
      %v1959 = vadd.f32 %v1561, %v1927
      %v1960 = vadd.f32 %v1562, %v1928
      %v1961 = vadd.f32 %v1563, %v1929
      %v1962 = vadd.f32 %v1564, %v1930
      %v1963 = vadd.f32 %v1565, %v1931
      %v1964 = vadd.f32 %v1566, %v1932
      %v1965 = vadd.f32 %v1567, %v1933
      %v1966 = vadd.f32 %v1568, %v1934
      %v1967 = vadd.f32 %v1569, %v1935
      %v1968 = vadd.f32 %v1570, %v1936
      %v1969 = vadd.f32 %v1571, %v1937
      %v1970 = vadd.f32 %v1572, %v1938
      %v1971 = vadd.f32 %v1573, %v1939
      %v1972 = vadd.f32 %v1574, %v1940
      %v1973 = vadd.f32 %v1575, %v1941
      %v1974 = vadd.f32 %v1576, %v1942
      %v1975 = vadd.f32 %v1577, %v1943
      %v1976 = vadd.f32 %v1578, %v1944
      %v1977 = vadd.f32 %v1579, %v1945
      %v1978 = vadd.f32 %v1580, %v1946
      %s1979 = scalar_lea.vmem %s8, 6
      %v1980 = vld [vmem:[%s1979] sm:$0x3]
      %1981 = vrot.lane.b32.xlu0 %v505, 1
      %v1982 = vpop.permute.xlu0 %1981
      %1983 = vrot.lane.b32.xlu0 %v509, 1
      %v1984 = vpop.permute.xlu0 %1983
      %1985 = vrot.lane.b32.xlu0 %v515, 1
      %v1986 = vpop.permute.xlu0 %1985
      %1987 = vrot.lane.b32.xlu0 %v519, 1
      %v1988 = vpop.permute.xlu0 %1987
      %1989 = vrot.lane.b32.xlu0 %v525, 1
      %v1990 = vpop.permute.xlu0 %1989
      %1991 = vrot.lane.b32.xlu0 %v529, 1
      %v1992 = vpop.permute.xlu0 %1991
      %1993 = vrot.lane.b32.xlu0 %v535, 1
      %v1994 = vpop.permute.xlu0 %1993
      %1995 = vrot.lane.b32.xlu0 %v539, 1
      %v1996 = vpop.permute.xlu0 %1995
      %1997 = vrot.lane.b32.xlu0 %v507, 1
      %v1998 = vpop.permute.xlu0 %1997
      %1999 = vrot.lane.b32.xlu0 %v511, 1
      %v2000 = vpop.permute.xlu0 %1999
      %2001 = vrot.lane.b32.xlu0 %v517, 1
      %v2002 = vpop.permute.xlu0 %2001
      %2003 = vrot.lane.b32.xlu0 %v521, 1
      %v2004 = vpop.permute.xlu0 %2003
      %2005 = vrot.lane.b32.xlu0 %v527, 1
      %v2006 = vpop.permute.xlu0 %2005
      %2007 = vrot.lane.b32.xlu0 %v531, 1
      %v2008 = vpop.permute.xlu0 %2007
      %2009 = vrot.lane.b32.xlu0 %v537, 1
      %v2010 = vpop.permute.xlu0 %2009
      %2011 = vrot.lane.b32.xlu0 %v541, 1
      %v2012 = vpop.permute.xlu0 %2011
      %vm2013 = vcmp.lt.s32.totalorder %v794, 1
      %v2014 = vsel %vm2013, %v1982, %v1998
      %v2015 = vsel %vm2013, %v1984, %v2000
      %v2016 = vsel %vm2013, %v1986, %v2002
      %v2017 = vsel %vm2013, %v1988, %v2004
      %v2018 = vsel %vm2013, %v1990, %v2006
      %v2019 = vsel %vm2013, %v1992, %v2008
      %v2020 = vsel %vm2013, %v1994, %v2010
      %v2021 = vsel %vm2013, %v1996, %v2012
      %v2022 = vsel %vm2013, %v1998, %v1982
      %v2023 = vsel %vm2013, %v2000, %v1984
      %v2024 = vsel %vm2013, %v2002, %v1986
      %v2025 = vsel %vm2013, %v2004, %v1988
      %v2026 = vsel %vm2013, %v2006, %v1990
      %v2027 = vsel %vm2013, %v2008, %v1992
      %v2028 = vsel %vm2013, %v2010, %v1994
      %v2029 = vsel %vm2013, %v2012, %v1996
      %v2031 = vlaneseq
      %v2032 = vshrl.u32 %v2031, 7
      %v2033 = vsub.s32 0, %v2032
      %v2034 = vrot.slane %v1980, %v2033
      %v2035 = vlaneseq
      %v2036 = vshrl.u32 %v2035, 7
      %v2037 = vsub.s32 1, %v2036
      %v2038 = vrot.slane %v1980, %v2037
      %v2041 = vmul.f32 %v2022, %v2034
      %v2042 = vmul.f32 %v2014, %v2038
      %v2043 = vmul.f32 %v2023, %v2034
      %v2044 = vmul.f32 %v2015, %v2038
      %v2045 = vmul.f32 %v2024, %v2034
      %v2046 = vmul.f32 %v2016, %v2038
      %v2047 = vmul.f32 %v2025, %v2034
      %v2048 = vmul.f32 %v2017, %v2038
      %v2049 = vmul.f32 %v2026, %v2034
      %v2050 = vmul.f32 %v2018, %v2038
      %v2051 = vmul.f32 %v2027, %v2034
      %v2052 = vmul.f32 %v2019, %v2038
      %v2053 = vmul.f32 %v2028, %v2034
      %v2054 = vmul.f32 %v2020, %v2038
      %v2055 = vmul.f32 %v2029, %v2034
      %v2056 = vmul.f32 %v2021, %v2038
      %2057 = vset.pattern.permute.xlu0 3
      %2058 = vperm.xlu0 %2057, %v736
      %v2059 = vpop.permute.xlu0 %2058
      %2061 = vset.pattern.permute.xlu0 3
      %2062 = vperm.xlu0 %2061, %v737
      %v2063 = vpop.permute.xlu0 %2062
      %2065 = vset.pattern.permute.xlu0 3
      %2066 = vperm.xlu0 %2065, %v738
      %v2067 = vpop.permute.xlu0 %2066
      %2069 = vset.pattern.permute.xlu0 3
      %2070 = vperm.xlu0 %2069, %v739
      %v2071 = vpop.permute.xlu0 %2070
      %2073 = vset.pattern.permute.xlu0 3
      %2074 = vperm.xlu0 %2073, %v740
      %v2075 = vpop.permute.xlu0 %2074
      %2077 = vset.pattern.permute.xlu0 3
      %2078 = vperm.xlu0 %2077, %v741
      %v2079 = vpop.permute.xlu0 %2078
      %2081 = vset.pattern.permute.xlu0 3
      %2082 = vperm.xlu0 %2081, %v742
      %v2083 = vpop.permute.xlu0 %2082
      %2085 = vset.pattern.permute.xlu0 3
      %2086 = vperm.xlu0 %2085, %v743
      %v2087 = vpop.permute.xlu0 %2086
      %v2089 = vmul.f32 %v2059, %v2041
      %v2090 = vmul.f32 %v2059, %v2042
      %v2091 = vmul.f32 %v2063, %v2043
      %v2092 = vmul.f32 %v2063, %v2044
      %v2093 = vmul.f32 %v2067, %v2045
      %v2094 = vmul.f32 %v2067, %v2046
      %v2095 = vmul.f32 %v2071, %v2047
      %v2096 = vmul.f32 %v2071, %v2048
      %v2097 = vmul.f32 %v2075, %v2049
      %v2098 = vmul.f32 %v2075, %v2050
      %v2099 = vmul.f32 %v2079, %v2051
      %v2100 = vmul.f32 %v2079, %v2052
      %v2101 = vmul.f32 %v2083, %v2053
      %v2102 = vmul.f32 %v2083, %v2054
      %v2103 = vmul.f32 %v2087, %v2055
      %v2104 = vmul.f32 %v2087, %v2056
      %v2105 = vadd.f32 %v1707, %v2089
      %v2106 = vadd.f32 %v1708, %v2090
      %v2107 = vadd.f32 %v1709, %v2091
      %v2108 = vadd.f32 %v1710, %v2092
      %v2109 = vadd.f32 %v1711, %v2093
      %v2110 = vadd.f32 %v1712, %v2094
      %v2111 = vadd.f32 %v1713, %v2095
      %v2112 = vadd.f32 %v1714, %v2096
      %v2113 = vadd.f32 %v1715, %v2097
      %v2114 = vadd.f32 %v1716, %v2098
      %v2115 = vadd.f32 %v1717, %v2099
      %v2116 = vadd.f32 %v1718, %v2100
      %v2117 = vadd.f32 %v1719, %v2101
      %v2118 = vadd.f32 %v1720, %v2102
      %v2119 = vadd.f32 %v1721, %v2103
      %v2120 = vadd.f32 %v1722, %v2104
      %2121 = vrot.lane.b32.xlu0 %v658, 1
      %v2122 = vpop.permute.xlu0 %2121
      %2123 = vrot.lane.b32.xlu0 %v662, 1
      %v2124 = vpop.permute.xlu0 %2123
      %2125 = vrot.lane.b32.xlu0 %v668, 1
      %v2126 = vpop.permute.xlu0 %2125
      %2127 = vrot.lane.b32.xlu0 %v672, 1
      %v2128 = vpop.permute.xlu0 %2127
      %2129 = vrot.lane.b32.xlu0 %v678, 1
      %v2130 = vpop.permute.xlu0 %2129
      %2131 = vrot.lane.b32.xlu0 %v682, 1
      %v2132 = vpop.permute.xlu0 %2131
      %2133 = vrot.lane.b32.xlu0 %v688, 1
      %v2134 = vpop.permute.xlu0 %2133
      %2135 = vrot.lane.b32.xlu0 %v692, 1
      %v2136 = vpop.permute.xlu0 %2135
      %2137 = vrot.lane.b32.xlu0 %v698, 1
      %v2138 = vpop.permute.xlu0 %2137
      %2139 = vrot.lane.b32.xlu0 %v702, 1
      %v2140 = vpop.permute.xlu0 %2139
      %2141 = vrot.lane.b32.xlu0 %v708, 1
      %v2142 = vpop.permute.xlu0 %2141
      %2143 = vrot.lane.b32.xlu0 %v712, 1
      %v2144 = vpop.permute.xlu0 %2143
      %2145 = vrot.lane.b32.xlu0 %v718, 1
      %v2146 = vpop.permute.xlu0 %2145
      %2147 = vrot.lane.b32.xlu0 %v722, 1
      %v2148 = vpop.permute.xlu0 %2147
      %2149 = vrot.lane.b32.xlu0 %v728, 1
      %v2150 = vpop.permute.xlu0 %2149
      %2151 = vrot.lane.b32.xlu0 %v732, 1
      %v2152 = vpop.permute.xlu0 %2151
      %2153 = vrot.lane.b32.xlu0 %v660, 1
      %v2154 = vpop.permute.xlu0 %2153
      %2155 = vrot.lane.b32.xlu0 %v664, 1
      %v2156 = vpop.permute.xlu0 %2155
      %2157 = vrot.lane.b32.xlu0 %v670, 1
      %v2158 = vpop.permute.xlu0 %2157
      %2159 = vrot.lane.b32.xlu0 %v674, 1
      %v2160 = vpop.permute.xlu0 %2159
      %2161 = vrot.lane.b32.xlu0 %v680, 1
      %v2162 = vpop.permute.xlu0 %2161
      %2163 = vrot.lane.b32.xlu0 %v684, 1
      %v2164 = vpop.permute.xlu0 %2163
      %2165 = vrot.lane.b32.xlu0 %v690, 1
      %v2166 = vpop.permute.xlu0 %2165
      %2167 = vrot.lane.b32.xlu0 %v694, 1
      %v2168 = vpop.permute.xlu0 %2167
      %2169 = vrot.lane.b32.xlu0 %v700, 1
      %v2170 = vpop.permute.xlu0 %2169
      %2171 = vrot.lane.b32.xlu0 %v704, 1
      %v2172 = vpop.permute.xlu0 %2171
      %2173 = vrot.lane.b32.xlu0 %v710, 1
      %v2174 = vpop.permute.xlu0 %2173
      %2175 = vrot.lane.b32.xlu0 %v714, 1
      %v2176 = vpop.permute.xlu0 %2175
      %2177 = vrot.lane.b32.xlu0 %v720, 1
      %v2178 = vpop.permute.xlu0 %2177
      %2179 = vrot.lane.b32.xlu0 %v724, 1
      %v2180 = vpop.permute.xlu0 %2179
      %2181 = vrot.lane.b32.xlu0 %v730, 1
      %v2182 = vpop.permute.xlu0 %2181
      %2183 = vrot.lane.b32.xlu0 %v734, 1
      %v2184 = vpop.permute.xlu0 %2183
      %v2185 = vsel %vm2013, %v2122, %v2154
      %v2186 = vsel %vm2013, %v2124, %v2156
      %v2187 = vsel %vm2013, %v2126, %v2158
      %v2188 = vsel %vm2013, %v2128, %v2160
      %v2189 = vsel %vm2013, %v2130, %v2162
      %v2190 = vsel %vm2013, %v2132, %v2164
      %v2191 = vsel %vm2013, %v2134, %v2166
      %v2192 = vsel %vm2013, %v2136, %v2168
      %v2193 = vsel %vm2013, %v2138, %v2170
      %v2194 = vsel %vm2013, %v2140, %v2172
      %v2195 = vsel %vm2013, %v2142, %v2174
      %v2196 = vsel %vm2013, %v2144, %v2176
      %v2197 = vsel %vm2013, %v2146, %v2178
      %v2198 = vsel %vm2013, %v2148, %v2180
      %v2199 = vsel %vm2013, %v2150, %v2182
      %v2200 = vsel %vm2013, %v2152, %v2184
      %v2201 = vsel %vm2013, %v2154, %v2122
      %v2202 = vsel %vm2013, %v2156, %v2124
      %v2203 = vsel %vm2013, %v2158, %v2126
      %v2204 = vsel %vm2013, %v2160, %v2128
      %v2205 = vsel %vm2013, %v2162, %v2130
      %v2206 = vsel %vm2013, %v2164, %v2132
      %v2207 = vsel %vm2013, %v2166, %v2134
      %v2208 = vsel %vm2013, %v2168, %v2136
      %v2209 = vsel %vm2013, %v2170, %v2138
      %v2210 = vsel %vm2013, %v2172, %v2140
      %v2211 = vsel %vm2013, %v2174, %v2142
      %v2212 = vsel %vm2013, %v2176, %v2144
      %v2213 = vsel %vm2013, %v2178, %v2146
      %v2214 = vsel %vm2013, %v2180, %v2148
      %v2215 = vsel %vm2013, %v2182, %v2150
      %v2216 = vsel %vm2013, %v2184, %v2152
      %v2217 = vmul.f32 %v2201, %v2034
      %v2218 = vmul.f32 %v2185, %v2038
      %v2219 = vmul.f32 %v2202, %v2034
      %v2220 = vmul.f32 %v2186, %v2038
      %v2221 = vmul.f32 %v2203, %v2034
      %v2222 = vmul.f32 %v2187, %v2038
      %v2223 = vmul.f32 %v2204, %v2034
      %v2224 = vmul.f32 %v2188, %v2038
      %v2225 = vmul.f32 %v2205, %v2034
      %v2226 = vmul.f32 %v2189, %v2038
      %v2227 = vmul.f32 %v2206, %v2034
      %v2228 = vmul.f32 %v2190, %v2038
      %v2229 = vmul.f32 %v2207, %v2034
      %v2230 = vmul.f32 %v2191, %v2038
      %v2231 = vmul.f32 %v2208, %v2034
      %v2232 = vmul.f32 %v2192, %v2038
      %v2233 = vmul.f32 %v2209, %v2034
      %v2234 = vmul.f32 %v2193, %v2038
      %v2235 = vmul.f32 %v2210, %v2034
      %v2236 = vmul.f32 %v2194, %v2038
      %v2237 = vmul.f32 %v2211, %v2034
      %v2238 = vmul.f32 %v2195, %v2038
      %v2239 = vmul.f32 %v2212, %v2034
      %v2240 = vmul.f32 %v2196, %v2038
      %v2241 = vmul.f32 %v2213, %v2034
      %v2242 = vmul.f32 %v2197, %v2038
      %v2243 = vmul.f32 %v2214, %v2034
      %v2244 = vmul.f32 %v2198, %v2038
      %v2245 = vmul.f32 %v2215, %v2034
      %v2246 = vmul.f32 %v2199, %v2038
      %v2247 = vmul.f32 %v2216, %v2034
      %v2248 = vmul.f32 %v2200, %v2038
      %2249 = vset.pattern.permute.xlu0 3
      %2250 = vperm.xlu0 %2249, %v744
      %v2251 = vpop.permute.xlu0 %2250
      %2253 = vset.pattern.permute.xlu0 3
      %2254 = vperm.xlu0 %2253, %v745
      %v2255 = vpop.permute.xlu0 %2254
      %2257 = vset.pattern.permute.xlu0 3
      %2258 = vperm.xlu0 %2257, %v746
      %v2259 = vpop.permute.xlu0 %2258
      %2261 = vset.pattern.permute.xlu0 3
      %2262 = vperm.xlu0 %2261, %v747
      %v2263 = vpop.permute.xlu0 %2262
      %2265 = vset.pattern.permute.xlu0 3
      %2266 = vperm.xlu0 %2265, %v748
      %v2267 = vpop.permute.xlu0 %2266
      %2269 = vset.pattern.permute.xlu0 3
      %2270 = vperm.xlu0 %2269, %v749
      %v2271 = vpop.permute.xlu0 %2270
      %2273 = vset.pattern.permute.xlu0 3
      %2274 = vperm.xlu0 %2273, %v750
      %v2275 = vpop.permute.xlu0 %2274
      %2277 = vset.pattern.permute.xlu0 3
      %2278 = vperm.xlu0 %2277, %v751
      %v2279 = vpop.permute.xlu0 %2278
      %2281 = vset.pattern.permute.xlu0 3
      %2282 = vperm.xlu0 %2281, %v752
      %v2283 = vpop.permute.xlu0 %2282
      %2285 = vset.pattern.permute.xlu0 3
      %2286 = vperm.xlu0 %2285, %v753
      %v2287 = vpop.permute.xlu0 %2286
      %2289 = vset.pattern.permute.xlu0 3
      %2290 = vperm.xlu0 %2289, %v754
      %v2291 = vpop.permute.xlu0 %2290
      %2293 = vset.pattern.permute.xlu0 3
      %2294 = vperm.xlu0 %2293, %v755
      %v2295 = vpop.permute.xlu0 %2294
      %2297 = vset.pattern.permute.xlu0 3
      %2298 = vperm.xlu0 %2297, %v756
      %v2299 = vpop.permute.xlu0 %2298
      %2301 = vset.pattern.permute.xlu0 3
      %2302 = vperm.xlu0 %2301, %v757
      %v2303 = vpop.permute.xlu0 %2302
      %2305 = vset.pattern.permute.xlu0 3
      %2306 = vperm.xlu0 %2305, %v758
      %v2307 = vpop.permute.xlu0 %2306
      %2309 = vset.pattern.permute.xlu0 3
      %2310 = vperm.xlu0 %2309, %v759
      %v2311 = vpop.permute.xlu0 %2310
      %v2313 = vmul.f32 %v2251, %v2217
      %v2314 = vmul.f32 %v2251, %v2218
      %v2315 = vmul.f32 %v2255, %v2219
      %v2316 = vmul.f32 %v2255, %v2220
      %v2317 = vmul.f32 %v2259, %v2221
      %v2318 = vmul.f32 %v2259, %v2222
      %v2319 = vmul.f32 %v2263, %v2223
      %v2320 = vmul.f32 %v2263, %v2224
      %v2321 = vmul.f32 %v2267, %v2225
      %v2322 = vmul.f32 %v2267, %v2226
      %v2323 = vmul.f32 %v2271, %v2227
      %v2324 = vmul.f32 %v2271, %v2228
      %v2325 = vmul.f32 %v2275, %v2229
      %v2326 = vmul.f32 %v2275, %v2230
      %v2327 = vmul.f32 %v2279, %v2231
      %v2328 = vmul.f32 %v2279, %v2232
      %v2329 = vmul.f32 %v2283, %v2233
      %v2330 = vmul.f32 %v2283, %v2234
      %v2331 = vmul.f32 %v2287, %v2235
      %v2332 = vmul.f32 %v2287, %v2236
      %v2333 = vmul.f32 %v2291, %v2237
      %v2334 = vmul.f32 %v2291, %v2238
      %v2335 = vmul.f32 %v2295, %v2239
      %v2336 = vmul.f32 %v2295, %v2240
      %v2337 = vmul.f32 %v2299, %v2241
      %v2338 = vmul.f32 %v2299, %v2242
      %v2339 = vmul.f32 %v2303, %v2243
      %v2340 = vmul.f32 %v2303, %v2244
      %v2341 = vmul.f32 %v2307, %v2245
      %v2342 = vmul.f32 %v2307, %v2246
      %v2343 = vmul.f32 %v2311, %v2247
      %v2344 = vmul.f32 %v2311, %v2248
      %v2345 = vadd.f32 %v1947, %v2313
      %v2346 = vadd.f32 %v1948, %v2314
      %v2347 = vadd.f32 %v1949, %v2315
      %v2348 = vadd.f32 %v1950, %v2316
      %v2349 = vadd.f32 %v1951, %v2317
      %v2350 = vadd.f32 %v1952, %v2318
      %v2351 = vadd.f32 %v1953, %v2319
      %v2352 = vadd.f32 %v1954, %v2320
      %v2353 = vadd.f32 %v1955, %v2321
      %v2354 = vadd.f32 %v1956, %v2322
      %v2355 = vadd.f32 %v1957, %v2323
      %v2356 = vadd.f32 %v1958, %v2324
      %v2357 = vadd.f32 %v1959, %v2325
      %v2358 = vadd.f32 %v1960, %v2326
      %v2359 = vadd.f32 %v1961, %v2327
      %v2360 = vadd.f32 %v1962, %v2328
      %v2361 = vadd.f32 %v1963, %v2329
      %v2362 = vadd.f32 %v1964, %v2330
      %v2363 = vadd.f32 %v1965, %v2331
      %v2364 = vadd.f32 %v1966, %v2332
      %v2365 = vadd.f32 %v1967, %v2333
      %v2366 = vadd.f32 %v1968, %v2334
      %v2367 = vadd.f32 %v1969, %v2335
      %v2368 = vadd.f32 %v1970, %v2336
      %v2369 = vadd.f32 %v1971, %v2337
      %v2370 = vadd.f32 %v1972, %v2338
      %v2371 = vadd.f32 %v1973, %v2339
      %v2372 = vadd.f32 %v1974, %v2340
      %v2373 = vadd.f32 %v1975, %v2341
      %v2374 = vadd.f32 %v1976, %v2342
      %v2375 = vadd.f32 %v1977, %v2343
      %v2376 = vadd.f32 %v1978, %v2344
      %2377 = vset.pattern.permute.xlu0 4
      %2378 = vperm.xlu0 %2377, %v736
      %v2379 = vpop.permute.xlu0 %2378
      %2381 = vset.pattern.permute.xlu0 4
      %2382 = vperm.xlu0 %2381, %v737
      %v2383 = vpop.permute.xlu0 %2382
      %2385 = vset.pattern.permute.xlu0 4
      %2386 = vperm.xlu0 %2385, %v738
      %v2387 = vpop.permute.xlu0 %2386
      %2389 = vset.pattern.permute.xlu0 4
      %2390 = vperm.xlu0 %2389, %v739
      %v2391 = vpop.permute.xlu0 %2390
      %2393 = vset.pattern.permute.xlu0 4
      %2394 = vperm.xlu0 %2393, %v740
      %v2395 = vpop.permute.xlu0 %2394
      %2397 = vset.pattern.permute.xlu0 4
      %2398 = vperm.xlu0 %2397, %v741
      %v2399 = vpop.permute.xlu0 %2398
      %2401 = vset.pattern.permute.xlu0 4
      %2402 = vperm.xlu0 %2401, %v742
      %v2403 = vpop.permute.xlu0 %2402
      %2405 = vset.pattern.permute.xlu0 4
      %2406 = vperm.xlu0 %2405, %v743
      %v2407 = vpop.permute.xlu0 %2406
      %v2409 = vmul.f32 %v2379, %v505
      %v2410 = vmul.f32 %v2379, %v507
      %v2411 = vmul.f32 %v2383, %v509
      %v2412 = vmul.f32 %v2383, %v511
      %v2413 = vmul.f32 %v2387, %v515
      %v2414 = vmul.f32 %v2387, %v517
      %v2415 = vmul.f32 %v2391, %v519
      %v2416 = vmul.f32 %v2391, %v521
      %v2417 = vmul.f32 %v2395, %v525
      %v2418 = vmul.f32 %v2395, %v527
      %v2419 = vmul.f32 %v2399, %v529
      %v2420 = vmul.f32 %v2399, %v531
      %v2421 = vmul.f32 %v2403, %v535
      %v2422 = vmul.f32 %v2403, %v537
      %v2423 = vmul.f32 %v2407, %v539
      %v2424 = vmul.f32 %v2407, %v541
      %v2425 = vadd.f32 %v2105, %v2409
      %v2426 = vadd.f32 %v2106, %v2410
      %v2427 = vadd.f32 %v2107, %v2411
      %v2428 = vadd.f32 %v2108, %v2412
      %v2429 = vadd.f32 %v2109, %v2413
      %v2430 = vadd.f32 %v2110, %v2414
      %v2431 = vadd.f32 %v2111, %v2415
      %v2432 = vadd.f32 %v2112, %v2416
      %v2433 = vadd.f32 %v2113, %v2417
      %v2434 = vadd.f32 %v2114, %v2418
      %v2435 = vadd.f32 %v2115, %v2419
      %v2436 = vadd.f32 %v2116, %v2420
      %v2437 = vadd.f32 %v2117, %v2421
      %v2438 = vadd.f32 %v2118, %v2422
      %v2439 = vadd.f32 %v2119, %v2423
      %v2440 = vadd.f32 %v2120, %v2424
      %2441 = vset.pattern.permute.xlu0 4
      %2442 = vperm.xlu0 %2441, %v744
      %v2443 = vpop.permute.xlu0 %2442
      %2445 = vset.pattern.permute.xlu0 4
      %2446 = vperm.xlu0 %2445, %v745
      %v2447 = vpop.permute.xlu0 %2446
      %2449 = vset.pattern.permute.xlu0 4
      %2450 = vperm.xlu0 %2449, %v746
      %v2451 = vpop.permute.xlu0 %2450
      %2453 = vset.pattern.permute.xlu0 4
      %2454 = vperm.xlu0 %2453, %v747
      %v2455 = vpop.permute.xlu0 %2454
      %2457 = vset.pattern.permute.xlu0 4
      %2458 = vperm.xlu0 %2457, %v748
      %v2459 = vpop.permute.xlu0 %2458
      %2461 = vset.pattern.permute.xlu0 4
      %2462 = vperm.xlu0 %2461, %v749
      %v2463 = vpop.permute.xlu0 %2462
      %2465 = vset.pattern.permute.xlu0 4
      %2466 = vperm.xlu0 %2465, %v750
      %v2467 = vpop.permute.xlu0 %2466
      %2469 = vset.pattern.permute.xlu0 4
      %2470 = vperm.xlu0 %2469, %v751
      %v2471 = vpop.permute.xlu0 %2470
      %2473 = vset.pattern.permute.xlu0 4
      %2474 = vperm.xlu0 %2473, %v752
      %v2475 = vpop.permute.xlu0 %2474
      %2477 = vset.pattern.permute.xlu0 4
      %2478 = vperm.xlu0 %2477, %v753
      %v2479 = vpop.permute.xlu0 %2478
      %2481 = vset.pattern.permute.xlu0 4
      %2482 = vperm.xlu0 %2481, %v754
      %v2483 = vpop.permute.xlu0 %2482
      %2485 = vset.pattern.permute.xlu0 4
      %2486 = vperm.xlu0 %2485, %v755
      %v2487 = vpop.permute.xlu0 %2486
      %2489 = vset.pattern.permute.xlu0 4
      %2490 = vperm.xlu0 %2489, %v756
      %v2491 = vpop.permute.xlu0 %2490
      %2493 = vset.pattern.permute.xlu0 4
      %2494 = vperm.xlu0 %2493, %v757
      %v2495 = vpop.permute.xlu0 %2494
      %2497 = vset.pattern.permute.xlu0 4
      %2498 = vperm.xlu0 %2497, %v758
      %v2499 = vpop.permute.xlu0 %2498
      %2501 = vset.pattern.permute.xlu0 4
      %2502 = vperm.xlu0 %2501, %v759
      %v2503 = vpop.permute.xlu0 %2502
      %v2505 = vmul.f32 %v2443, %v658
      %v2506 = vmul.f32 %v2443, %v660
      %v2507 = vmul.f32 %v2447, %v662
      %v2508 = vmul.f32 %v2447, %v664
      %v2509 = vmul.f32 %v2451, %v668
      %v2510 = vmul.f32 %v2451, %v670
      %v2511 = vmul.f32 %v2455, %v672
      %v2512 = vmul.f32 %v2455, %v674
      %v2513 = vmul.f32 %v2459, %v678
      %v2514 = vmul.f32 %v2459, %v680
      %v2515 = vmul.f32 %v2463, %v682
      %v2516 = vmul.f32 %v2463, %v684
      %v2517 = vmul.f32 %v2467, %v688
      %v2518 = vmul.f32 %v2467, %v690
      %v2519 = vmul.f32 %v2471, %v692
      %v2520 = vmul.f32 %v2471, %v694
      %v2521 = vmul.f32 %v2475, %v698
      %v2522 = vmul.f32 %v2475, %v700
      %v2523 = vmul.f32 %v2479, %v702
      %v2524 = vmul.f32 %v2479, %v704
      %v2525 = vmul.f32 %v2483, %v708
      %v2526 = vmul.f32 %v2483, %v710
      %v2527 = vmul.f32 %v2487, %v712
      %v2528 = vmul.f32 %v2487, %v714
      %v2529 = vmul.f32 %v2491, %v718
      %v2530 = vmul.f32 %v2491, %v720
      %v2531 = vmul.f32 %v2495, %v722
      %v2532 = vmul.f32 %v2495, %v724
      %v2533 = vmul.f32 %v2499, %v728
      %v2534 = vmul.f32 %v2499, %v730
      %v2535 = vmul.f32 %v2503, %v732
      %v2536 = vmul.f32 %v2503, %v734
      %v2537 = vadd.f32 %v2345, %v2505
      %v2538 = vadd.f32 %v2346, %v2506
      %v2539 = vadd.f32 %v2347, %v2507
      %v2540 = vadd.f32 %v2348, %v2508
      %v2541 = vadd.f32 %v2349, %v2509
      %v2542 = vadd.f32 %v2350, %v2510
      %v2543 = vadd.f32 %v2351, %v2511
      %v2544 = vadd.f32 %v2352, %v2512
      %v2545 = vadd.f32 %v2353, %v2513
      %v2546 = vadd.f32 %v2354, %v2514
      %v2547 = vadd.f32 %v2355, %v2515
      %v2548 = vadd.f32 %v2356, %v2516
      %v2549 = vadd.f32 %v2357, %v2517
      %v2550 = vadd.f32 %v2358, %v2518
      %v2551 = vadd.f32 %v2359, %v2519
      %v2552 = vadd.f32 %v2360, %v2520
      %v2553 = vadd.f32 %v2361, %v2521
      %v2554 = vadd.f32 %v2362, %v2522
      %v2555 = vadd.f32 %v2363, %v2523
      %v2556 = vadd.f32 %v2364, %v2524
      %v2557 = vadd.f32 %v2365, %v2525
      %v2558 = vadd.f32 %v2366, %v2526
      %v2559 = vadd.f32 %v2367, %v2527
      %v2560 = vadd.f32 %v2368, %v2528
      %v2561 = vadd.f32 %v2369, %v2529
      %v2562 = vadd.f32 %v2370, %v2530
      %v2563 = vadd.f32 %v2371, %v2531
      %v2564 = vadd.f32 %v2372, %v2532
      %v2565 = vadd.f32 %v2373, %v2533
      %v2566 = vadd.f32 %v2374, %v2534
      %v2567 = vadd.f32 %v2375, %v2535
      %v2568 = vadd.f32 %v2376, %v2536
      %s2569 = scalar_lea.vmem %s8, 10
      %v2570 = vld [vmem:[%s2569] sm:$0x3]
      %2571 = vrot.lane.b32.xlu0 %v505, 127
      %v2572 = vpop.permute.xlu0 %2571
      %2573 = vrot.lane.b32.xlu0 %v509, 127
      %v2574 = vpop.permute.xlu0 %2573
      %2575 = vrot.lane.b32.xlu0 %v515, 127
      %v2576 = vpop.permute.xlu0 %2575
      %2577 = vrot.lane.b32.xlu0 %v519, 127
      %v2578 = vpop.permute.xlu0 %2577
      %2579 = vrot.lane.b32.xlu0 %v525, 127
      %v2580 = vpop.permute.xlu0 %2579
      %2581 = vrot.lane.b32.xlu0 %v529, 127
      %v2582 = vpop.permute.xlu0 %2581
      %2583 = vrot.lane.b32.xlu0 %v535, 127
      %v2584 = vpop.permute.xlu0 %2583
      %2585 = vrot.lane.b32.xlu0 %v539, 127
      %v2586 = vpop.permute.xlu0 %2585
      %2587 = vrot.lane.b32.xlu0 %v507, 127
      %v2588 = vpop.permute.xlu0 %2587
      %2589 = vrot.lane.b32.xlu0 %v511, 127
      %v2590 = vpop.permute.xlu0 %2589
      %2591 = vrot.lane.b32.xlu0 %v517, 127
      %v2592 = vpop.permute.xlu0 %2591
      %2593 = vrot.lane.b32.xlu0 %v521, 127
      %v2594 = vpop.permute.xlu0 %2593
      %2595 = vrot.lane.b32.xlu0 %v527, 127
      %v2596 = vpop.permute.xlu0 %2595
      %2597 = vrot.lane.b32.xlu0 %v531, 127
      %v2598 = vpop.permute.xlu0 %2597
      %2599 = vrot.lane.b32.xlu0 %v537, 127
      %v2600 = vpop.permute.xlu0 %2599
      %2601 = vrot.lane.b32.xlu0 %v541, 127
      %v2602 = vpop.permute.xlu0 %2601
      %vm2603 = vcmp.lt.s32.totalorder %v794, 127
      %v2604 = vsel %vm2603, %v2572, %v2588
      %v2605 = vsel %vm2603, %v2574, %v2590
      %v2606 = vsel %vm2603, %v2576, %v2592
      %v2607 = vsel %vm2603, %v2578, %v2594
      %v2608 = vsel %vm2603, %v2580, %v2596
      %v2609 = vsel %vm2603, %v2582, %v2598
      %v2610 = vsel %vm2603, %v2584, %v2600
      %v2611 = vsel %vm2603, %v2586, %v2602
      %v2612 = vsel %vm2603, %v2588, %v2572
      %v2613 = vsel %vm2603, %v2590, %v2574
      %v2614 = vsel %vm2603, %v2592, %v2576
      %v2615 = vsel %vm2603, %v2594, %v2578
      %v2616 = vsel %vm2603, %v2596, %v2580
      %v2617 = vsel %vm2603, %v2598, %v2582
      %v2618 = vsel %vm2603, %v2600, %v2584
      %v2619 = vsel %vm2603, %v2602, %v2586
      %v2621 = vlaneseq
      %v2622 = vshrl.u32 %v2621, 7
      %v2623 = vsub.s32 0, %v2622
      %v2624 = vrot.slane %v2570, %v2623
      %v2625 = vlaneseq
      %v2626 = vshrl.u32 %v2625, 7
      %v2627 = vsub.s32 1, %v2626
      %v2628 = vrot.slane %v2570, %v2627
      %v2631 = vmul.f32 %v2604, %v2624
      %v2632 = vmul.f32 %v2612, %v2628
      %v2633 = vmul.f32 %v2605, %v2624
      %v2634 = vmul.f32 %v2613, %v2628
      %v2635 = vmul.f32 %v2606, %v2624
      %v2636 = vmul.f32 %v2614, %v2628
      %v2637 = vmul.f32 %v2607, %v2624
      %v2638 = vmul.f32 %v2615, %v2628
      %v2639 = vmul.f32 %v2608, %v2624
      %v2640 = vmul.f32 %v2616, %v2628
      %v2641 = vmul.f32 %v2609, %v2624
      %v2642 = vmul.f32 %v2617, %v2628
      %v2643 = vmul.f32 %v2610, %v2624
      %v2644 = vmul.f32 %v2618, %v2628
      %v2645 = vmul.f32 %v2611, %v2624
      %v2646 = vmul.f32 %v2619, %v2628
      %2647 = vset.pattern.permute.xlu0 5
      %2648 = vperm.xlu0 %2647, %v736
      %v2649 = vpop.permute.xlu0 %2648
      %2651 = vset.pattern.permute.xlu0 5
      %2652 = vperm.xlu0 %2651, %v737
      %v2653 = vpop.permute.xlu0 %2652
      %2655 = vset.pattern.permute.xlu0 5
      %2656 = vperm.xlu0 %2655, %v738
      %v2657 = vpop.permute.xlu0 %2656
      %2659 = vset.pattern.permute.xlu0 5
      %2660 = vperm.xlu0 %2659, %v739
      %v2661 = vpop.permute.xlu0 %2660
      %2663 = vset.pattern.permute.xlu0 5
      %2664 = vperm.xlu0 %2663, %v740
      %v2665 = vpop.permute.xlu0 %2664
      %2667 = vset.pattern.permute.xlu0 5
      %2668 = vperm.xlu0 %2667, %v741
      %v2669 = vpop.permute.xlu0 %2668
      %2671 = vset.pattern.permute.xlu0 5
      %2672 = vperm.xlu0 %2671, %v742
      %v2673 = vpop.permute.xlu0 %2672
      %2675 = vset.pattern.permute.xlu0 5
      %2676 = vperm.xlu0 %2675, %v743
      %v2677 = vpop.permute.xlu0 %2676
      %v2679 = vmul.f32 %v2649, %v2631
      %v2680 = vmul.f32 %v2649, %v2632
      %v2681 = vmul.f32 %v2653, %v2633
      %v2682 = vmul.f32 %v2653, %v2634
      %v2683 = vmul.f32 %v2657, %v2635
      %v2684 = vmul.f32 %v2657, %v2636
      %v2685 = vmul.f32 %v2661, %v2637
      %v2686 = vmul.f32 %v2661, %v2638
      %v2687 = vmul.f32 %v2665, %v2639
      %v2688 = vmul.f32 %v2665, %v2640
      %v2689 = vmul.f32 %v2669, %v2641
      %v2690 = vmul.f32 %v2669, %v2642
      %v2691 = vmul.f32 %v2673, %v2643
      %v2692 = vmul.f32 %v2673, %v2644
      %v2693 = vmul.f32 %v2677, %v2645
      %v2694 = vmul.f32 %v2677, %v2646
      %v2695 = vadd.f32 %v2425, %v2679
      %v2696 = vadd.f32 %v2426, %v2680
      %v2697 = vadd.f32 %v2427, %v2681
      %v2698 = vadd.f32 %v2428, %v2682
      %v2699 = vadd.f32 %v2429, %v2683
      %v2700 = vadd.f32 %v2430, %v2684
      %v2701 = vadd.f32 %v2431, %v2685
      %v2702 = vadd.f32 %v2432, %v2686
      %v2703 = vadd.f32 %v2433, %v2687
      %v2704 = vadd.f32 %v2434, %v2688
      %v2705 = vadd.f32 %v2435, %v2689
      %v2706 = vadd.f32 %v2436, %v2690
      %v2707 = vadd.f32 %v2437, %v2691
      %v2708 = vadd.f32 %v2438, %v2692
      %v2709 = vadd.f32 %v2439, %v2693
      %v2710 = vadd.f32 %v2440, %v2694
      %2711 = vrot.lane.b32.xlu0 %v658, 127
      %v2712 = vpop.permute.xlu0 %2711
      %2713 = vrot.lane.b32.xlu0 %v662, 127
      %v2714 = vpop.permute.xlu0 %2713
      %2715 = vrot.lane.b32.xlu0 %v668, 127
      %v2716 = vpop.permute.xlu0 %2715
      %2717 = vrot.lane.b32.xlu0 %v672, 127
      %v2718 = vpop.permute.xlu0 %2717
      %2719 = vrot.lane.b32.xlu0 %v678, 127
      %v2720 = vpop.permute.xlu0 %2719
      %2721 = vrot.lane.b32.xlu0 %v682, 127
      %v2722 = vpop.permute.xlu0 %2721
      %2723 = vrot.lane.b32.xlu0 %v688, 127
      %v2724 = vpop.permute.xlu0 %2723
      %2725 = vrot.lane.b32.xlu0 %v692, 127
      %v2726 = vpop.permute.xlu0 %2725
      %2727 = vrot.lane.b32.xlu0 %v698, 127
      %v2728 = vpop.permute.xlu0 %2727
      %2729 = vrot.lane.b32.xlu0 %v702, 127
      %v2730 = vpop.permute.xlu0 %2729
      %2731 = vrot.lane.b32.xlu0 %v708, 127
      %v2732 = vpop.permute.xlu0 %2731
      %2733 = vrot.lane.b32.xlu0 %v712, 127
      %v2734 = vpop.permute.xlu0 %2733
      %2735 = vrot.lane.b32.xlu0 %v718, 127
      %v2736 = vpop.permute.xlu0 %2735
      %2737 = vrot.lane.b32.xlu0 %v722, 127
      %v2738 = vpop.permute.xlu0 %2737
      %2739 = vrot.lane.b32.xlu0 %v728, 127
      %v2740 = vpop.permute.xlu0 %2739
      %2741 = vrot.lane.b32.xlu0 %v732, 127
      %v2742 = vpop.permute.xlu0 %2741
      %2743 = vrot.lane.b32.xlu0 %v660, 127
      %v2744 = vpop.permute.xlu0 %2743
      %2745 = vrot.lane.b32.xlu0 %v664, 127
      %v2746 = vpop.permute.xlu0 %2745
      %2747 = vrot.lane.b32.xlu0 %v670, 127
      %v2748 = vpop.permute.xlu0 %2747
      %2749 = vrot.lane.b32.xlu0 %v674, 127
      %v2750 = vpop.permute.xlu0 %2749
      %2751 = vrot.lane.b32.xlu0 %v680, 127
      %v2752 = vpop.permute.xlu0 %2751
      %2753 = vrot.lane.b32.xlu0 %v684, 127
      %v2754 = vpop.permute.xlu0 %2753
      %2755 = vrot.lane.b32.xlu0 %v690, 127
      %v2756 = vpop.permute.xlu0 %2755
      %2757 = vrot.lane.b32.xlu0 %v694, 127
      %v2758 = vpop.permute.xlu0 %2757
      %2759 = vrot.lane.b32.xlu0 %v700, 127
      %v2760 = vpop.permute.xlu0 %2759
      %2761 = vrot.lane.b32.xlu0 %v704, 127
      %v2762 = vpop.permute.xlu0 %2761
      %2763 = vrot.lane.b32.xlu0 %v710, 127
      %v2764 = vpop.permute.xlu0 %2763
      %2765 = vrot.lane.b32.xlu0 %v714, 127
      %v2766 = vpop.permute.xlu0 %2765
      %2767 = vrot.lane.b32.xlu0 %v720, 127
      %v2768 = vpop.permute.xlu0 %2767
      %2769 = vrot.lane.b32.xlu0 %v724, 127
      %v2770 = vpop.permute.xlu0 %2769
      %2771 = vrot.lane.b32.xlu0 %v730, 127
      %v2772 = vpop.permute.xlu0 %2771
      %2773 = vrot.lane.b32.xlu0 %v734, 127
      %v2774 = vpop.permute.xlu0 %2773
      %v2775 = vsel %vm2603, %v2712, %v2744
      %v2776 = vsel %vm2603, %v2714, %v2746
      %v2777 = vsel %vm2603, %v2716, %v2748
      %v2778 = vsel %vm2603, %v2718, %v2750
      %v2779 = vsel %vm2603, %v2720, %v2752
      %v2780 = vsel %vm2603, %v2722, %v2754
      %v2781 = vsel %vm2603, %v2724, %v2756
      %v2782 = vsel %vm2603, %v2726, %v2758
      %v2783 = vsel %vm2603, %v2728, %v2760
      %v2784 = vsel %vm2603, %v2730, %v2762
      %v2785 = vsel %vm2603, %v2732, %v2764
      %v2786 = vsel %vm2603, %v2734, %v2766
      %v2787 = vsel %vm2603, %v2736, %v2768
      %v2788 = vsel %vm2603, %v2738, %v2770
      %v2789 = vsel %vm2603, %v2740, %v2772
      %v2790 = vsel %vm2603, %v2742, %v2774
      %v2791 = vsel %vm2603, %v2744, %v2712
      %v2792 = vsel %vm2603, %v2746, %v2714
      %v2793 = vsel %vm2603, %v2748, %v2716
      %v2794 = vsel %vm2603, %v2750, %v2718
      %v2795 = vsel %vm2603, %v2752, %v2720
      %v2796 = vsel %vm2603, %v2754, %v2722
      %v2797 = vsel %vm2603, %v2756, %v2724
      %v2798 = vsel %vm2603, %v2758, %v2726
      %v2799 = vsel %vm2603, %v2760, %v2728
      %v2800 = vsel %vm2603, %v2762, %v2730
      %v2801 = vsel %vm2603, %v2764, %v2732
      %v2802 = vsel %vm2603, %v2766, %v2734
      %v2803 = vsel %vm2603, %v2768, %v2736
      %v2804 = vsel %vm2603, %v2770, %v2738
      %v2805 = vsel %vm2603, %v2772, %v2740
      %v2806 = vsel %vm2603, %v2774, %v2742
      %v2807 = vmul.f32 %v2775, %v2624
      %v2808 = vmul.f32 %v2791, %v2628
      %v2809 = vmul.f32 %v2776, %v2624
      %v2810 = vmul.f32 %v2792, %v2628
      %v2811 = vmul.f32 %v2777, %v2624
      %v2812 = vmul.f32 %v2793, %v2628
      %v2813 = vmul.f32 %v2778, %v2624
      %v2814 = vmul.f32 %v2794, %v2628
      %v2815 = vmul.f32 %v2779, %v2624
      %v2816 = vmul.f32 %v2795, %v2628
      %v2817 = vmul.f32 %v2780, %v2624
      %v2818 = vmul.f32 %v2796, %v2628
      %v2819 = vmul.f32 %v2781, %v2624
      %v2820 = vmul.f32 %v2797, %v2628
      %v2821 = vmul.f32 %v2782, %v2624
      %v2822 = vmul.f32 %v2798, %v2628
      %v2823 = vmul.f32 %v2783, %v2624
      %v2824 = vmul.f32 %v2799, %v2628
      %v2825 = vmul.f32 %v2784, %v2624
      %v2826 = vmul.f32 %v2800, %v2628
      %v2827 = vmul.f32 %v2785, %v2624
      %v2828 = vmul.f32 %v2801, %v2628
      %v2829 = vmul.f32 %v2786, %v2624
      %v2830 = vmul.f32 %v2802, %v2628
      %v2831 = vmul.f32 %v2787, %v2624
      %v2832 = vmul.f32 %v2803, %v2628
      %v2833 = vmul.f32 %v2788, %v2624
      %v2834 = vmul.f32 %v2804, %v2628
      %v2835 = vmul.f32 %v2789, %v2624
      %v2836 = vmul.f32 %v2805, %v2628
      %v2837 = vmul.f32 %v2790, %v2624
      %v2838 = vmul.f32 %v2806, %v2628
      %2839 = vset.pattern.permute.xlu0 5
      %2840 = vperm.xlu0 %2839, %v744
      %v2841 = vpop.permute.xlu0 %2840
      %2843 = vset.pattern.permute.xlu0 5
      %2844 = vperm.xlu0 %2843, %v745
      %v2845 = vpop.permute.xlu0 %2844
      %2847 = vset.pattern.permute.xlu0 5
      %2848 = vperm.xlu0 %2847, %v746
      %v2849 = vpop.permute.xlu0 %2848
      %2851 = vset.pattern.permute.xlu0 5
      %2852 = vperm.xlu0 %2851, %v747
      %v2853 = vpop.permute.xlu0 %2852
      %2855 = vset.pattern.permute.xlu0 5
      %2856 = vperm.xlu0 %2855, %v748
      %v2857 = vpop.permute.xlu0 %2856
      %2859 = vset.pattern.permute.xlu0 5
      %2860 = vperm.xlu0 %2859, %v749
      %v2861 = vpop.permute.xlu0 %2860
      %2863 = vset.pattern.permute.xlu0 5
      %2864 = vperm.xlu0 %2863, %v750
      %v2865 = vpop.permute.xlu0 %2864
      %2867 = vset.pattern.permute.xlu0 5
      %2868 = vperm.xlu0 %2867, %v751
      %v2869 = vpop.permute.xlu0 %2868
      %2871 = vset.pattern.permute.xlu0 5
      %2872 = vperm.xlu0 %2871, %v752
      %v2873 = vpop.permute.xlu0 %2872
      %2875 = vset.pattern.permute.xlu0 5
      %2876 = vperm.xlu0 %2875, %v753
      %v2877 = vpop.permute.xlu0 %2876
      %2879 = vset.pattern.permute.xlu0 5
      %2880 = vperm.xlu0 %2879, %v754
      %v2881 = vpop.permute.xlu0 %2880
      %2883 = vset.pattern.permute.xlu0 5
      %2884 = vperm.xlu0 %2883, %v755
      %v2885 = vpop.permute.xlu0 %2884
      %2887 = vset.pattern.permute.xlu0 5
      %2888 = vperm.xlu0 %2887, %v756
      %v2889 = vpop.permute.xlu0 %2888
      %2891 = vset.pattern.permute.xlu0 5
      %2892 = vperm.xlu0 %2891, %v757
      %v2893 = vpop.permute.xlu0 %2892
      %2895 = vset.pattern.permute.xlu0 5
      %2896 = vperm.xlu0 %2895, %v758
      %v2897 = vpop.permute.xlu0 %2896
      %2899 = vset.pattern.permute.xlu0 5
      %2900 = vperm.xlu0 %2899, %v759
      %v2901 = vpop.permute.xlu0 %2900
      %v2903 = vmul.f32 %v2841, %v2807
      %v2904 = vmul.f32 %v2841, %v2808
      %v2905 = vmul.f32 %v2845, %v2809
      %v2906 = vmul.f32 %v2845, %v2810
      %v2907 = vmul.f32 %v2849, %v2811
      %v2908 = vmul.f32 %v2849, %v2812
      %v2909 = vmul.f32 %v2853, %v2813
      %v2910 = vmul.f32 %v2853, %v2814
      %v2911 = vmul.f32 %v2857, %v2815
      %v2912 = vmul.f32 %v2857, %v2816
      %v2913 = vmul.f32 %v2861, %v2817
      %v2914 = vmul.f32 %v2861, %v2818
      %v2915 = vmul.f32 %v2865, %v2819
      %v2916 = vmul.f32 %v2865, %v2820
      %v2917 = vmul.f32 %v2869, %v2821
      %v2918 = vmul.f32 %v2869, %v2822
      %v2919 = vmul.f32 %v2873, %v2823
      %v2920 = vmul.f32 %v2873, %v2824
      %v2921 = vmul.f32 %v2877, %v2825
      %v2922 = vmul.f32 %v2877, %v2826
      %v2923 = vmul.f32 %v2881, %v2827
      %v2924 = vmul.f32 %v2881, %v2828
      %v2925 = vmul.f32 %v2885, %v2829
      %v2926 = vmul.f32 %v2885, %v2830
      %v2927 = vmul.f32 %v2889, %v2831
      %v2928 = vmul.f32 %v2889, %v2832
      %v2929 = vmul.f32 %v2893, %v2833
      %v2930 = vmul.f32 %v2893, %v2834
      %v2931 = vmul.f32 %v2897, %v2835
      %v2932 = vmul.f32 %v2897, %v2836
      %v2933 = vmul.f32 %v2901, %v2837
      %v2934 = vmul.f32 %v2901, %v2838
      %v2935 = vadd.f32 %v2537, %v2903
      %v2936 = vadd.f32 %v2538, %v2904
      %v2937 = vadd.f32 %v2539, %v2905
      %v2938 = vadd.f32 %v2540, %v2906
      %v2939 = vadd.f32 %v2541, %v2907
      %v2940 = vadd.f32 %v2542, %v2908
      %v2941 = vadd.f32 %v2543, %v2909
      %v2942 = vadd.f32 %v2544, %v2910
      %v2943 = vadd.f32 %v2545, %v2911
      %v2944 = vadd.f32 %v2546, %v2912
      %v2945 = vadd.f32 %v2547, %v2913
      %v2946 = vadd.f32 %v2548, %v2914
      %v2947 = vadd.f32 %v2549, %v2915
      %v2948 = vadd.f32 %v2550, %v2916
      %v2949 = vadd.f32 %v2551, %v2917
      %v2950 = vadd.f32 %v2552, %v2918
      %v2951 = vadd.f32 %v2553, %v2919
      %v2952 = vadd.f32 %v2554, %v2920
      %v2953 = vadd.f32 %v2555, %v2921
      %v2954 = vadd.f32 %v2556, %v2922
      %v2955 = vadd.f32 %v2557, %v2923
      %v2956 = vadd.f32 %v2558, %v2924
      %v2957 = vadd.f32 %v2559, %v2925
      %v2958 = vadd.f32 %v2560, %v2926
      %v2959 = vadd.f32 %v2561, %v2927
      %v2960 = vadd.f32 %v2562, %v2928
      %v2961 = vadd.f32 %v2563, %v2929
      %v2962 = vadd.f32 %v2564, %v2930
      %v2963 = vadd.f32 %v2565, %v2931
      %v2964 = vadd.f32 %v2566, %v2932
      %v2965 = vadd.f32 %v2567, %v2933
      %v2966 = vadd.f32 %v2568, %v2934
      %s2967 = scalar_lea.vmem %s8, 12
      %v2968 = vld [vmem:[%s2967] sm:$0x3]
      %2969 = vrot.lane.b32.xlu0 %v505, 113
      %v2970 = vpop.permute.xlu0 %2969
      %2971 = vrot.lane.b32.xlu0 %v509, 113
      %v2972 = vpop.permute.xlu0 %2971
      %2973 = vrot.lane.b32.xlu0 %v515, 113
      %v2974 = vpop.permute.xlu0 %2973
      %2975 = vrot.lane.b32.xlu0 %v519, 113
      %v2976 = vpop.permute.xlu0 %2975
      %2977 = vrot.lane.b32.xlu0 %v525, 113
      %v2978 = vpop.permute.xlu0 %2977
      %2979 = vrot.lane.b32.xlu0 %v529, 113
      %v2980 = vpop.permute.xlu0 %2979
      %2981 = vrot.lane.b32.xlu0 %v535, 113
      %v2982 = vpop.permute.xlu0 %2981
      %2983 = vrot.lane.b32.xlu0 %v539, 113
      %v2984 = vpop.permute.xlu0 %2983
      %2985 = vrot.lane.b32.xlu0 %v507, 113
      %v2986 = vpop.permute.xlu0 %2985
      %2987 = vrot.lane.b32.xlu0 %v511, 113
      %v2988 = vpop.permute.xlu0 %2987
      %2989 = vrot.lane.b32.xlu0 %v517, 113
      %v2990 = vpop.permute.xlu0 %2989
      %2991 = vrot.lane.b32.xlu0 %v521, 113
      %v2992 = vpop.permute.xlu0 %2991
      %2993 = vrot.lane.b32.xlu0 %v527, 113
      %v2994 = vpop.permute.xlu0 %2993
      %2995 = vrot.lane.b32.xlu0 %v531, 113
      %v2996 = vpop.permute.xlu0 %2995
      %2997 = vrot.lane.b32.xlu0 %v537, 113
      %v2998 = vpop.permute.xlu0 %2997
      %2999 = vrot.lane.b32.xlu0 %v541, 113
      %v3000 = vpop.permute.xlu0 %2999
      %vm3001 = vcmp.lt.s32.totalorder %v794, 113
      %v3002 = vsel %vm3001, %v2970, %v2986
      %v3003 = vsel %vm3001, %v2972, %v2988
      %v3004 = vsel %vm3001, %v2974, %v2990
      %v3005 = vsel %vm3001, %v2976, %v2992
      %v3006 = vsel %vm3001, %v2978, %v2994
      %v3007 = vsel %vm3001, %v2980, %v2996
      %v3008 = vsel %vm3001, %v2982, %v2998
      %v3009 = vsel %vm3001, %v2984, %v3000
      %v3010 = vsel %vm3001, %v2986, %v2970
      %v3011 = vsel %vm3001, %v2988, %v2972
      %v3012 = vsel %vm3001, %v2990, %v2974
      %v3013 = vsel %vm3001, %v2992, %v2976
      %v3014 = vsel %vm3001, %v2994, %v2978
      %v3015 = vsel %vm3001, %v2996, %v2980
      %v3016 = vsel %vm3001, %v2998, %v2982
      %v3017 = vsel %vm3001, %v3000, %v2984
      %v3019 = vlaneseq
      %v3020 = vshrl.u32 %v3019, 7
      %v3021 = vsub.s32 0, %v3020
      %v3022 = vrot.slane %v2968, %v3021
      %v3023 = vlaneseq
      %v3024 = vshrl.u32 %v3023, 7
      %v3025 = vsub.s32 1, %v3024
      %v3026 = vrot.slane %v2968, %v3025
      %v3029 = vmul.f32 %v3002, %v3022
      %v3030 = vmul.f32 %v3010, %v3026
      %v3031 = vmul.f32 %v3003, %v3022
      %v3032 = vmul.f32 %v3011, %v3026
      %v3033 = vmul.f32 %v3004, %v3022
      %v3034 = vmul.f32 %v3012, %v3026
      %v3035 = vmul.f32 %v3005, %v3022
      %v3036 = vmul.f32 %v3013, %v3026
      %v3037 = vmul.f32 %v3006, %v3022
      %v3038 = vmul.f32 %v3014, %v3026
      %v3039 = vmul.f32 %v3007, %v3022
      %v3040 = vmul.f32 %v3015, %v3026
      %v3041 = vmul.f32 %v3008, %v3022
      %v3042 = vmul.f32 %v3016, %v3026
      %v3043 = vmul.f32 %v3009, %v3022
      %v3044 = vmul.f32 %v3017, %v3026
      %3045 = vset.pattern.permute.xlu0 6
      %3046 = vperm.xlu0 %3045, %v736
      %v3047 = vpop.permute.xlu0 %3046
      %3049 = vset.pattern.permute.xlu0 6
      %3050 = vperm.xlu0 %3049, %v737
      %v3051 = vpop.permute.xlu0 %3050
      %3053 = vset.pattern.permute.xlu0 6
      %3054 = vperm.xlu0 %3053, %v738
      %v3055 = vpop.permute.xlu0 %3054
      %3057 = vset.pattern.permute.xlu0 6
      %3058 = vperm.xlu0 %3057, %v739
      %v3059 = vpop.permute.xlu0 %3058
      %3061 = vset.pattern.permute.xlu0 6
      %3062 = vperm.xlu0 %3061, %v740
      %v3063 = vpop.permute.xlu0 %3062
      %3065 = vset.pattern.permute.xlu0 6
      %3066 = vperm.xlu0 %3065, %v741
      %v3067 = vpop.permute.xlu0 %3066
      %3069 = vset.pattern.permute.xlu0 6
      %3070 = vperm.xlu0 %3069, %v742
      %v3071 = vpop.permute.xlu0 %3070
      %3073 = vset.pattern.permute.xlu0 6
      %3074 = vperm.xlu0 %3073, %v743
      %v3075 = vpop.permute.xlu0 %3074
      %v3077 = vmul.f32 %v3047, %v3029
      %v3078 = vmul.f32 %v3047, %v3030
      %v3079 = vmul.f32 %v3051, %v3031
      %v3080 = vmul.f32 %v3051, %v3032
      %v3081 = vmul.f32 %v3055, %v3033
      %v3082 = vmul.f32 %v3055, %v3034
      %v3083 = vmul.f32 %v3059, %v3035
      %v3084 = vmul.f32 %v3059, %v3036
      %v3085 = vmul.f32 %v3063, %v3037
      %v3086 = vmul.f32 %v3063, %v3038
      %v3087 = vmul.f32 %v3067, %v3039
      %v3088 = vmul.f32 %v3067, %v3040
      %v3089 = vmul.f32 %v3071, %v3041
      %v3090 = vmul.f32 %v3071, %v3042
      %v3091 = vmul.f32 %v3075, %v3043
      %v3092 = vmul.f32 %v3075, %v3044
      %v3093 = vadd.f32 %v2695, %v3077
      %v3094 = vadd.f32 %v2696, %v3078
      %v3095 = vadd.f32 %v2697, %v3079
      %v3096 = vadd.f32 %v2698, %v3080
      %v3097 = vadd.f32 %v2699, %v3081
      %v3098 = vadd.f32 %v2700, %v3082
      %v3099 = vadd.f32 %v2701, %v3083
      %v3100 = vadd.f32 %v2702, %v3084
      %v3101 = vadd.f32 %v2703, %v3085
      %v3102 = vadd.f32 %v2704, %v3086
      %v3103 = vadd.f32 %v2705, %v3087
      %v3104 = vadd.f32 %v2706, %v3088
      %v3105 = vadd.f32 %v2707, %v3089
      %v3106 = vadd.f32 %v2708, %v3090
      %v3107 = vadd.f32 %v2709, %v3091
      %v3108 = vadd.f32 %v2710, %v3092
      %3109 = vrot.lane.b32.xlu0 %v658, 113
      %v3110 = vpop.permute.xlu0 %3109
      %3111 = vrot.lane.b32.xlu0 %v662, 113
      %v3112 = vpop.permute.xlu0 %3111
      %3113 = vrot.lane.b32.xlu0 %v668, 113
      %v3114 = vpop.permute.xlu0 %3113
      %3115 = vrot.lane.b32.xlu0 %v672, 113
      %v3116 = vpop.permute.xlu0 %3115
      %3117 = vrot.lane.b32.xlu0 %v678, 113
      %v3118 = vpop.permute.xlu0 %3117
      %3119 = vrot.lane.b32.xlu0 %v682, 113
      %v3120 = vpop.permute.xlu0 %3119
      %3121 = vrot.lane.b32.xlu0 %v688, 113
      %v3122 = vpop.permute.xlu0 %3121
      %3123 = vrot.lane.b32.xlu0 %v692, 113
      %v3124 = vpop.permute.xlu0 %3123
      %3125 = vrot.lane.b32.xlu0 %v698, 113
      %v3126 = vpop.permute.xlu0 %3125
      %3127 = vrot.lane.b32.xlu0 %v702, 113
      %v3128 = vpop.permute.xlu0 %3127
      %3129 = vrot.lane.b32.xlu0 %v708, 113
      %v3130 = vpop.permute.xlu0 %3129
      %3131 = vrot.lane.b32.xlu0 %v712, 113
      %v3132 = vpop.permute.xlu0 %3131
      %3133 = vrot.lane.b32.xlu0 %v718, 113
      %v3134 = vpop.permute.xlu0 %3133
      %3135 = vrot.lane.b32.xlu0 %v722, 113
      %v3136 = vpop.permute.xlu0 %3135
      %3137 = vrot.lane.b32.xlu0 %v728, 113
      %v3138 = vpop.permute.xlu0 %3137
      %3139 = vrot.lane.b32.xlu0 %v732, 113
      %v3140 = vpop.permute.xlu0 %3139
      %3141 = vrot.lane.b32.xlu0 %v660, 113
      %v3142 = vpop.permute.xlu0 %3141
      %3143 = vrot.lane.b32.xlu0 %v664, 113
      %v3144 = vpop.permute.xlu0 %3143
      %3145 = vrot.lane.b32.xlu0 %v670, 113
      %v3146 = vpop.permute.xlu0 %3145
      %3147 = vrot.lane.b32.xlu0 %v674, 113
      %v3148 = vpop.permute.xlu0 %3147
      %3149 = vrot.lane.b32.xlu0 %v680, 113
      %v3150 = vpop.permute.xlu0 %3149
      %3151 = vrot.lane.b32.xlu0 %v684, 113
      %v3152 = vpop.permute.xlu0 %3151
      %3153 = vrot.lane.b32.xlu0 %v690, 113
      %v3154 = vpop.permute.xlu0 %3153
      %3155 = vrot.lane.b32.xlu0 %v694, 113
      %v3156 = vpop.permute.xlu0 %3155
      %3157 = vrot.lane.b32.xlu0 %v700, 113
      %v3158 = vpop.permute.xlu0 %3157
      %3159 = vrot.lane.b32.xlu0 %v704, 113
      %v3160 = vpop.permute.xlu0 %3159
      %3161 = vrot.lane.b32.xlu0 %v710, 113
      %v3162 = vpop.permute.xlu0 %3161
      %3163 = vrot.lane.b32.xlu0 %v714, 113
      %v3164 = vpop.permute.xlu0 %3163
      %3165 = vrot.lane.b32.xlu0 %v720, 113
      %v3166 = vpop.permute.xlu0 %3165
      %3167 = vrot.lane.b32.xlu0 %v724, 113
      %v3168 = vpop.permute.xlu0 %3167
      %3169 = vrot.lane.b32.xlu0 %v730, 113
      %v3170 = vpop.permute.xlu0 %3169
      %3171 = vrot.lane.b32.xlu0 %v734, 113
      %v3172 = vpop.permute.xlu0 %3171
      %v3173 = vsel %vm3001, %v3110, %v3142
      %v3174 = vsel %vm3001, %v3112, %v3144
      %v3175 = vsel %vm3001, %v3114, %v3146
      %v3176 = vsel %vm3001, %v3116, %v3148
      %v3177 = vsel %vm3001, %v3118, %v3150
      %v3178 = vsel %vm3001, %v3120, %v3152
      %v3179 = vsel %vm3001, %v3122, %v3154
      %v3180 = vsel %vm3001, %v3124, %v3156
      %v3181 = vsel %vm3001, %v3126, %v3158
      %v3182 = vsel %vm3001, %v3128, %v3160
      %v3183 = vsel %vm3001, %v3130, %v3162
      %v3184 = vsel %vm3001, %v3132, %v3164
      %v3185 = vsel %vm3001, %v3134, %v3166
      %v3186 = vsel %vm3001, %v3136, %v3168
      %v3187 = vsel %vm3001, %v3138, %v3170
      %v3188 = vsel %vm3001, %v3140, %v3172
      %v3189 = vsel %vm3001, %v3142, %v3110
      %v3190 = vsel %vm3001, %v3144, %v3112
      %v3191 = vsel %vm3001, %v3146, %v3114
      %v3192 = vsel %vm3001, %v3148, %v3116
      %v3193 = vsel %vm3001, %v3150, %v3118
      %v3194 = vsel %vm3001, %v3152, %v3120
      %v3195 = vsel %vm3001, %v3154, %v3122
      %v3196 = vsel %vm3001, %v3156, %v3124
      %v3197 = vsel %vm3001, %v3158, %v3126
      %v3198 = vsel %vm3001, %v3160, %v3128
      %v3199 = vsel %vm3001, %v3162, %v3130
      %v3200 = vsel %vm3001, %v3164, %v3132
      %v3201 = vsel %vm3001, %v3166, %v3134
      %v3202 = vsel %vm3001, %v3168, %v3136
      %v3203 = vsel %vm3001, %v3170, %v3138
      %v3204 = vsel %vm3001, %v3172, %v3140
      %v3205 = vmul.f32 %v3173, %v3022
      %v3206 = vmul.f32 %v3189, %v3026
      %v3207 = vmul.f32 %v3174, %v3022
      %v3208 = vmul.f32 %v3190, %v3026
      %v3209 = vmul.f32 %v3175, %v3022
      %v3210 = vmul.f32 %v3191, %v3026
      %v3211 = vmul.f32 %v3176, %v3022
      %v3212 = vmul.f32 %v3192, %v3026
      %v3213 = vmul.f32 %v3177, %v3022
      %v3214 = vmul.f32 %v3193, %v3026
      %v3215 = vmul.f32 %v3178, %v3022
      %v3216 = vmul.f32 %v3194, %v3026
      %v3217 = vmul.f32 %v3179, %v3022
      %v3218 = vmul.f32 %v3195, %v3026
      %v3219 = vmul.f32 %v3180, %v3022
      %v3220 = vmul.f32 %v3196, %v3026
      %v3221 = vmul.f32 %v3181, %v3022
      %v3222 = vmul.f32 %v3197, %v3026
      %v3223 = vmul.f32 %v3182, %v3022
      %v3224 = vmul.f32 %v3198, %v3026
      %v3225 = vmul.f32 %v3183, %v3022
      %v3226 = vmul.f32 %v3199, %v3026
      %v3227 = vmul.f32 %v3184, %v3022
      %v3228 = vmul.f32 %v3200, %v3026
      %v3229 = vmul.f32 %v3185, %v3022
      %v3230 = vmul.f32 %v3201, %v3026
      %v3231 = vmul.f32 %v3186, %v3022
      %v3232 = vmul.f32 %v3202, %v3026
      %v3233 = vmul.f32 %v3187, %v3022
      %v3234 = vmul.f32 %v3203, %v3026
      %v3235 = vmul.f32 %v3188, %v3022
      %v3236 = vmul.f32 %v3204, %v3026
      %3237 = vset.pattern.permute.xlu0 6
      %3238 = vperm.xlu0 %3237, %v744
      %v3239 = vpop.permute.xlu0 %3238
      %3241 = vset.pattern.permute.xlu0 6
      %3242 = vperm.xlu0 %3241, %v745
      %v3243 = vpop.permute.xlu0 %3242
      %3245 = vset.pattern.permute.xlu0 6
      %3246 = vperm.xlu0 %3245, %v746
      %v3247 = vpop.permute.xlu0 %3246
      %3249 = vset.pattern.permute.xlu0 6
      %3250 = vperm.xlu0 %3249, %v747
      %v3251 = vpop.permute.xlu0 %3250
      %3253 = vset.pattern.permute.xlu0 6
      %3254 = vperm.xlu0 %3253, %v748
      %v3255 = vpop.permute.xlu0 %3254
      %3257 = vset.pattern.permute.xlu0 6
      %3258 = vperm.xlu0 %3257, %v749
      %v3259 = vpop.permute.xlu0 %3258
      %3261 = vset.pattern.permute.xlu0 6
      %3262 = vperm.xlu0 %3261, %v750
      %v3263 = vpop.permute.xlu0 %3262
      %3265 = vset.pattern.permute.xlu0 6
      %3266 = vperm.xlu0 %3265, %v751
      %v3267 = vpop.permute.xlu0 %3266
      %3269 = vset.pattern.permute.xlu0 6
      %3270 = vperm.xlu0 %3269, %v752
      %v3271 = vpop.permute.xlu0 %3270
      %3273 = vset.pattern.permute.xlu0 6
      %3274 = vperm.xlu0 %3273, %v753
      %v3275 = vpop.permute.xlu0 %3274
      %3277 = vset.pattern.permute.xlu0 6
      %3278 = vperm.xlu0 %3277, %v754
      %v3279 = vpop.permute.xlu0 %3278
      %3281 = vset.pattern.permute.xlu0 6
      %3282 = vperm.xlu0 %3281, %v755
      %v3283 = vpop.permute.xlu0 %3282
      %3285 = vset.pattern.permute.xlu0 6
      %3286 = vperm.xlu0 %3285, %v756
      %v3287 = vpop.permute.xlu0 %3286
      %3289 = vset.pattern.permute.xlu0 6
      %3290 = vperm.xlu0 %3289, %v757
      %v3291 = vpop.permute.xlu0 %3290
      %3293 = vset.pattern.permute.xlu0 6
      %3294 = vperm.xlu0 %3293, %v758
      %v3295 = vpop.permute.xlu0 %3294
      %3297 = vset.pattern.permute.xlu0 6
      %3298 = vperm.xlu0 %3297, %v759
      %v3299 = vpop.permute.xlu0 %3298
      %v3301 = vmul.f32 %v3239, %v3205
      %v3302 = vmul.f32 %v3239, %v3206
      %v3303 = vmul.f32 %v3243, %v3207
      %v3304 = vmul.f32 %v3243, %v3208
      %v3305 = vmul.f32 %v3247, %v3209
      %v3306 = vmul.f32 %v3247, %v3210
      %v3307 = vmul.f32 %v3251, %v3211
      %v3308 = vmul.f32 %v3251, %v3212
      %v3309 = vmul.f32 %v3255, %v3213
      %v3310 = vmul.f32 %v3255, %v3214
      %v3311 = vmul.f32 %v3259, %v3215
      %v3312 = vmul.f32 %v3259, %v3216
      %v3313 = vmul.f32 %v3263, %v3217
      %v3314 = vmul.f32 %v3263, %v3218
      %v3315 = vmul.f32 %v3267, %v3219
      %v3316 = vmul.f32 %v3267, %v3220
      %v3317 = vmul.f32 %v3271, %v3221
      %v3318 = vmul.f32 %v3271, %v3222
      %v3319 = vmul.f32 %v3275, %v3223
      %v3320 = vmul.f32 %v3275, %v3224
      %v3321 = vmul.f32 %v3279, %v3225
      %v3322 = vmul.f32 %v3279, %v3226
      %v3323 = vmul.f32 %v3283, %v3227
      %v3324 = vmul.f32 %v3283, %v3228
      %v3325 = vmul.f32 %v3287, %v3229
      %v3326 = vmul.f32 %v3287, %v3230
      %v3327 = vmul.f32 %v3291, %v3231
      %v3328 = vmul.f32 %v3291, %v3232
      %v3329 = vmul.f32 %v3295, %v3233
      %v3330 = vmul.f32 %v3295, %v3234
      %v3331 = vmul.f32 %v3299, %v3235
      %v3332 = vmul.f32 %v3299, %v3236
      %v3333 = vadd.f32 %v2935, %v3301
      %v3334 = vadd.f32 %v2936, %v3302
      %v3335 = vadd.f32 %v2937, %v3303
      %v3336 = vadd.f32 %v2938, %v3304
      %v3337 = vadd.f32 %v2939, %v3305
      %v3338 = vadd.f32 %v2940, %v3306
      %v3339 = vadd.f32 %v2941, %v3307
      %v3340 = vadd.f32 %v2942, %v3308
      %v3341 = vadd.f32 %v2943, %v3309
      %v3342 = vadd.f32 %v2944, %v3310
      %v3343 = vadd.f32 %v2945, %v3311
      %v3344 = vadd.f32 %v2946, %v3312
      %v3345 = vadd.f32 %v2947, %v3313
      %v3346 = vadd.f32 %v2948, %v3314
      %v3347 = vadd.f32 %v2949, %v3315
      %v3348 = vadd.f32 %v2950, %v3316
      %v3349 = vadd.f32 %v2951, %v3317
      %v3350 = vadd.f32 %v2952, %v3318
      %v3351 = vadd.f32 %v2953, %v3319
      %v3352 = vadd.f32 %v2954, %v3320
      %v3353 = vadd.f32 %v2955, %v3321
      %v3354 = vadd.f32 %v2956, %v3322
      %v3355 = vadd.f32 %v2957, %v3323
      %v3356 = vadd.f32 %v2958, %v3324
      %v3357 = vadd.f32 %v2959, %v3325
      %v3358 = vadd.f32 %v2960, %v3326
      %v3359 = vadd.f32 %v2961, %v3327
      %v3360 = vadd.f32 %v2962, %v3328
      %v3361 = vadd.f32 %v2963, %v3329
      %v3362 = vadd.f32 %v2964, %v3330
      %v3363 = vadd.f32 %v2965, %v3331
      %v3364 = vadd.f32 %v2966, %v3332
      %s3365 = scalar_lea.vmem %s8, 14
      %v3366 = vld [vmem:[%s3365] sm:$0x3]
      %3367 = vrot.lane.b32.xlu0 %v505, 112
      %v3368 = vpop.permute.xlu0 %3367
      %3369 = vrot.lane.b32.xlu0 %v509, 112
      %v3370 = vpop.permute.xlu0 %3369
      %3371 = vrot.lane.b32.xlu0 %v515, 112
      %v3372 = vpop.permute.xlu0 %3371
      %3373 = vrot.lane.b32.xlu0 %v519, 112
      %v3374 = vpop.permute.xlu0 %3373
      %3375 = vrot.lane.b32.xlu0 %v525, 112
      %v3376 = vpop.permute.xlu0 %3375
      %3377 = vrot.lane.b32.xlu0 %v529, 112
      %v3378 = vpop.permute.xlu0 %3377
      %3379 = vrot.lane.b32.xlu0 %v535, 112
      %v3380 = vpop.permute.xlu0 %3379
      %3381 = vrot.lane.b32.xlu0 %v539, 112
      %v3382 = vpop.permute.xlu0 %3381
      %3383 = vrot.lane.b32.xlu0 %v507, 112
      %v3384 = vpop.permute.xlu0 %3383
      %3385 = vrot.lane.b32.xlu0 %v511, 112
      %v3386 = vpop.permute.xlu0 %3385
      %3387 = vrot.lane.b32.xlu0 %v517, 112
      %v3388 = vpop.permute.xlu0 %3387
      %3389 = vrot.lane.b32.xlu0 %v521, 112
      %v3390 = vpop.permute.xlu0 %3389
      %3391 = vrot.lane.b32.xlu0 %v527, 112
      %v3392 = vpop.permute.xlu0 %3391
      %3393 = vrot.lane.b32.xlu0 %v531, 112
      %v3394 = vpop.permute.xlu0 %3393
      %3395 = vrot.lane.b32.xlu0 %v537, 112
      %v3396 = vpop.permute.xlu0 %3395
      %3397 = vrot.lane.b32.xlu0 %v541, 112
      %v3398 = vpop.permute.xlu0 %3397
      %vm3399 = vcmp.lt.s32.totalorder %v794, 112
      %v3400 = vsel %vm3399, %v3368, %v3384
      %v3401 = vsel %vm3399, %v3370, %v3386
      %v3402 = vsel %vm3399, %v3372, %v3388
      %v3403 = vsel %vm3399, %v3374, %v3390
      %v3404 = vsel %vm3399, %v3376, %v3392
      %v3405 = vsel %vm3399, %v3378, %v3394
      %v3406 = vsel %vm3399, %v3380, %v3396
      %v3407 = vsel %vm3399, %v3382, %v3398
      %v3408 = vsel %vm3399, %v3384, %v3368
      %v3409 = vsel %vm3399, %v3386, %v3370
      %v3410 = vsel %vm3399, %v3388, %v3372
      %v3411 = vsel %vm3399, %v3390, %v3374
      %v3412 = vsel %vm3399, %v3392, %v3376
      %v3413 = vsel %vm3399, %v3394, %v3378
      %v3414 = vsel %vm3399, %v3396, %v3380
      %v3415 = vsel %vm3399, %v3398, %v3382
      %v3417 = vlaneseq
      %v3418 = vshrl.u32 %v3417, 7
      %v3419 = vsub.s32 0, %v3418
      %v3420 = vrot.slane %v3366, %v3419
      %v3421 = vlaneseq
      %v3422 = vshrl.u32 %v3421, 7
      %v3423 = vsub.s32 1, %v3422
      %v3424 = vrot.slane %v3366, %v3423
      %v3427 = vmul.f32 %v3400, %v3420
      %v3428 = vmul.f32 %v3408, %v3424
      %v3429 = vmul.f32 %v3401, %v3420
      %v3430 = vmul.f32 %v3409, %v3424
      %v3431 = vmul.f32 %v3402, %v3420
      %v3432 = vmul.f32 %v3410, %v3424
      %v3433 = vmul.f32 %v3403, %v3420
      %v3434 = vmul.f32 %v3411, %v3424
      %v3435 = vmul.f32 %v3404, %v3420
      %v3436 = vmul.f32 %v3412, %v3424
      %v3437 = vmul.f32 %v3405, %v3420
      %v3438 = vmul.f32 %v3413, %v3424
      %v3439 = vmul.f32 %v3406, %v3420
      %v3440 = vmul.f32 %v3414, %v3424
      %v3441 = vmul.f32 %v3407, %v3420
      %v3442 = vmul.f32 %v3415, %v3424
      %3443 = vset.pattern.permute.xlu0 7
      %3444 = vperm.xlu0 %3443, %v736
      %v3445 = vpop.permute.xlu0 %3444
      %3447 = vset.pattern.permute.xlu0 7
      %3448 = vperm.xlu0 %3447, %v737
      %v3449 = vpop.permute.xlu0 %3448
      %3451 = vset.pattern.permute.xlu0 7
      %3452 = vperm.xlu0 %3451, %v738
      %v3453 = vpop.permute.xlu0 %3452
      %3455 = vset.pattern.permute.xlu0 7
      %3456 = vperm.xlu0 %3455, %v739
      %v3457 = vpop.permute.xlu0 %3456
      %3459 = vset.pattern.permute.xlu0 7
      %3460 = vperm.xlu0 %3459, %v740
      %v3461 = vpop.permute.xlu0 %3460
      %3463 = vset.pattern.permute.xlu0 7
      %3464 = vperm.xlu0 %3463, %v741
      %v3465 = vpop.permute.xlu0 %3464
      %3467 = vset.pattern.permute.xlu0 7
      %3468 = vperm.xlu0 %3467, %v742
      %v3469 = vpop.permute.xlu0 %3468
      %3471 = vset.pattern.permute.xlu0 7
      %3472 = vperm.xlu0 %3471, %v743
      %v3473 = vpop.permute.xlu0 %3472
      %v3475 = vmul.f32 %v3445, %v3427
      %v3476 = vmul.f32 %v3445, %v3428
      %v3477 = vmul.f32 %v3449, %v3429
      %v3478 = vmul.f32 %v3449, %v3430
      %v3479 = vmul.f32 %v3453, %v3431
      %v3480 = vmul.f32 %v3453, %v3432
      %v3481 = vmul.f32 %v3457, %v3433
      %v3482 = vmul.f32 %v3457, %v3434
      %v3483 = vmul.f32 %v3461, %v3435
      %v3484 = vmul.f32 %v3461, %v3436
      %v3485 = vmul.f32 %v3465, %v3437
      %v3486 = vmul.f32 %v3465, %v3438
      %v3487 = vmul.f32 %v3469, %v3439
      %v3488 = vmul.f32 %v3469, %v3440
      %v3489 = vmul.f32 %v3473, %v3441
      %v3490 = vmul.f32 %v3473, %v3442
      %v3491 = vadd.f32 %v3093, %v3475
      %v3492 = vadd.f32 %v3094, %v3476
      %v3493 = vadd.f32 %v3095, %v3477
      %v3494 = vadd.f32 %v3096, %v3478
      %v3495 = vadd.f32 %v3097, %v3479
      %v3496 = vadd.f32 %v3098, %v3480
      %v3497 = vadd.f32 %v3099, %v3481
      %v3498 = vadd.f32 %v3100, %v3482
      %v3499 = vadd.f32 %v3101, %v3483
      %v3500 = vadd.f32 %v3102, %v3484
      %v3501 = vadd.f32 %v3103, %v3485
      %v3502 = vadd.f32 %v3104, %v3486
      %v3503 = vadd.f32 %v3105, %v3487
      %v3504 = vadd.f32 %v3106, %v3488
      %v3505 = vadd.f32 %v3107, %v3489
      %v3506 = vadd.f32 %v3108, %v3490
      %3507 = vrot.lane.b32.xlu0 %v658, 112
      %v3508 = vpop.permute.xlu0 %3507
      %3509 = vrot.lane.b32.xlu0 %v662, 112
      %v3510 = vpop.permute.xlu0 %3509
      %3511 = vrot.lane.b32.xlu0 %v668, 112
      %v3512 = vpop.permute.xlu0 %3511
      %3513 = vrot.lane.b32.xlu0 %v672, 112
      %v3514 = vpop.permute.xlu0 %3513
      %3515 = vrot.lane.b32.xlu0 %v678, 112
      %v3516 = vpop.permute.xlu0 %3515
      %3517 = vrot.lane.b32.xlu0 %v682, 112
      %v3518 = vpop.permute.xlu0 %3517
      %3519 = vrot.lane.b32.xlu0 %v688, 112
      %v3520 = vpop.permute.xlu0 %3519
      %3521 = vrot.lane.b32.xlu0 %v692, 112
      %v3522 = vpop.permute.xlu0 %3521
      %3523 = vrot.lane.b32.xlu0 %v698, 112
      %v3524 = vpop.permute.xlu0 %3523
      %3525 = vrot.lane.b32.xlu0 %v702, 112
      %v3526 = vpop.permute.xlu0 %3525
      %3527 = vrot.lane.b32.xlu0 %v708, 112
      %v3528 = vpop.permute.xlu0 %3527
      %3529 = vrot.lane.b32.xlu0 %v712, 112
      %v3530 = vpop.permute.xlu0 %3529
      %3531 = vrot.lane.b32.xlu0 %v718, 112
      %v3532 = vpop.permute.xlu0 %3531
      %3533 = vrot.lane.b32.xlu0 %v722, 112
      %v3534 = vpop.permute.xlu0 %3533
      %3535 = vrot.lane.b32.xlu0 %v728, 112
      %v3536 = vpop.permute.xlu0 %3535
      %3537 = vrot.lane.b32.xlu0 %v732, 112
      %v3538 = vpop.permute.xlu0 %3537
      %3539 = vrot.lane.b32.xlu0 %v660, 112
      %v3540 = vpop.permute.xlu0 %3539
      %3541 = vrot.lane.b32.xlu0 %v664, 112
      %v3542 = vpop.permute.xlu0 %3541
      %3543 = vrot.lane.b32.xlu0 %v670, 112
      %v3544 = vpop.permute.xlu0 %3543
      %3545 = vrot.lane.b32.xlu0 %v674, 112
      %v3546 = vpop.permute.xlu0 %3545
      %3547 = vrot.lane.b32.xlu0 %v680, 112
      %v3548 = vpop.permute.xlu0 %3547
      %3549 = vrot.lane.b32.xlu0 %v684, 112
      %v3550 = vpop.permute.xlu0 %3549
      %3551 = vrot.lane.b32.xlu0 %v690, 112
      %v3552 = vpop.permute.xlu0 %3551
      %3553 = vrot.lane.b32.xlu0 %v694, 112
      %v3554 = vpop.permute.xlu0 %3553
      %3555 = vrot.lane.b32.xlu0 %v700, 112
      %v3556 = vpop.permute.xlu0 %3555
      %3557 = vrot.lane.b32.xlu0 %v704, 112
      %v3558 = vpop.permute.xlu0 %3557
      %3559 = vrot.lane.b32.xlu0 %v710, 112
      %v3560 = vpop.permute.xlu0 %3559
      %3561 = vrot.lane.b32.xlu0 %v714, 112
      %v3562 = vpop.permute.xlu0 %3561
      %3563 = vrot.lane.b32.xlu0 %v720, 112
      %v3564 = vpop.permute.xlu0 %3563
      %3565 = vrot.lane.b32.xlu0 %v724, 112
      %v3566 = vpop.permute.xlu0 %3565
      %3567 = vrot.lane.b32.xlu0 %v730, 112
      %v3568 = vpop.permute.xlu0 %3567
      %3569 = vrot.lane.b32.xlu0 %v734, 112
      %v3570 = vpop.permute.xlu0 %3569
      %v3571 = vsel %vm3399, %v3508, %v3540
      %v3572 = vsel %vm3399, %v3510, %v3542
      %v3573 = vsel %vm3399, %v3512, %v3544
      %v3574 = vsel %vm3399, %v3514, %v3546
      %v3575 = vsel %vm3399, %v3516, %v3548
      %v3576 = vsel %vm3399, %v3518, %v3550
      %v3577 = vsel %vm3399, %v3520, %v3552
      %v3578 = vsel %vm3399, %v3522, %v3554
      %v3579 = vsel %vm3399, %v3524, %v3556
      %v3580 = vsel %vm3399, %v3526, %v3558
      %v3581 = vsel %vm3399, %v3528, %v3560
      %v3582 = vsel %vm3399, %v3530, %v3562
      %v3583 = vsel %vm3399, %v3532, %v3564
      %v3584 = vsel %vm3399, %v3534, %v3566
      %v3585 = vsel %vm3399, %v3536, %v3568
      %v3586 = vsel %vm3399, %v3538, %v3570
      %v3587 = vsel %vm3399, %v3540, %v3508
      %v3588 = vsel %vm3399, %v3542, %v3510
      %v3589 = vsel %vm3399, %v3544, %v3512
      %v3590 = vsel %vm3399, %v3546, %v3514
      %v3591 = vsel %vm3399, %v3548, %v3516
      %v3592 = vsel %vm3399, %v3550, %v3518
      %v3593 = vsel %vm3399, %v3552, %v3520
      %v3594 = vsel %vm3399, %v3554, %v3522
      %v3595 = vsel %vm3399, %v3556, %v3524
      %v3596 = vsel %vm3399, %v3558, %v3526
      %v3597 = vsel %vm3399, %v3560, %v3528
      %v3598 = vsel %vm3399, %v3562, %v3530
      %v3599 = vsel %vm3399, %v3564, %v3532
      %v3600 = vsel %vm3399, %v3566, %v3534
      %v3601 = vsel %vm3399, %v3568, %v3536
      %v3602 = vsel %vm3399, %v3570, %v3538
      %v3603 = vmul.f32 %v3571, %v3420
      %v3604 = vmul.f32 %v3587, %v3424
      %v3605 = vmul.f32 %v3572, %v3420
      %v3606 = vmul.f32 %v3588, %v3424
      %v3607 = vmul.f32 %v3573, %v3420
      %v3608 = vmul.f32 %v3589, %v3424
      %v3609 = vmul.f32 %v3574, %v3420
      %v3610 = vmul.f32 %v3590, %v3424
      %v3611 = vmul.f32 %v3575, %v3420
      %v3612 = vmul.f32 %v3591, %v3424
      %v3613 = vmul.f32 %v3576, %v3420
      %v3614 = vmul.f32 %v3592, %v3424
      %v3615 = vmul.f32 %v3577, %v3420
      %v3616 = vmul.f32 %v3593, %v3424
      %v3617 = vmul.f32 %v3578, %v3420
      %v3618 = vmul.f32 %v3594, %v3424
      %v3619 = vmul.f32 %v3579, %v3420
      %v3620 = vmul.f32 %v3595, %v3424
      %v3621 = vmul.f32 %v3580, %v3420
      %v3622 = vmul.f32 %v3596, %v3424
      %v3623 = vmul.f32 %v3581, %v3420
      %v3624 = vmul.f32 %v3597, %v3424
      %v3625 = vmul.f32 %v3582, %v3420
      %v3626 = vmul.f32 %v3598, %v3424
      %v3627 = vmul.f32 %v3583, %v3420
      %v3628 = vmul.f32 %v3599, %v3424
      %v3629 = vmul.f32 %v3584, %v3420
      %v3630 = vmul.f32 %v3600, %v3424
      %v3631 = vmul.f32 %v3585, %v3420
      %v3632 = vmul.f32 %v3601, %v3424
      %v3633 = vmul.f32 %v3586, %v3420
      %v3634 = vmul.f32 %v3602, %v3424
      %3635 = vset.pattern.permute.xlu0 7
      %3636 = vperm.xlu0 %3635, %v744
      %v3637 = vpop.permute.xlu0 %3636
      %3639 = vset.pattern.permute.xlu0 7
      %3640 = vperm.xlu0 %3639, %v745
      %v3641 = vpop.permute.xlu0 %3640
      %3643 = vset.pattern.permute.xlu0 7
      %3644 = vperm.xlu0 %3643, %v746
      %v3645 = vpop.permute.xlu0 %3644
      %3647 = vset.pattern.permute.xlu0 7
      %3648 = vperm.xlu0 %3647, %v747
      %v3649 = vpop.permute.xlu0 %3648
      %3651 = vset.pattern.permute.xlu0 7
      %3652 = vperm.xlu0 %3651, %v748
      %v3653 = vpop.permute.xlu0 %3652
      %3655 = vset.pattern.permute.xlu0 7
      %3656 = vperm.xlu0 %3655, %v749
      %v3657 = vpop.permute.xlu0 %3656
      %3659 = vset.pattern.permute.xlu0 7
      %3660 = vperm.xlu0 %3659, %v750
      %v3661 = vpop.permute.xlu0 %3660
      %3663 = vset.pattern.permute.xlu0 7
      %3664 = vperm.xlu0 %3663, %v751
      %v3665 = vpop.permute.xlu0 %3664
      %3667 = vset.pattern.permute.xlu0 7
      %3668 = vperm.xlu0 %3667, %v752
      %v3669 = vpop.permute.xlu0 %3668
      %3671 = vset.pattern.permute.xlu0 7
      %3672 = vperm.xlu0 %3671, %v753
      %v3673 = vpop.permute.xlu0 %3672
      %3675 = vset.pattern.permute.xlu0 7
      %3676 = vperm.xlu0 %3675, %v754
      %v3677 = vpop.permute.xlu0 %3676
      %3679 = vset.pattern.permute.xlu0 7
      %3680 = vperm.xlu0 %3679, %v755
      %v3681 = vpop.permute.xlu0 %3680
      %3683 = vset.pattern.permute.xlu0 7
      %3684 = vperm.xlu0 %3683, %v756
      %v3685 = vpop.permute.xlu0 %3684
      %3687 = vset.pattern.permute.xlu0 7
      %3688 = vperm.xlu0 %3687, %v757
      %v3689 = vpop.permute.xlu0 %3688
      %3691 = vset.pattern.permute.xlu0 7
      %3692 = vperm.xlu0 %3691, %v758
      %v3693 = vpop.permute.xlu0 %3692
      %3695 = vset.pattern.permute.xlu0 7
      %3696 = vperm.xlu0 %3695, %v759
      %v3697 = vpop.permute.xlu0 %3696
      %v3699 = vmul.f32 %v3637, %v3603
      %v3700 = vmul.f32 %v3637, %v3604
      %v3701 = vmul.f32 %v3641, %v3605
      %v3702 = vmul.f32 %v3641, %v3606
      %v3703 = vmul.f32 %v3645, %v3607
      %v3704 = vmul.f32 %v3645, %v3608
      %v3705 = vmul.f32 %v3649, %v3609
      %v3706 = vmul.f32 %v3649, %v3610
      %v3707 = vmul.f32 %v3653, %v3611
      %v3708 = vmul.f32 %v3653, %v3612
      %v3709 = vmul.f32 %v3657, %v3613
      %v3710 = vmul.f32 %v3657, %v3614
      %v3711 = vmul.f32 %v3661, %v3615
      %v3712 = vmul.f32 %v3661, %v3616
      %v3713 = vmul.f32 %v3665, %v3617
      %v3714 = vmul.f32 %v3665, %v3618
      %v3715 = vmul.f32 %v3669, %v3619
      %v3716 = vmul.f32 %v3669, %v3620
      %v3717 = vmul.f32 %v3673, %v3621
      %v3718 = vmul.f32 %v3673, %v3622
      %v3719 = vmul.f32 %v3677, %v3623
      %v3720 = vmul.f32 %v3677, %v3624
      %v3721 = vmul.f32 %v3681, %v3625
      %v3722 = vmul.f32 %v3681, %v3626
      %v3723 = vmul.f32 %v3685, %v3627
      %v3724 = vmul.f32 %v3685, %v3628
      %v3725 = vmul.f32 %v3689, %v3629
      %v3726 = vmul.f32 %v3689, %v3630
      %v3727 = vmul.f32 %v3693, %v3631
      %v3728 = vmul.f32 %v3693, %v3632
      %v3729 = vmul.f32 %v3697, %v3633
      %v3730 = vmul.f32 %v3697, %v3634
      %v3731 = vadd.f32 %v3333, %v3699
      %v3732 = vadd.f32 %v3334, %v3700
      %v3733 = vadd.f32 %v3335, %v3701
      %v3734 = vadd.f32 %v3336, %v3702
      %v3735 = vadd.f32 %v3337, %v3703
      %v3736 = vadd.f32 %v3338, %v3704
      %v3737 = vadd.f32 %v3339, %v3705
      %v3738 = vadd.f32 %v3340, %v3706
      %v3739 = vadd.f32 %v3341, %v3707
      %v3740 = vadd.f32 %v3342, %v3708
      %v3741 = vadd.f32 %v3343, %v3709
      %v3742 = vadd.f32 %v3344, %v3710
      %v3743 = vadd.f32 %v3345, %v3711
      %v3744 = vadd.f32 %v3346, %v3712
      %v3745 = vadd.f32 %v3347, %v3713
      %v3746 = vadd.f32 %v3348, %v3714
      %v3747 = vadd.f32 %v3349, %v3715
      %v3748 = vadd.f32 %v3350, %v3716
      %v3749 = vadd.f32 %v3351, %v3717
      %v3750 = vadd.f32 %v3352, %v3718
      %v3751 = vadd.f32 %v3353, %v3719
      %v3752 = vadd.f32 %v3354, %v3720
      %v3753 = vadd.f32 %v3355, %v3721
      %v3754 = vadd.f32 %v3356, %v3722
      %v3755 = vadd.f32 %v3357, %v3723
      %v3756 = vadd.f32 %v3358, %v3724
      %v3757 = vadd.f32 %v3359, %v3725
      %v3758 = vadd.f32 %v3360, %v3726
      %v3759 = vadd.f32 %v3361, %v3727
      %v3760 = vadd.f32 %v3362, %v3728
      %v3761 = vadd.f32 %v3363, %v3729
      %v3762 = vadd.f32 %v3364, %v3730
      %s3763 = scalar_lea.vmem %s8, 16
      %v3764 = vld [vmem:[%s3763] sm:$0x3]
      %3765 = vrot.lane.b32.xlu0 %v505, 111
      %v3766 = vpop.permute.xlu0 %3765
      %3767 = vrot.lane.b32.xlu0 %v509, 111
      %v3768 = vpop.permute.xlu0 %3767
      %3769 = vrot.lane.b32.xlu0 %v515, 111
      %v3770 = vpop.permute.xlu0 %3769
      %3771 = vrot.lane.b32.xlu0 %v519, 111
      %v3772 = vpop.permute.xlu0 %3771
      %3773 = vrot.lane.b32.xlu0 %v525, 111
      %v3774 = vpop.permute.xlu0 %3773
      %3775 = vrot.lane.b32.xlu0 %v529, 111
      %v3776 = vpop.permute.xlu0 %3775
      %3777 = vrot.lane.b32.xlu0 %v535, 111
      %v3778 = vpop.permute.xlu0 %3777
      %3779 = vrot.lane.b32.xlu0 %v539, 111
      %v3780 = vpop.permute.xlu0 %3779
      %3781 = vrot.lane.b32.xlu0 %v507, 111
      %v3782 = vpop.permute.xlu0 %3781
      %3783 = vrot.lane.b32.xlu0 %v511, 111
      %v3784 = vpop.permute.xlu0 %3783
      %3785 = vrot.lane.b32.xlu0 %v517, 111
      %v3786 = vpop.permute.xlu0 %3785
      %3787 = vrot.lane.b32.xlu0 %v521, 111
      %v3788 = vpop.permute.xlu0 %3787
      %3789 = vrot.lane.b32.xlu0 %v527, 111
      %v3790 = vpop.permute.xlu0 %3789
      %3791 = vrot.lane.b32.xlu0 %v531, 111
      %v3792 = vpop.permute.xlu0 %3791
      %3793 = vrot.lane.b32.xlu0 %v537, 111
      %v3794 = vpop.permute.xlu0 %3793
      %3795 = vrot.lane.b32.xlu0 %v541, 111
      %v3796 = vpop.permute.xlu0 %3795
      %vm3797 = vcmp.lt.s32.totalorder %v794, 111
      %v3798 = vsel %vm3797, %v3766, %v3782
      %v3799 = vsel %vm3797, %v3768, %v3784
      %v3800 = vsel %vm3797, %v3770, %v3786
      %v3801 = vsel %vm3797, %v3772, %v3788
      %v3802 = vsel %vm3797, %v3774, %v3790
      %v3803 = vsel %vm3797, %v3776, %v3792
      %v3804 = vsel %vm3797, %v3778, %v3794
      %v3805 = vsel %vm3797, %v3780, %v3796
      %v3806 = vsel %vm3797, %v3782, %v3766
      %v3807 = vsel %vm3797, %v3784, %v3768
      %v3808 = vsel %vm3797, %v3786, %v3770
      %v3809 = vsel %vm3797, %v3788, %v3772
      %v3810 = vsel %vm3797, %v3790, %v3774
      %v3811 = vsel %vm3797, %v3792, %v3776
      %v3812 = vsel %vm3797, %v3794, %v3778
      %v3813 = vsel %vm3797, %v3796, %v3780
      %v3815 = vlaneseq
      %v3816 = vshrl.u32 %v3815, 7
      %v3817 = vsub.s32 0, %v3816
      %v3818 = vrot.slane %v3764, %v3817
      %v3819 = vlaneseq
      %v3820 = vshrl.u32 %v3819, 7
      %v3821 = vsub.s32 1, %v3820
      %v3822 = vrot.slane %v3764, %v3821
      %v3825 = vmul.f32 %v3798, %v3818
      %v3826 = vmul.f32 %v3806, %v3822
      %v3827 = vmul.f32 %v3799, %v3818
      %v3828 = vmul.f32 %v3807, %v3822
      %v3829 = vmul.f32 %v3800, %v3818
      %v3830 = vmul.f32 %v3808, %v3822
      %v3831 = vmul.f32 %v3801, %v3818
      %v3832 = vmul.f32 %v3809, %v3822
      %v3833 = vmul.f32 %v3802, %v3818
      %v3834 = vmul.f32 %v3810, %v3822
      %v3835 = vmul.f32 %v3803, %v3818
      %v3836 = vmul.f32 %v3811, %v3822
      %v3837 = vmul.f32 %v3804, %v3818
      %v3838 = vmul.f32 %v3812, %v3822
      %v3839 = vmul.f32 %v3805, %v3818
      %v3840 = vmul.f32 %v3813, %v3822
      %3841 = vset.pattern.permute.xlu0 8
      %3842 = vperm.xlu0 %3841, %v736
      %v3843 = vpop.permute.xlu0 %3842
      %3845 = vset.pattern.permute.xlu0 8
      %3846 = vperm.xlu0 %3845, %v737
      %v3847 = vpop.permute.xlu0 %3846
      %3849 = vset.pattern.permute.xlu0 8
      %3850 = vperm.xlu0 %3849, %v738
      %v3851 = vpop.permute.xlu0 %3850
      %3853 = vset.pattern.permute.xlu0 8
      %3854 = vperm.xlu0 %3853, %v739
      %v3855 = vpop.permute.xlu0 %3854
      %3857 = vset.pattern.permute.xlu0 8
      %3858 = vperm.xlu0 %3857, %v740
      %v3859 = vpop.permute.xlu0 %3858
      %3861 = vset.pattern.permute.xlu0 8
      %3862 = vperm.xlu0 %3861, %v741
      %v3863 = vpop.permute.xlu0 %3862
      %3865 = vset.pattern.permute.xlu0 8
      %3866 = vperm.xlu0 %3865, %v742
      %v3867 = vpop.permute.xlu0 %3866
      %3869 = vset.pattern.permute.xlu0 8
      %3870 = vperm.xlu0 %3869, %v743
      %v3871 = vpop.permute.xlu0 %3870
      %v3873 = vmul.f32 %v3843, %v3825
      %v3874 = vmul.f32 %v3843, %v3826
      %v3875 = vmul.f32 %v3847, %v3827
      %v3876 = vmul.f32 %v3847, %v3828
      %v3877 = vmul.f32 %v3851, %v3829
      %v3878 = vmul.f32 %v3851, %v3830
      %v3879 = vmul.f32 %v3855, %v3831
      %v3880 = vmul.f32 %v3855, %v3832
      %v3881 = vmul.f32 %v3859, %v3833
      %v3882 = vmul.f32 %v3859, %v3834
      %v3883 = vmul.f32 %v3863, %v3835
      %v3884 = vmul.f32 %v3863, %v3836
      %v3885 = vmul.f32 %v3867, %v3837
      %v3886 = vmul.f32 %v3867, %v3838
      %v3887 = vmul.f32 %v3871, %v3839
      %v3888 = vmul.f32 %v3871, %v3840
      %v3889 = vadd.f32 %v3491, %v3873
      %v3890 = vadd.f32 %v3492, %v3874
      %v3891 = vadd.f32 %v3493, %v3875
      %v3892 = vadd.f32 %v3494, %v3876
      %v3893 = vadd.f32 %v3495, %v3877
      %v3894 = vadd.f32 %v3496, %v3878
      %v3895 = vadd.f32 %v3497, %v3879
      %v3896 = vadd.f32 %v3498, %v3880
      %v3897 = vadd.f32 %v3499, %v3881
      %v3898 = vadd.f32 %v3500, %v3882
      %v3899 = vadd.f32 %v3501, %v3883
      %v3900 = vadd.f32 %v3502, %v3884
      %v3901 = vadd.f32 %v3503, %v3885
      %v3902 = vadd.f32 %v3504, %v3886
      %v3903 = vadd.f32 %v3505, %v3887
      %v3904 = vadd.f32 %v3506, %v3888
      %3905 = vrot.lane.b32.xlu0 %v658, 111
      %v3906 = vpop.permute.xlu0 %3905
      %3907 = vrot.lane.b32.xlu0 %v662, 111
      %v3908 = vpop.permute.xlu0 %3907
      %3909 = vrot.lane.b32.xlu0 %v668, 111
      %v3910 = vpop.permute.xlu0 %3909
      %3911 = vrot.lane.b32.xlu0 %v672, 111
      %v3912 = vpop.permute.xlu0 %3911
      %3913 = vrot.lane.b32.xlu0 %v678, 111
      %v3914 = vpop.permute.xlu0 %3913
      %3915 = vrot.lane.b32.xlu0 %v682, 111
      %v3916 = vpop.permute.xlu0 %3915
      %3917 = vrot.lane.b32.xlu0 %v688, 111
      %v3918 = vpop.permute.xlu0 %3917
      %3919 = vrot.lane.b32.xlu0 %v692, 111
      %v3920 = vpop.permute.xlu0 %3919
      %3921 = vrot.lane.b32.xlu0 %v698, 111
      %v3922 = vpop.permute.xlu0 %3921
      %3923 = vrot.lane.b32.xlu0 %v702, 111
      %v3924 = vpop.permute.xlu0 %3923
      %3925 = vrot.lane.b32.xlu0 %v708, 111
      %v3926 = vpop.permute.xlu0 %3925
      %3927 = vrot.lane.b32.xlu0 %v712, 111
      %v3928 = vpop.permute.xlu0 %3927
      %3929 = vrot.lane.b32.xlu0 %v718, 111
      %v3930 = vpop.permute.xlu0 %3929
      %3931 = vrot.lane.b32.xlu0 %v722, 111
      %v3932 = vpop.permute.xlu0 %3931
      %3933 = vrot.lane.b32.xlu0 %v728, 111
      %v3934 = vpop.permute.xlu0 %3933
      %3935 = vrot.lane.b32.xlu0 %v732, 111
      %v3936 = vpop.permute.xlu0 %3935
      %3937 = vrot.lane.b32.xlu0 %v660, 111
      %v3938 = vpop.permute.xlu0 %3937
      %3939 = vrot.lane.b32.xlu0 %v664, 111
      %v3940 = vpop.permute.xlu0 %3939
      %3941 = vrot.lane.b32.xlu0 %v670, 111
      %v3942 = vpop.permute.xlu0 %3941
      %3943 = vrot.lane.b32.xlu0 %v674, 111
      %v3944 = vpop.permute.xlu0 %3943
      %3945 = vrot.lane.b32.xlu0 %v680, 111
      %v3946 = vpop.permute.xlu0 %3945
      %3947 = vrot.lane.b32.xlu0 %v684, 111
      %v3948 = vpop.permute.xlu0 %3947
      %3949 = vrot.lane.b32.xlu0 %v690, 111
      %v3950 = vpop.permute.xlu0 %3949
      %3951 = vrot.lane.b32.xlu0 %v694, 111
      %v3952 = vpop.permute.xlu0 %3951
      %3953 = vrot.lane.b32.xlu0 %v700, 111
      %v3954 = vpop.permute.xlu0 %3953
      %3955 = vrot.lane.b32.xlu0 %v704, 111
      %v3956 = vpop.permute.xlu0 %3955
      %3957 = vrot.lane.b32.xlu0 %v710, 111
      %v3958 = vpop.permute.xlu0 %3957
      %3959 = vrot.lane.b32.xlu0 %v714, 111
      %v3960 = vpop.permute.xlu0 %3959
      %3961 = vrot.lane.b32.xlu0 %v720, 111
      %v3962 = vpop.permute.xlu0 %3961
      %3963 = vrot.lane.b32.xlu0 %v724, 111
      %v3964 = vpop.permute.xlu0 %3963
      %3965 = vrot.lane.b32.xlu0 %v730, 111
      %v3966 = vpop.permute.xlu0 %3965
      %3967 = vrot.lane.b32.xlu0 %v734, 111
      %v3968 = vpop.permute.xlu0 %3967
      %v3969 = vsel %vm3797, %v3906, %v3938
      %v3970 = vsel %vm3797, %v3908, %v3940
      %v3971 = vsel %vm3797, %v3910, %v3942
      %v3972 = vsel %vm3797, %v3912, %v3944
      %v3973 = vsel %vm3797, %v3914, %v3946
      %v3974 = vsel %vm3797, %v3916, %v3948
      %v3975 = vsel %vm3797, %v3918, %v3950
      %v3976 = vsel %vm3797, %v3920, %v3952
      %v3977 = vsel %vm3797, %v3922, %v3954
      %v3978 = vsel %vm3797, %v3924, %v3956
      %v3979 = vsel %vm3797, %v3926, %v3958
      %v3980 = vsel %vm3797, %v3928, %v3960
      %v3981 = vsel %vm3797, %v3930, %v3962
      %v3982 = vsel %vm3797, %v3932, %v3964
      %v3983 = vsel %vm3797, %v3934, %v3966
      %v3984 = vsel %vm3797, %v3936, %v3968
      %v3985 = vsel %vm3797, %v3938, %v3906
      %v3986 = vsel %vm3797, %v3940, %v3908
      %v3987 = vsel %vm3797, %v3942, %v3910
      %v3988 = vsel %vm3797, %v3944, %v3912
      %v3989 = vsel %vm3797, %v3946, %v3914
      %v3990 = vsel %vm3797, %v3948, %v3916
      %v3991 = vsel %vm3797, %v3950, %v3918
      %v3992 = vsel %vm3797, %v3952, %v3920
      %v3993 = vsel %vm3797, %v3954, %v3922
      %v3994 = vsel %vm3797, %v3956, %v3924
      %v3995 = vsel %vm3797, %v3958, %v3926
      %v3996 = vsel %vm3797, %v3960, %v3928
      %v3997 = vsel %vm3797, %v3962, %v3930
      %v3998 = vsel %vm3797, %v3964, %v3932
      %v3999 = vsel %vm3797, %v3966, %v3934
      %v4000 = vsel %vm3797, %v3968, %v3936
      %v4001 = vmul.f32 %v3969, %v3818
      %v4002 = vmul.f32 %v3985, %v3822
      %v4003 = vmul.f32 %v3970, %v3818
      %v4004 = vmul.f32 %v3986, %v3822
      %v4005 = vmul.f32 %v3971, %v3818
      %v4006 = vmul.f32 %v3987, %v3822
      %v4007 = vmul.f32 %v3972, %v3818
      %v4008 = vmul.f32 %v3988, %v3822
      %v4009 = vmul.f32 %v3973, %v3818
      %v4010 = vmul.f32 %v3989, %v3822
      %v4011 = vmul.f32 %v3974, %v3818
      %v4012 = vmul.f32 %v3990, %v3822
      %v4013 = vmul.f32 %v3975, %v3818
      %v4014 = vmul.f32 %v3991, %v3822
      %v4015 = vmul.f32 %v3976, %v3818
      %v4016 = vmul.f32 %v3992, %v3822
      %v4017 = vmul.f32 %v3977, %v3818
      %v4018 = vmul.f32 %v3993, %v3822
      %v4019 = vmul.f32 %v3978, %v3818
      %v4020 = vmul.f32 %v3994, %v3822
      %v4021 = vmul.f32 %v3979, %v3818
      %v4022 = vmul.f32 %v3995, %v3822
      %v4023 = vmul.f32 %v3980, %v3818
      %v4024 = vmul.f32 %v3996, %v3822
      %v4025 = vmul.f32 %v3981, %v3818
      %v4026 = vmul.f32 %v3997, %v3822
      %v4027 = vmul.f32 %v3982, %v3818
      %v4028 = vmul.f32 %v3998, %v3822
      %v4029 = vmul.f32 %v3983, %v3818
      %v4030 = vmul.f32 %v3999, %v3822
      %v4031 = vmul.f32 %v3984, %v3818
      %v4032 = vmul.f32 %v4000, %v3822
      %4033 = vset.pattern.permute.xlu0 8
      %4034 = vperm.xlu0 %4033, %v744
      %v4035 = vpop.permute.xlu0 %4034
      %4037 = vset.pattern.permute.xlu0 8
      %4038 = vperm.xlu0 %4037, %v745
      %v4039 = vpop.permute.xlu0 %4038
      %4041 = vset.pattern.permute.xlu0 8
      %4042 = vperm.xlu0 %4041, %v746
      %v4043 = vpop.permute.xlu0 %4042
      %4045 = vset.pattern.permute.xlu0 8
      %4046 = vperm.xlu0 %4045, %v747
      %v4047 = vpop.permute.xlu0 %4046
      %4049 = vset.pattern.permute.xlu0 8
      %4050 = vperm.xlu0 %4049, %v748
      %v4051 = vpop.permute.xlu0 %4050
      %4053 = vset.pattern.permute.xlu0 8
      %4054 = vperm.xlu0 %4053, %v749
      %v4055 = vpop.permute.xlu0 %4054
      %4057 = vset.pattern.permute.xlu0 8
      %4058 = vperm.xlu0 %4057, %v750
      %v4059 = vpop.permute.xlu0 %4058
      %4061 = vset.pattern.permute.xlu0 8
      %4062 = vperm.xlu0 %4061, %v751
      %v4063 = vpop.permute.xlu0 %4062
      %4065 = vset.pattern.permute.xlu0 8
      %4066 = vperm.xlu0 %4065, %v752
      %v4067 = vpop.permute.xlu0 %4066
      %4069 = vset.pattern.permute.xlu0 8
      %4070 = vperm.xlu0 %4069, %v753
      %v4071 = vpop.permute.xlu0 %4070
      %4073 = vset.pattern.permute.xlu0 8
      %4074 = vperm.xlu0 %4073, %v754
      %v4075 = vpop.permute.xlu0 %4074
      %4077 = vset.pattern.permute.xlu0 8
      %4078 = vperm.xlu0 %4077, %v755
      %v4079 = vpop.permute.xlu0 %4078
      %4081 = vset.pattern.permute.xlu0 8
      %4082 = vperm.xlu0 %4081, %v756
      %v4083 = vpop.permute.xlu0 %4082
      %4085 = vset.pattern.permute.xlu0 8
      %4086 = vperm.xlu0 %4085, %v757
      %v4087 = vpop.permute.xlu0 %4086
      %4089 = vset.pattern.permute.xlu0 8
      %4090 = vperm.xlu0 %4089, %v758
      %v4091 = vpop.permute.xlu0 %4090
      %4093 = vset.pattern.permute.xlu0 8
      %4094 = vperm.xlu0 %4093, %v759
      %v4095 = vpop.permute.xlu0 %4094
      %v4097 = vmul.f32 %v4035, %v4001
      %v4098 = vmul.f32 %v4035, %v4002
      %v4099 = vmul.f32 %v4039, %v4003
      %v4100 = vmul.f32 %v4039, %v4004
      %v4101 = vmul.f32 %v4043, %v4005
      %v4102 = vmul.f32 %v4043, %v4006
      %v4103 = vmul.f32 %v4047, %v4007
      %v4104 = vmul.f32 %v4047, %v4008
      %v4105 = vmul.f32 %v4051, %v4009
      %v4106 = vmul.f32 %v4051, %v4010
      %v4107 = vmul.f32 %v4055, %v4011
      %v4108 = vmul.f32 %v4055, %v4012
      %v4109 = vmul.f32 %v4059, %v4013
      %v4110 = vmul.f32 %v4059, %v4014
      %v4111 = vmul.f32 %v4063, %v4015
      %v4112 = vmul.f32 %v4063, %v4016
      %v4113 = vmul.f32 %v4067, %v4017
      %v4114 = vmul.f32 %v4067, %v4018
      %v4115 = vmul.f32 %v4071, %v4019
      %v4116 = vmul.f32 %v4071, %v4020
      %v4117 = vmul.f32 %v4075, %v4021
      %v4118 = vmul.f32 %v4075, %v4022
      %v4119 = vmul.f32 %v4079, %v4023
      %v4120 = vmul.f32 %v4079, %v4024
      %v4121 = vmul.f32 %v4083, %v4025
      %v4122 = vmul.f32 %v4083, %v4026
      %v4123 = vmul.f32 %v4087, %v4027
      %v4124 = vmul.f32 %v4087, %v4028
      %v4125 = vmul.f32 %v4091, %v4029
      %v4126 = vmul.f32 %v4091, %v4030
      %v4127 = vmul.f32 %v4095, %v4031
      %v4128 = vmul.f32 %v4095, %v4032
      %v4129 = vadd.f32 %v3731, %v4097
      %v4130 = vadd.f32 %v3732, %v4098
      %v4131 = vadd.f32 %v3733, %v4099
      %v4132 = vadd.f32 %v3734, %v4100
      %v4133 = vadd.f32 %v3735, %v4101
      %v4134 = vadd.f32 %v3736, %v4102
      %v4135 = vadd.f32 %v3737, %v4103
      %v4136 = vadd.f32 %v3738, %v4104
      %v4137 = vadd.f32 %v3739, %v4105
      %v4138 = vadd.f32 %v3740, %v4106
      %v4139 = vadd.f32 %v3741, %v4107
      %v4140 = vadd.f32 %v3742, %v4108
      %v4141 = vadd.f32 %v3743, %v4109
      %v4142 = vadd.f32 %v3744, %v4110
      %v4143 = vadd.f32 %v3745, %v4111
      %v4144 = vadd.f32 %v3746, %v4112
      %v4145 = vadd.f32 %v3747, %v4113
      %v4146 = vadd.f32 %v3748, %v4114
      %v4147 = vadd.f32 %v3749, %v4115
      %v4148 = vadd.f32 %v3750, %v4116
      %v4149 = vadd.f32 %v3751, %v4117
      %v4150 = vadd.f32 %v3752, %v4118
      %v4151 = vadd.f32 %v3753, %v4119
      %v4152 = vadd.f32 %v3754, %v4120
      %v4153 = vadd.f32 %v3755, %v4121
      %v4154 = vadd.f32 %v3756, %v4122
      %v4155 = vadd.f32 %v3757, %v4123
      %v4156 = vadd.f32 %v3758, %v4124
      %v4157 = vadd.f32 %v3759, %v4125
      %v4158 = vadd.f32 %v3760, %v4126
      %v4159 = vadd.f32 %v3761, %v4127
      %v4160 = vadd.f32 %v3762, %v4128
      %v4161 = vmul.f32 %v3889, %v3889
      %v4162 = vmul.f32 %v3890, %v3890
      %v4163 = vmul.f32 %v3891, %v3891
      %v4164 = vmul.f32 %v3892, %v3892
      %v4165 = vmul.f32 %v3893, %v3893
      %v4166 = vmul.f32 %v3894, %v3894
      %v4167 = vmul.f32 %v3895, %v3895
      %v4168 = vmul.f32 %v3896, %v3896
      %v4169 = vmul.f32 %v3897, %v3897
      %v4170 = vmul.f32 %v3898, %v3898
      %v4171 = vmul.f32 %v3899, %v3899
      %v4172 = vmul.f32 %v3900, %v3900
      %v4173 = vmul.f32 %v3901, %v3901
      %v4174 = vmul.f32 %v3902, %v3902
      %v4175 = vmul.f32 %v3903, %v3903
      %v4176 = vmul.f32 %v3904, %v3904
      %v4177 = vadd.f32 %v4161, %v4162
      %4178 = vadd.xlane.f32.xlu0 %v4177
      %v4179 = vpop.xlane.xlu0 %4178
      %v4180 = vadd.f32 %v4163, %v4164
      %4181 = vadd.xlane.f32.xlu0 %v4180
      %v4182 = vpop.xlane.xlu0 %4181
      %v4183 = vadd.f32 %v4165, %v4166
      %4184 = vadd.xlane.f32.xlu0 %v4183
      %v4185 = vpop.xlane.xlu0 %4184
      %v4186 = vadd.f32 %v4167, %v4168
      %4187 = vadd.xlane.f32.xlu0 %v4186
      %v4188 = vpop.xlane.xlu0 %4187
      %v4189 = vadd.f32 %v4169, %v4170
      %4190 = vadd.xlane.f32.xlu0 %v4189
      %v4191 = vpop.xlane.xlu0 %4190
      %v4192 = vadd.f32 %v4171, %v4172
      %4193 = vadd.xlane.f32.xlu0 %v4192
      %v4194 = vpop.xlane.xlu0 %4193
      %v4195 = vadd.f32 %v4173, %v4174
      %4196 = vadd.xlane.f32.xlu0 %v4195
      %v4197 = vpop.xlane.xlu0 %4196
      %v4198 = vadd.f32 %v4175, %v4176
      %4199 = vadd.xlane.f32.xlu0 %v4198
      %v4200 = vpop.xlane.xlu0 %4199
      %v4201 = vmul.f32 %v4129, %v4129
      %v4202 = vmul.f32 %v4130, %v4130
      %v4203 = vmul.f32 %v4131, %v4131
      %v4204 = vmul.f32 %v4132, %v4132
      %v4205 = vmul.f32 %v4133, %v4133
      %v4206 = vmul.f32 %v4134, %v4134
      %v4207 = vmul.f32 %v4135, %v4135
      %v4208 = vmul.f32 %v4136, %v4136
      %v4209 = vmul.f32 %v4137, %v4137
      %v4210 = vmul.f32 %v4138, %v4138
      %v4211 = vmul.f32 %v4139, %v4139
      %v4212 = vmul.f32 %v4140, %v4140
      %v4213 = vmul.f32 %v4141, %v4141
      %v4214 = vmul.f32 %v4142, %v4142
      %v4215 = vmul.f32 %v4143, %v4143
      %v4216 = vmul.f32 %v4144, %v4144
      %v4217 = vadd.f32 %v4201, %v4202
      %4218 = vadd.xlane.f32.xlu0 %v4217
      %v4219 = vpop.xlane.xlu0 %4218
      %v4220 = vadd.f32 %v4203, %v4204
      %4221 = vadd.xlane.f32.xlu0 %v4220
      %v4222 = vpop.xlane.xlu0 %4221
      %v4223 = vadd.f32 %v4205, %v4206
      %4224 = vadd.xlane.f32.xlu0 %v4223
      %v4225 = vpop.xlane.xlu0 %4224
      %v4226 = vadd.f32 %v4207, %v4208
      %4227 = vadd.xlane.f32.xlu0 %v4226
      %v4228 = vpop.xlane.xlu0 %4227
      %v4229 = vadd.f32 %v4209, %v4210
      %4230 = vadd.xlane.f32.xlu0 %v4229
      %v4231 = vpop.xlane.xlu0 %4230
      %v4232 = vadd.f32 %v4211, %v4212
      %4233 = vadd.xlane.f32.xlu0 %v4232
      %v4234 = vpop.xlane.xlu0 %4233
      %v4235 = vadd.f32 %v4213, %v4214
      %4236 = vadd.xlane.f32.xlu0 %v4235
      %v4237 = vpop.xlane.xlu0 %4236
      %v4238 = vadd.f32 %v4215, %v4216
      %4239 = vadd.xlane.f32.xlu0 %v4238
      %v4240 = vpop.xlane.xlu0 %4239
      %v4241 = vmax.f32 %v4179, 1e-24
      %v4242 = vmax.f32 %v4182, 1e-24
      %v4243 = vmax.f32 %v4185, 1e-24
      %v4244 = vmax.f32 %v4188, 1e-24
      %v4245 = vmax.f32 %v4191, 1e-24
      %v4246 = vmax.f32 %v4194, 1e-24
      %v4247 = vmax.f32 %v4197, 1e-24
      %v4248 = vmax.f32 %v4200, 1e-24
      %v4249 = vrsqrt.pop %v4241
      %v4250 = vrsqrt.pop %v4242
      %v4251 = vrsqrt.pop %v4243
      %v4252 = vrsqrt.pop %v4244
      %v4253 = vrsqrt.pop %v4245
      %v4254 = vrsqrt.pop %v4246
      %v4255 = vrsqrt.pop %v4247
      %v4256 = vrsqrt.pop %v4248
      %v4257 = vmax.f32 %v4219, 1e-24
      %v4258 = vmax.f32 %v4222, 1e-24
      %v4259 = vmax.f32 %v4225, 1e-24
      %v4260 = vmax.f32 %v4228, 1e-24
      %v4261 = vmax.f32 %v4231, 1e-24
      %v4262 = vmax.f32 %v4234, 1e-24
      %v4263 = vmax.f32 %v4237, 1e-24
      %v4264 = vmax.f32 %v4240, 1e-24
      %v4265 = vrsqrt.pop %v4257
      %v4266 = vrsqrt.pop %v4258
      %v4267 = vrsqrt.pop %v4259
      %v4268 = vrsqrt.pop %v4260
      %v4269 = vrsqrt.pop %v4261
      %v4270 = vrsqrt.pop %v4262
      %v4271 = vrsqrt.pop %v4263
      %v4272 = vrsqrt.pop %v4264
      %v4273 = vpack.c.bf16 %v3891, %v3889
      %v4274 = vpack.c.bf16 %v3892, %v3890
      %v4275 = vpack.c.bf16 %v3895, %v3893
      %v4276 = vpack.c.bf16 %v3896, %v3894
      %v4277 = vpack.c.bf16 %v3899, %v3897
      %v4278 = vpack.c.bf16 %v3900, %v3898
      %v4279 = vpack.c.bf16 %v3903, %v3901
      %v4280 = vpack.c.bf16 %v3904, %v3902
      %v4281 = vmul.f32 %v4129, %v4265
      %v4282 = vmul.f32 %v4130, %v4265
      %v4283 = vmul.f32 %v4131, %v4266
      %v4284 = vmul.f32 %v4132, %v4266
      %v4285 = vmul.f32 %v4133, %v4267
      %v4286 = vmul.f32 %v4134, %v4267
      %v4287 = vmul.f32 %v4135, %v4268
      %v4288 = vmul.f32 %v4136, %v4268
      %v4289 = vmul.f32 %v4137, %v4269
      %v4290 = vmul.f32 %v4138, %v4269
      %v4291 = vmul.f32 %v4139, %v4270
      %v4292 = vmul.f32 %v4140, %v4270
      %v4293 = vmul.f32 %v4141, %v4271
      %v4294 = vmul.f32 %v4142, %v4271
      %v4295 = vmul.f32 %v4143, %v4272
      %v4296 = vmul.f32 %v4144, %v4272
      %v4297 = vpack.c.bf16 %v4283, %v4281
      %v4298 = vpack.c.bf16 %v4284, %v4282
      %v4299 = vpack.c.bf16 %v4287, %v4285
      %v4300 = vpack.c.bf16 %v4288, %v4286
      %v4301 = vpack.c.bf16 %v4291, %v4289
      %v4302 = vpack.c.bf16 %v4292, %v4290
      %v4303 = vpack.c.bf16 %v4295, %v4293
      %v4304 = vpack.c.bf16 %v4296, %v4294
      %v4305 = vpack.c.bf16 %v4147, %v4145
      %v4306 = vpack.c.bf16 %v4148, %v4146
      %v4307 = vpack.c.bf16 %v4151, %v4149
      %v4308 = vpack.c.bf16 %v4152, %v4150
      %v4309 = vpack.c.bf16 %v4155, %v4153
      %v4310 = vpack.c.bf16 %v4156, %v4154
      %v4311 = vpack.c.bf16 %v4159, %v4157
      %v4312 = vpack.c.bf16 %v4160, %v4158
      %4313 = vmatprep.subr.bf16.mxu0 0
      %4314 = vmatpush1.bf16.xpose.msra.mxu0 0
      %4315 = vmatprep.subr.bf16.mxu0 0
      %4316 = vmatpush1.bf16.xpose.msra.mxu0 0
      %4317 = vmatprep.subr.bf16.mxu0 0
      %4318 = vmatpush1.bf16.xpose.msra.mxu0 0
      %4319 = vmatprep.subr.bf16.mxu0 0
      %4320 = vmatpush1.bf16.xpose.msra.mxu0 0
      %4321 = vmatprep.subr.bf16.mxu0 %v4304
      %4322 = vmatpush1.bf16.xpose.msra.mxu0 %v4303
      %4323 = vmatprep.subr.bf16.mxu0 %v4302
      %4324 = vmatpush1.bf16.xpose.msra.mxu0 %v4301
      %4325 = vmatprep.subr.bf16.mxu0 %v4300
      %4326 = vmatpush1.bf16.xpose.msra.mxu0 %v4299
      %4327 = vmatprep.subr.bf16.mxu0 %v4298
      %4328 = vmatpush1.bf16.xpose.msra.mxu0 %v4297
      %4329 = vmatprep.subr.bf16.mxu0 0
      %4330 = vmatpush2.bf16.xpose.msra.mxu0 0
      %4331 = vmatprep.subr.bf16.mxu0 0
      %4332 = vmatpush2.bf16.xpose.msra.mxu0 0
      %4333 = vmatprep.subr.bf16.mxu0 0
      %4334 = vmatpush2.bf16.xpose.msra.mxu0 0
      %4335 = vmatprep.subr.bf16.mxu0 0
      %4336 = vmatpush2.bf16.xpose.msra.mxu0 0
      %4337 = vmatprep.subr.bf16.mxu0 0
      %4338 = vmatpush2.bf16.xpose.msra.mxu0 0
      %4339 = vmatprep.subr.bf16.mxu0 0
      %4340 = vmatpush2.bf16.xpose.msra.mxu0 0
      %4341 = vmatprep.subr.bf16.mxu0 0
      %4342 = vmatpush2.bf16.xpose.msra.mxu0 0
      %4343 = vmatprep.subr.bf16.mxu0 0
      %4344 = vmatpush2.bf16.xpose.msra.mxu0 0
      %4345 = vmatprep.mubr.bf16.mxu0 %v4274
      %4346 = vmatmul.mubr.bf16.gmra.mxu0 %v4273
      %v4347 = vpop.f32.mrf.mxu0
      %v4348 = vadd.f32 0.0, %v4347
      %v4349 = vpop.f32.mrf.mxu0
      %v4350 = vpop.f32.mrf.mxu0
      %v4351 = vadd.f32 0.0, %v4350
      %v4352 = vpop.f32.mrf.mxu0
      %4353 = vmatprep.mubr.bf16.mxu0 %v4276
      %4354 = vmatmul.mubr.bf16.gmra.mxu0 %v4275
      %v4355 = vpop.f32.mrf.mxu0
      %v4356 = vadd.f32 0.0, %v4355
      %v4357 = vpop.f32.mrf.mxu0
      %v4358 = vpop.f32.mrf.mxu0
      %v4359 = vadd.f32 0.0, %v4358
      %v4360 = vpop.f32.mrf.mxu0
      %4361 = vmatprep.mubr.bf16.mxu0 %v4278
      %4362 = vmatmul.mubr.bf16.gmra.mxu0 %v4277
      %v4363 = vpop.f32.mrf.mxu0
      %v4364 = vadd.f32 0.0, %v4363
      %v4365 = vpop.f32.mrf.mxu0
      %v4366 = vpop.f32.mrf.mxu0
      %v4367 = vadd.f32 0.0, %v4366
      %v4368 = vpop.f32.mrf.mxu0
      %4369 = vmatprep.mubr.bf16.mxu0 %v4280
      %4370 = vmatmul.mubr.bf16.gmra.mxu0 %v4279
      %v4371 = vpop.f32.mrf.mxu0
      %v4372 = vadd.f32 0.0, %v4371
      %v4373 = vpop.f32.mrf.mxu0
      %v4374 = vpop.f32.mrf.mxu0
      %v4375 = vadd.f32 0.0, %v4374
      %v4376 = vpop.f32.mrf.mxu0
      %4377 = vdwg.mxu0
      %v4378 = vld [vmem:[%s7] sm:$0xff]
      %v4379 = vld [vmem:[%s7 + $0x8] sm:$0xff]
      %v4380 = vld [vmem:[%s7 + $0x10] sm:$0xff]
      %v4381 = vld [vmem:[%s7 + $0x18] sm:$0xff]
      %v4382 = vld [vmem:[%s7 + $0x20] sm:$0xff]
      %v4383 = vld [vmem:[%s7 + $0x28] sm:$0xff]
      %v4384 = vld [vmem:[%s7 + $0x30] sm:$0xff]
      %v4385 = vld [vmem:[%s7 + $0x38] sm:$0xff]
      %v4386 = vmul.f32 %v4249, %v4378
      %v4387 = vmul.f32 %v4250, %v4379
      %v4388 = vmul.f32 %v4251, %v4380
      %v4389 = vmul.f32 %v4252, %v4381
      %v4390 = vmul.f32 %v4253, %v4382
      %v4391 = vmul.f32 %v4254, %v4383
      %v4392 = vmul.f32 %v4255, %v4384
      %v4393 = vmul.f32 %v4256, %v4385
      %4395 = vset.pattern.permute.xlu0 0
      %4396 = vperm.xlu0 %4395, %v4386
      %v4397 = vpop.permute.xlu0 %4396
      %4400 = vset.pattern.permute.xlu0 0
      %4401 = vperm.xlu0 %4400, %v4387
      %v4402 = vpop.permute.xlu0 %4401
      %4405 = vset.pattern.permute.xlu0 0
      %4406 = vperm.xlu0 %4405, %v4388
      %v4407 = vpop.permute.xlu0 %4406
      %4410 = vset.pattern.permute.xlu0 0
      %4411 = vperm.xlu0 %4410, %v4389
      %v4412 = vpop.permute.xlu0 %4411
      %4415 = vset.pattern.permute.xlu0 0
      %4416 = vperm.xlu0 %4415, %v4390
      %v4417 = vpop.permute.xlu0 %4416
      %4420 = vset.pattern.permute.xlu0 0
      %4421 = vperm.xlu0 %4420, %v4391
      %v4422 = vpop.permute.xlu0 %4421
      %4425 = vset.pattern.permute.xlu0 0
      %4426 = vperm.xlu0 %4425, %v4392
      %v4427 = vpop.permute.xlu0 %4426
      %4430 = vset.pattern.permute.xlu0 0
      %4431 = vperm.xlu0 %4430, %v4393
      %v4432 = vpop.permute.xlu0 %4431
      %v4434 = vmul.f32 %v4348, %v4397
      %v4435 = vmul.f32 %v4351, %v4402
      %v4436 = vmul.f32 %v4356, %v4407
      %v4437 = vmul.f32 %v4359, %v4412
      %v4438 = vmul.f32 %v4364, %v4417
      %v4439 = vmul.f32 %v4367, %v4422
      %v4440 = vmul.f32 %v4372, %v4427
      %v4441 = vmul.f32 %v4375, %v4432
      %v4442 = vld [vmem:[%s9] sm:$0xff]
      %v4443 = vld [vmem:[%s9 + $0x8] sm:$0xff]
      %v4444 = vld [vmem:[%s9 + $0x10] sm:$0xff]
      %v4445 = vld [vmem:[%s9 + $0x18] sm:$0xff]
      %v4446 = vld [vmem:[%s9 + $0x20] sm:$0xff]
      %v4447 = vld [vmem:[%s9 + $0x28] sm:$0xff]
      %v4448 = vld [vmem:[%s9 + $0x30] sm:$0xff]
      %v4449 = vld [vmem:[%s9 + $0x38] sm:$0xff]
      %v4450 = vadd.f32 %v4434, %v4442
      %v4451 = vadd.f32 %v4435, %v4443
      %v4452 = vadd.f32 %v4436, %v4444
      %v4453 = vadd.f32 %v4437, %v4445
      %v4454 = vadd.f32 %v4438, %v4446
      %v4455 = vadd.f32 %v4439, %v4447
      %v4456 = vadd.f32 %v4440, %v4448
      %v4457 = vadd.f32 %v4441, %v4449
      %v4458 = vsel %vm457, %v4450, -inf
      %4459 = vmax.xlane.f32.xlu0 %v4458
      %v4460 = vpop.xlane.xlu0 %4459
      %v4461 = vsel %vm457, %v4451, -inf
      %4462 = vmax.xlane.f32.xlu0 %v4461
      %v4463 = vpop.xlane.xlu0 %4462
      %v4464 = vsel %vm457, %v4452, -inf
      %4465 = vmax.xlane.f32.xlu0 %v4464
      %v4466 = vpop.xlane.xlu0 %4465
      %v4467 = vsel %vm457, %v4453, -inf
      %4468 = vmax.xlane.f32.xlu0 %v4467
      %v4469 = vpop.xlane.xlu0 %4468
      %v4470 = vsel %vm457, %v4454, -inf
      %4471 = vmax.xlane.f32.xlu0 %v4470
      %v4472 = vpop.xlane.xlu0 %4471
      %v4473 = vsel %vm457, %v4455, -inf
      %4474 = vmax.xlane.f32.xlu0 %v4473
      %v4475 = vpop.xlane.xlu0 %4474
      %v4476 = vsel %vm457, %v4456, -inf
      %4477 = vmax.xlane.f32.xlu0 %v4476
      %v4478 = vpop.xlane.xlu0 %4477
      %v4479 = vsel %vm457, %v4457, -inf
      %4480 = vmax.xlane.f32.xlu0 %v4479
      %v4481 = vpop.xlane.xlu0 %4480
      %v4482 = vsub.f32 %v4450, %v4460
      %v4483 = vsub.f32 %v4451, %v4463
      %v4484 = vsub.f32 %v4452, %v4466
      %v4485 = vsub.f32 %v4453, %v4469
      %v4486 = vsub.f32 %v4454, %v4472
      %v4487 = vsub.f32 %v4455, %v4475
      %v4488 = vsub.f32 %v4456, %v4478
      %v4489 = vsub.f32 %v4457, %v4481
      %v4490 = vmul.f32 %v4482, 1.442695
      %v4491 = vpow.pop %v4490
      %v4492 = vmul.f32 %v4483, 1.442695
      %v4493 = vpow.pop %v4492
      %v4494 = vmul.f32 %v4484, 1.442695
      %v4495 = vpow.pop %v4494
      %v4496 = vmul.f32 %v4485, 1.442695
      %v4497 = vpow.pop %v4496
      %v4498 = vmul.f32 %v4486, 1.442695
      %v4499 = vpow.pop %v4498
      %v4500 = vmul.f32 %v4487, 1.442695
      %v4501 = vpow.pop %v4500
      %v4502 = vmul.f32 %v4488, 1.442695
      %v4503 = vpow.pop %v4502
      %v4504 = vmul.f32 %v4489, 1.442695
      %v4505 = vpow.pop %v4504
      %v4506 = vsel %vm457, %v4491, 0.0
      %4507 = vadd.xlane.f32.xlu0 %v4506
      %v4508 = vpop.xlane.xlu0 %4507
      %v4509 = vsel %vm457, %v4493, 0.0
      %4510 = vadd.xlane.f32.xlu0 %v4509
      %v4511 = vpop.xlane.xlu0 %4510
      %v4512 = vsel %vm457, %v4495, 0.0
      %4513 = vadd.xlane.f32.xlu0 %v4512
      %v4514 = vpop.xlane.xlu0 %4513
      %v4515 = vsel %vm457, %v4497, 0.0
      %4516 = vadd.xlane.f32.xlu0 %v4515
      %v4517 = vpop.xlane.xlu0 %4516
      %v4518 = vsel %vm457, %v4499, 0.0
      %4519 = vadd.xlane.f32.xlu0 %v4518
      %v4520 = vpop.xlane.xlu0 %4519
      %v4521 = vsel %vm457, %v4501, 0.0
      %4522 = vadd.xlane.f32.xlu0 %v4521
      %v4523 = vpop.xlane.xlu0 %4522
      %v4524 = vsel %vm457, %v4503, 0.0
      %4525 = vadd.xlane.f32.xlu0 %v4524
      %v4526 = vpop.xlane.xlu0 %4525
      %v4527 = vsel %vm457, %v4505, 0.0
      %4528 = vadd.xlane.f32.xlu0 %v4527
      %v4529 = vpop.xlane.xlu0 %4528
      %v4530 = vrcp.pop %v4508
      %v4531 = vrcp.pop %v4511
      %v4532 = vrcp.pop %v4514
      %v4533 = vrcp.pop %v4517
      %v4534 = vrcp.pop %v4520
      %v4535 = vrcp.pop %v4523
      %v4536 = vrcp.pop %v4526
      %v4537 = vrcp.pop %v4529
      %v4538 = vmul.f32 %v4491, %v4530
      %v4539 = vmul.f32 %v4493, %v4531
      %v4540 = vmul.f32 %v4495, %v4532
      %v4541 = vmul.f32 %v4497, %v4533
      %v4542 = vmul.f32 %v4499, %v4534
      %v4543 = vmul.f32 %v4501, %v4535
      %v4544 = vmul.f32 %v4503, %v4536
      %v4545 = vmul.f32 %v4505, %v4537
      %v4546 = vpack.c.bf16 %v4539, %v4538
      %v4547 = vpack.c.bf16 %v4541, %v4540
      %v4548 = vpack.c.bf16 %v4543, %v4542
      %v4549 = vpack.c.bf16 %v4545, %v4544
      %v4551 = vsel %vm457, %v4546, 0
      %v4554 = vsel %vm457, %v4547, 0
      %v4557 = vsel %vm457, %v4548, 0
      %v4560 = vsel %vm457, %v4549, 0
      %4562 = vmatprep.subr.bf16.mxu0 0
      %4563 = vmatpush1.bf16.msra.mxu0 0
      %4564 = vmatprep.subr.bf16.mxu0 0
      %4565 = vmatpush1.bf16.msra.mxu0 0
      %4566 = vmatprep.subr.bf16.mxu0 0
      %4567 = vmatpush1.bf16.msra.mxu0 0
      %4568 = vmatprep.subr.bf16.mxu0 0
      %4569 = vmatpush1.bf16.msra.mxu0 0
      %4570 = vmatprep.subr.bf16.mxu0 %v4312
      %4571 = vmatpush1.bf16.msra.mxu0 %v4311
      %4572 = vmatprep.subr.bf16.mxu0 %v4310
      %4573 = vmatpush1.bf16.msra.mxu0 %v4309
      %4574 = vmatprep.subr.bf16.mxu0 %v4308
      %4575 = vmatpush1.bf16.msra.mxu0 %v4307
      %4576 = vmatprep.subr.bf16.mxu0 %v4306
      %4577 = vmatpush1.bf16.msra.mxu0 %v4305
      %4578 = vmatprep.subr.bf16.mxu0 0
      %4579 = vmatpush2.bf16.msra.mxu0 0
      %4580 = vmatprep.subr.bf16.mxu0 0
      %4581 = vmatpush2.bf16.msra.mxu0 0
      %4582 = vmatprep.subr.bf16.mxu0 0
      %4583 = vmatpush2.bf16.msra.mxu0 0
      %4584 = vmatprep.subr.bf16.mxu0 0
      %4585 = vmatpush2.bf16.msra.mxu0 0
      %4586 = vmatprep.subr.bf16.mxu0 0
      %4587 = vmatpush2.bf16.msra.mxu0 0
      %4588 = vmatprep.subr.bf16.mxu0 0
      %4589 = vmatpush2.bf16.msra.mxu0 0
      %4590 = vmatprep.subr.bf16.mxu0 0
      %4591 = vmatpush2.bf16.msra.mxu0 0
      %4592 = vmatprep.subr.bf16.mxu0 0
      %4593 = vmatpush2.bf16.msra.mxu0 0
      %4594 = vmatprep.mubr.bf16.mxu0 0
      %4595 = vmatmul.mubr.bf16.gmra.mxu0 %v4551
      %v4596 = vpop.f32.mrf.mxu0
      %v4597 = vadd.f32 0.0, %v4596
      %v4598 = vpop.f32.mrf.mxu0
      %v4599 = vadd.f32 0.0, %v4598
      %v4600 = vpop.f32.mrf.mxu0
      %v4601 = vadd.f32 0.0, %v4600
      %v4602 = vpop.f32.mrf.mxu0
      %v4603 = vadd.f32 0.0, %v4602
      %4604 = vmatprep.mubr.bf16.mxu0 0
      %4605 = vmatmul.mubr.bf16.gmra.mxu0 %v4554
      %v4606 = vpop.f32.mrf.mxu0
      %v4607 = vadd.f32 0.0, %v4606
      %v4608 = vpop.f32.mrf.mxu0
      %v4609 = vadd.f32 0.0, %v4608
      %v4610 = vpop.f32.mrf.mxu0
      %v4611 = vadd.f32 0.0, %v4610
      %v4612 = vpop.f32.mrf.mxu0
      %v4613 = vadd.f32 0.0, %v4612
      %4614 = vmatprep.mubr.bf16.mxu0 0
      %4615 = vmatmul.mubr.bf16.gmra.mxu0 %v4557
      %v4616 = vpop.f32.mrf.mxu0
      %v4617 = vadd.f32 0.0, %v4616
      %v4618 = vpop.f32.mrf.mxu0
      %v4619 = vadd.f32 0.0, %v4618
      %v4620 = vpop.f32.mrf.mxu0
      %v4621 = vadd.f32 0.0, %v4620
      %v4622 = vpop.f32.mrf.mxu0
      %v4623 = vadd.f32 0.0, %v4622
      %4624 = vmatprep.mubr.bf16.mxu0 0
      %4625 = vmatmul.mubr.bf16.gmra.mxu0 %v4560
      %v4626 = vpop.f32.mrf.mxu0
      %v4627 = vadd.f32 0.0, %v4626
      %v4628 = vpop.f32.mrf.mxu0
      %v4629 = vadd.f32 0.0, %v4628
      %v4630 = vpop.f32.mrf.mxu0
      %v4631 = vadd.f32 0.0, %v4630
      %v4632 = vpop.f32.mrf.mxu0
      %v4633 = vadd.f32 0.0, %v4632
      %4634 = vdwg.mxu0
      %v4635 = vld [vmem:[%s6] sm:$0xf]
      %v4636 = vld [vmem:[%s6 + $0x4] sm:$0xf]
      %v4637 = vld [vmem:[%s6 + $0x8] sm:$0xf]
      %v4638 = vld [vmem:[%s6 + $0xc] sm:$0xf]
      %v4639 = vld [vmem:[%s6 + $0x10] sm:$0xf]
      %v4640 = vld [vmem:[%s6 + $0x14] sm:$0xf]
      %v4641 = vld [vmem:[%s6 + $0x18] sm:$0xf]
      %v4642 = vld [vmem:[%s6 + $0x1c] sm:$0xf]
      %v4643 = vpack.c.bf16 %v4601, %v4597
      %v4644 = vpack.c.bf16 %v4603, %v4599
      %v4645 = vpack.c.bf16 %v4611, %v4607
      %v4646 = vpack.c.bf16 %v4613, %v4609
      %v4647 = vpack.c.bf16 %v4621, %v4617
      %v4648 = vpack.c.bf16 %v4623, %v4619
      %v4649 = vpack.c.bf16 %v4631, %v4627
      %v4650 = vpack.c.bf16 %v4633, %v4629
      %v4659 = vunpack.c.l.b16 %v4635
      %v4660 = vunpack.c.l.b16 %v4636
      %v4661 = vunpack.c.l.b16 %v4637
      %v4662 = vunpack.c.l.b16 %v4638
      %v4663 = vunpack.c.l.b16 %v4639
      %v4664 = vunpack.c.l.b16 %v4640
      %v4665 = vunpack.c.l.b16 %v4641
      %v4666 = vunpack.c.l.b16 %v4642
      %v4667 = vpack.c.b16 %v4660, %v4659
      %v4668 = vpack.c.b16 %v4662, %v4661
      %v4669 = vpack.c.b16 %v4664, %v4663
      %v4670 = vpack.c.b16 %v4666, %v4665
      %v4672 = vsel %vm457, %v4667, 0
      %v4675 = vsel %vm457, %v4668, 0
      %v4678 = vsel %vm457, %v4669, 0
      %v4681 = vsel %vm457, %v4670, 0
      %4683 = vmatprep.subr.bf16.mxu0 0
      %4684 = vmatpush1.bf16.msra.mxu0 0
      %4685 = vmatprep.subr.bf16.mxu0 0
      %4686 = vmatpush1.bf16.msra.mxu0 0
      %4687 = vmatprep.subr.bf16.mxu0 0
      %4688 = vmatpush1.bf16.msra.mxu0 0
      %4689 = vmatprep.subr.bf16.mxu0 0
      %4690 = vmatpush1.bf16.msra.mxu0 0
      %4691 = vmatprep.subr.bf16.mxu0 %v4650
      %4692 = vmatpush1.bf16.msra.mxu0 %v4649
      %4693 = vmatprep.subr.bf16.mxu0 %v4648
      %4694 = vmatpush1.bf16.msra.mxu0 %v4647
      %4695 = vmatprep.subr.bf16.mxu0 %v4646
      %4696 = vmatpush1.bf16.msra.mxu0 %v4645
      %4697 = vmatprep.subr.bf16.mxu0 %v4644
      %4698 = vmatpush1.bf16.msra.mxu0 %v4643
      %4699 = vmatprep.subr.bf16.mxu0 0
      %4700 = vmatpush2.bf16.msra.mxu0 0
      %4701 = vmatprep.subr.bf16.mxu0 0
      %4702 = vmatpush2.bf16.msra.mxu0 0
      %4703 = vmatprep.subr.bf16.mxu0 0
      %4704 = vmatpush2.bf16.msra.mxu0 0
      %4705 = vmatprep.subr.bf16.mxu0 0
      %4706 = vmatpush2.bf16.msra.mxu0 0
      %4707 = vmatprep.subr.bf16.mxu0 0
      %4708 = vmatpush2.bf16.msra.mxu0 0
      %4709 = vmatprep.subr.bf16.mxu0 0
      %4710 = vmatpush2.bf16.msra.mxu0 0
      %4711 = vmatprep.subr.bf16.mxu0 0
      %4712 = vmatpush2.bf16.msra.mxu0 0
      %4713 = vmatprep.subr.bf16.mxu0 0
      %4714 = vmatpush2.bf16.msra.mxu0 0
      %4715 = vmatprep.mubr.bf16.mxu0 0
      %4716 = vmatmul.mubr.bf16.gmra.mxu0 %v4672
      %v4717 = vpop.f32.mrf.mxu0
      %v4718 = vadd.f32 0.0, %v4717
      %v4719 = vpop.f32.mrf.mxu0
      %v4720 = vadd.f32 0.0, %v4719
      %v4721 = vpop.f32.mrf.mxu0
      %v4722 = vadd.f32 0.0, %v4721
      %v4723 = vpop.f32.mrf.mxu0
      %v4724 = vadd.f32 0.0, %v4723
      %4725 = vmatprep.mubr.bf16.mxu0 0
      %4726 = vmatmul.mubr.bf16.gmra.mxu0 %v4675
      %v4727 = vpop.f32.mrf.mxu0
      %v4728 = vadd.f32 0.0, %v4727
      %v4729 = vpop.f32.mrf.mxu0
      %v4730 = vadd.f32 0.0, %v4729
      %v4731 = vpop.f32.mrf.mxu0
      %v4732 = vadd.f32 0.0, %v4731
      %v4733 = vpop.f32.mrf.mxu0
      %v4734 = vadd.f32 0.0, %v4733
      %4735 = vmatprep.mubr.bf16.mxu0 0
      %4736 = vmatmul.mubr.bf16.gmra.mxu0 %v4678
      %v4737 = vpop.f32.mrf.mxu0
      %v4738 = vadd.f32 0.0, %v4737
      %v4739 = vpop.f32.mrf.mxu0
      %v4740 = vadd.f32 0.0, %v4739
      %v4741 = vpop.f32.mrf.mxu0
      %v4742 = vadd.f32 0.0, %v4741
      %v4743 = vpop.f32.mrf.mxu0
      %v4744 = vadd.f32 0.0, %v4743
      %4745 = vmatprep.mubr.bf16.mxu0 0
      %4746 = vmatmul.mubr.bf16.gmra.mxu0 %v4681
      %v4747 = vpop.f32.mrf.mxu0
      %v4748 = vadd.f32 0.0, %v4747
      %v4749 = vpop.f32.mrf.mxu0
      %v4750 = vadd.f32 0.0, %v4749
      %v4751 = vpop.f32.mrf.mxu0
      %v4752 = vadd.f32 0.0, %v4751
      %v4753 = vpop.f32.mrf.mxu0
      %v4754 = vadd.f32 0.0, %v4753
      %4755 = vdwg.mxu0
      %4756 = vst [vmem:[%s379] sm:$0xff] %v4718
      %4757 = vst [vmem:[%s379 + $0x8] sm:$0xff] %v4720
      %4758 = vst [vmem:[%s379 + $0x10] sm:$0xff] %v4722
      %4759 = vst [vmem:[%s379 + $0x18] sm:$0xff] %v4724
      %4760 = vst [vmem:[%s379 + $0x20] sm:$0xff] %v4728
      %4761 = vst [vmem:[%s379 + $0x28] sm:$0xff] %v4730
      %4762 = vst [vmem:[%s379 + $0x30] sm:$0xff] %v4732
      %4763 = vst [vmem:[%s379 + $0x38] sm:$0xff] %v4734
      %4764 = vst [vmem:[%s379 + $0x40] sm:$0xff] %v4738
      %4765 = vst [vmem:[%s379 + $0x48] sm:$0xff] %v4740
      %4766 = vst [vmem:[%s379 + $0x50] sm:$0xff] %v4742
      %4767 = vst [vmem:[%s379 + $0x58] sm:$0xff] %v4744
      %4768 = vst [vmem:[%s379 + $0x60] sm:$0xff] %v4748
      %4769 = vst [vmem:[%s379 + $0x68] sm:$0xff] %v4750
      %4770 = vst [vmem:[%s379 + $0x70] sm:$0xff] %v4752
      %4771 = vst [vmem:[%s379 + $0x78] sm:$0xff] %v4754
      %p4772 = scmp.lt.s32.totalorder %s21, 1
      %s4773 = scalar_select %p4772, %s21, 1
      %s4774 = smul.addr %s4773, 16
      %s4775 = smul.addr %s4774, 8
      %s4776 = scalar_lea.vmem %s10, %s4775
      // Predicated region
      $region61: #{attention_forward.1} parent=59 // pred_check
        %p4777 = pneg %p259
      $region62: #{attention_forward.1} parent=59 // pred_check_branch
        %4779 = sbr.rel (%p4777) target = $region64
      $region63: #{attention_forward.1} parent=59 // pred_region
        _
      $region64: #{attention_forward.1} parent=59 // pred_fallthru
        _
    $region60: #{attention_forward.1} parent=5 // pred_fallthru
      _
    %p4780 = scmp.le.s32.totalorder 2, %s16
    // Predicated region
    $region65: #{attention_forward.1} parent=5 // pred_check
      %p4781 = pneg %p4780
    $region66: #{attention_forward.1} parent=5 // pred_check_branch
      %4783 = sbr.rel (%p4781) target = $region68
    $region67: #{attention_forward.1} parent=5 // pred_region
      %s4784 = ssub.s32 %s16, 2
      // Predicated region
      $region69: #{attention_forward.1} parent=67 // pred_check
        %p4785 = pneg %p265
      $region70: #{attention_forward.1} parent=67 // pred_check_branch
        %4787 = sbr.rel (%p4785) target = $region72
      $region71: #{attention_forward.1} parent=67 // pred_region
        %p4788 = scmp.lt.s32.totalorder %s22, 1
        %s4789 = scalar_select %p4788, %s22, 1
        %s4790 = smul.addr %s4789, 16
        %s4791 = smul.addr %s4790, 8
        %s4792 = scalar_lea.vmem %s10, %s4791
      $region72: #{attention_forward.1} parent=67 // pred_fallthru
        _
    $region68: #{attention_forward.1} parent=5 // pred_fallthru
      _
  $region6: #{attention_forward.1} parent=0 // loop_footer
    %s20 = sadd.s32 1, %s16
  $region7: #{attention_forward.1} parent=0 // loop_footer_branch
    %15 = sbr.rel target = $region3
  $region8: #{attention_forward.1} parent=0 // loop_exit
    _

</llo_original>
